<compile_context>
chip_gen: v6e
topology: v6e:2x2x1
jax: 0.10.0
libtpu: 0.0.40
codegen_flags: <defaults>
</compile_context>

<pallas_src>
import jax
import jax.numpy as jnp
from jax.experimental import pallas as pl
from jax.experimental.pallas import tpu as pltpu

# ---- model config (taken from the PyTorch module) --------------------------
BLOCK_SIZE = 8                 # block_size  (T, sequence length)
EMBED = 128                    # embedding_count
HEADS = 2                      # head_count
HEAD_SIZE = EMBED // HEADS     # 64
LAYERS = 2                     # layer_count
VOCAB = 128                    # synthetic vocab size (training text unavailable)
LN_EPS = 1e-5                  # torch.nn.LayerNorm default eps
FF_HIDDEN = 4 * EMBED          # 512

_BLOCK_KEYS = ("ln1_g", "ln1_b", "wqkv", "wp", "bp",
               "ln2_g", "ln2_b", "w1", "b1", "w2", "b2")
_FINAL_KEYS = ("lnf_g", "lnf_b", "wlm", "blm")
_N_BLOCK = len(_BLOCK_KEYS)


# ---------------------------------------------------------------------------
# Fused kernel
# ---------------------------------------------------------------------------
def _layer_norm(x, gamma, beta):
    # x: (N, C) f32; gamma/beta: (1, C) f32
    mu = jnp.mean(x, axis=-1, keepdims=True)
    var = jnp.mean((x - mu) ** 2, axis=-1, keepdims=True)
    return (x - mu) * jax.lax.rsqrt(var + LN_EPS) * gamma + beta


def _fused_forward_kernel(tok_ref, pos_ref, *refs):
    """Entire forward: embedding add + LAYERS blocks + final LN + lm_head."""
    o_ref = refs[-1]
    wrefs = refs[:-1]

    T, C = BLOCK_SIZE, EMBED
    BT = tok_ref.shape[0]
    B = BT // T

    # token + position embeddings (dropout = identity at inference)
    pos = pos_ref[...]                                        # (T, C) f32
    x = tok_ref[...] + jnp.concatenate([pos] * B, axis=0)     # (B*T, C) f32

    # causal mask + scalar constants, hoisted once for the whole fused kernel
    row = jax.lax.broadcasted_iota(jnp.int32, (T, T), 0)
    col = jax.lax.broadcasted_iota(jnp.int32, (T, T), 1)
    causal = row >= col
    neg = jnp.float32(-1e30)
    # NOTE: the PyTorch reference scales by head_count**-0.5 (not head_size**-0.5);
    # reproduce that exactly.
    scale = jnp.float32(HEADS ** (-0.5))

    ri = 0
    for _ in range(LAYERS):                                   # static unroll, 2 layers
        (ln1_g, ln1_b, wqkv, wp, bp,
         ln2_g, ln2_b, w1, b1, w2, b2) = wrefs[ri:ri + _N_BLOCK]
        ri += _N_BLOCK

        # --- LayerNorm 1 + multi-head causal self-attention (fused QKV) ---
        xn = _layer_norm(x, ln1_g[...], ln1_b[...])
        qkv = jnp.dot(xn.astype(jnp.bfloat16), wqkv[...],
                      preferred_element_type=jnp.float32)     # (B*T, 3C) f32
        q = qkv[:, 0:C]
        k = qkv[:, C:2 * C]
        v = qkv[:, 2 * C:3 * C]

        wp_a = wp[...]                                        # (C, C) bf16
        att_rows = []
        for b in range(B):                    # static loop, tiny (8,8) score blocks
            r0 = b * T
            acc_b = jnp.zeros((T, C), jnp.float32)
            for h in range(HEADS):            # static loop, 2 heads
                c0 = h * HEAD_SIZE
                qh = q[r0:r0 + T, c0:c0 + HEAD_SIZE]          # (T, 64)
                kh = k[r0:r0 + T, c0:c0 + HEAD_SIZE]
                vh = v[r0:r0 + T, c0:c0 + HEAD_SIZE]
                # q @ k^T without an explicit transpose
                s = jax.lax.dot_general(
                    qh, kh, (((1,), (1,)), ((), ())),
                    preferred_element_type=jnp.float32) * scale
                s = jnp.where(causal, s, neg)
                s = s - jnp.max(s, axis=-1, keepdims=True)
                p = jnp.exp(s)
                p = p * pl.reciprocal(jnp.sum(p, axis=-1, keepdims=True),
                                      approx=True)
                oh = jnp.dot(p, vh, preferred_element_type=jnp.float32)  # (T, 64)
                # accumulate the output projection per head (no lane-axis concat)
                acc_b = acc_b + jnp.dot(oh.astype(jnp.bfloat16),
                                        wp_a[c0:c0 + HEAD_SIZE, :],
                                        preferred_element_type=jnp.float32)
            att_rows.append(acc_b)
        att = jnp.concatenate(att_rows, axis=0) + bp[...]     # (B*T, C)
        x = x + att                                           # residual

        # --- LayerNorm 2 + feed-forward ---
        xn2 = _layer_norm(x, ln2_g[...], ln2_b[...])
        h1 = jnp.dot(xn2.astype(jnp.bfloat16), w1[...],
                     preferred_element_type=jnp.float32) + b1[...]
        h1 = jnp.maximum(h1, 0.0)                             # ReLU
        ff = jnp.dot(h1.astype(jnp.bfloat16), w2[...],
                     preferred_element_type=jnp.float32) + b2[...]
        x = x + ff                                            # residual

    # --- final LayerNorm + lm_head ---
    lnf_g, lnf_b, wlm, blm = wrefs[ri:ri + 4]
    xn = _layer_norm(x, lnf_g[...], lnf_b[...])
    o_ref[...] = jnp.dot(xn.astype(jnp.bfloat16), wlm[...],
                         preferred_element_type=jnp.float32) + blm[...]


# ---------------------------------------------------------------------------
# Wrapper (pallas_call plumbing) -- single fused call, single jit
# ---------------------------------------------------------------------------
def _full_spec(shape):
    nd = len(shape)
    return pl.BlockSpec(shape, lambda i, nd=nd: (0,) * nd)


@jax.jit
def transformer_language_model(idx, params):
    """Forward pass equivalent to TransformerLanguageModel.forward(idx) (loss=None)."""
    B, T = idx.shape
    # Embedding gather is glue (plain JAX); everything else is one fused Pallas kernel.
    tok = jnp.take(params["tok_emb"], idx, axis=0).reshape(B * T, EMBED)  # (B*T, C) f32

    flat = [params["pos_emb"]]
    for blk in params["blocks"]:
        flat += [blk[k] for k in _BLOCK_KEYS]
    flat += [params[k] for k in _FINAL_KEYS]

    in_specs = [_full_spec(tok.shape)] + [_full_spec(w.shape) for w in flat]
    logits = pl.pallas_call(
        _fused_forward_kernel,
        out_shape=jax.ShapeDtypeStruct((B * T, VOCAB), jnp.float32),
        grid=(1,),
        in_specs=in_specs,
        out_specs=pl.BlockSpec((B * T, VOCAB), lambda i: (0, 0)),
        compiler_params=pltpu.CompilerParams(
            dimension_semantics=("arbitrary",)),
    )(tok, *flat)

    return logits.reshape(B, T, VOCAB), None


# ---------------------------------------------------------------------------
# Parameter init (mirrors _init_weights: Linear/Embedding ~ N(0, 0.02), bias=0,
# LayerNorm gamma=1, beta=0).  Linear matmul weights are stored pre-transposed
# as (in_features, out_features) and in bf16 (native MXU dtype); LayerNorm
# params, biases and embeddings stay f32.
# ---------------------------------------------------------------------------
def init_params(key):
    def normal(k, shape, dtype=jnp.float32):
        return (0.02 * jax.random.normal(k, shape)).astype(dtype)

    keys = jax.random.split(key, 3 + LAYERS)
    params = {
        "tok_emb": normal(keys[0], (VOCAB, EMBED)),
        "pos_emb": normal(keys[1], (BLOCK_SIZE, EMBED)),
        "lnf_g": jnp.ones((1, EMBED), jnp.float32),
        "lnf_b": jnp.zeros((1, EMBED), jnp.float32),
        "wlm": normal(keys[2], (EMBED, VOCAB), jnp.bfloat16),
        "blm": jnp.zeros((1, VOCAB), jnp.float32),
        "blocks": [],
    }
    for l in range(LAYERS):
        lk = jax.random.split(keys[3 + l], 6)
        wq = normal(lk[0], (EMBED, EMBED))
        wk = normal(lk[1], (EMBED, EMBED))
        wv = normal(lk[2], (EMBED, EMBED))
        params["blocks"].append({
            "ln1_g": jnp.ones((1, EMBED), jnp.float32),
            "ln1_b": jnp.zeros((1, EMBED), jnp.float32),
            "wqkv": jnp.concatenate([wq, wk, wv], axis=1).astype(jnp.bfloat16),
            "wp": normal(lk[3], (EMBED, EMBED), jnp.bfloat16),
            "bp": jnp.zeros((1, EMBED), jnp.float32),
            "ln2_g": jnp.ones((1, EMBED), jnp.float32),
            "ln2_b": jnp.zeros((1, EMBED), jnp.float32),
            "w1": normal(lk[4], (EMBED, FF_HIDDEN), jnp.bfloat16),
            "b1": jnp.zeros((1, FF_HIDDEN), jnp.float32),
            "w2": normal(lk[5], (FF_HIDDEN, EMBED), jnp.bfloat16),
            "b2": jnp.zeros((1, EMBED), jnp.float32),
        })
    return params


if __name__ == "__main__":
    key = jax.random.PRNGKey(0)
    pkey, ikey = jax.random.split(key)
    params = init_params(pkey)

    B, T = 2, BLOCK_SIZE
    idx = jax.random.randint(ikey, (B, T), 0, VOCAB, dtype=jnp.int32)

    logits, loss = transformer_language_model(idx, params)
    logits = jax.block_until_ready(logits)

    assert logits.shape == (B, T, VOCAB)
    assert logits.dtype == jnp.float32
    assert loss is None
    assert bool(jnp.all(jnp.isfinite(logits)))
    print("KERNEL_OK")
</pallas_src>

<mosaic_0001>
module attributes {stable_mosaic.version = 11 : i64} {
  func.func @_fused_forward_kernel(%arg0: i32, %arg1: memref<16x128xf32, #tpu.memory_space<vmem>>, %arg2: memref<8x128xf32, #tpu.memory_space<vmem>>, %arg3: memref<1x128xf32, #tpu.memory_space<vmem>>, %arg4: memref<1x128xf32, #tpu.memory_space<vmem>>, %arg5: memref<128x384xbf16, #tpu.memory_space<vmem>>, %arg6: memref<128x128xbf16, #tpu.memory_space<vmem>>, %arg7: memref<1x128xf32, #tpu.memory_space<vmem>>, %arg8: memref<1x128xf32, #tpu.memory_space<vmem>>, %arg9: memref<1x128xf32, #tpu.memory_space<vmem>>, %arg10: memref<128x512xbf16, #tpu.memory_space<vmem>>, %arg11: memref<1x512xf32, #tpu.memory_space<vmem>>, %arg12: memref<512x128xbf16, #tpu.memory_space<vmem>>, %arg13: memref<1x128xf32, #tpu.memory_space<vmem>>, %arg14: memref<1x128xf32, #tpu.memory_space<vmem>>, %arg15: memref<1x128xf32, #tpu.memory_space<vmem>>, %arg16: memref<128x384xbf16, #tpu.memory_space<vmem>>, %arg17: memref<128x128xbf16, #tpu.memory_space<vmem>>, %arg18: memref<1x128xf32, #tpu.memory_space<vmem>>, %arg19: memref<1x128xf32, #tpu.memory_space<vmem>>, %arg20: memref<1x128xf32, #tpu.memory_space<vmem>>, %arg21: memref<128x512xbf16, #tpu.memory_space<vmem>>, %arg22: memref<1x512xf32, #tpu.memory_space<vmem>>, %arg23: memref<512x128xbf16, #tpu.memory_space<vmem>>, %arg24: memref<1x128xf32, #tpu.memory_space<vmem>>, %arg25: memref<1x128xf32, #tpu.memory_space<vmem>>, %arg26: memref<1x128xf32, #tpu.memory_space<vmem>>, %arg27: memref<128x128xbf16, #tpu.memory_space<vmem>>, %arg28: memref<1x128xf32, #tpu.memory_space<vmem>>, %arg29: memref<16x128xf32, #tpu.memory_space<vmem>>) attributes {dimension_semantics = [#tpu.dimension_semantics<arbitrary>], iteration_bounds = array<i64: 1>, scalar_prefetch = 0 : i64, scratch_operands = 0 : i64, tpu.core_type = #tpu.core_type<tc>, window_params = [{pipeline_mode = #tpu.pipeline_mode<synchronous>, transform_indices = @transform_0, window_bounds = array<i64: 16, 128>}, {pipeline_mode = #tpu.pipeline_mode<synchronous>, transform_indices = @transform_1, window_bounds = array<i64: 8, 128>}, {pipeline_mode = #tpu.pipeline_mode<synchronous>, transform_indices = @transform_2, window_bounds = array<i64: 1, 128>}, {pipeline_mode = #tpu.pipeline_mode<synchronous>, transform_indices = @transform_3, window_bounds = array<i64: 1, 128>}, {pipeline_mode = #tpu.pipeline_mode<synchronous>, transform_indices = @transform_4, window_bounds = array<i64: 128, 384>}, {pipeline_mode = #tpu.pipeline_mode<synchronous>, transform_indices = @transform_5, window_bounds = array<i64: 128, 128>}, {pipeline_mode = #tpu.pipeline_mode<synchronous>, transform_indices = @transform_6, window_bounds = array<i64: 1, 128>}, {pipeline_mode = #tpu.pipeline_mode<synchronous>, transform_indices = @transform_7, window_bounds = array<i64: 1, 128>}, {pipeline_mode = #tpu.pipeline_mode<synchronous>, transform_indices = @transform_8, window_bounds = array<i64: 1, 128>}, {pipeline_mode = #tpu.pipeline_mode<synchronous>, transform_indices = @transform_9, window_bounds = array<i64: 128, 512>}, {pipeline_mode = #tpu.pipeline_mode<synchronous>, transform_indices = @transform_10, window_bounds = array<i64: 1, 512>}, {pipeline_mode = #tpu.pipeline_mode<synchronous>, transform_indices = @transform_11, window_bounds = array<i64: 512, 128>}, {pipeline_mode = #tpu.pipeline_mode<synchronous>, transform_indices = @transform_12, window_bounds = array<i64: 1, 128>}, {pipeline_mode = #tpu.pipeline_mode<synchronous>, transform_indices = @transform_13, window_bounds = array<i64: 1, 128>}, {pipeline_mode = #tpu.pipeline_mode<synchronous>, transform_indices = @transform_14, window_bounds = array<i64: 1, 128>}, {pipeline_mode = #tpu.pipeline_mode<synchronous>, transform_indices = @transform_15, window_bounds = array<i64: 128, 384>}, {pipeline_mode = #tpu.pipeline_mode<synchronous>, transform_indices = @transform_16, window_bounds = array<i64: 128, 128>}, {pipeline_mode = #tpu.pipeline_mode<synchronous>, transform_indices = @transform_17, window_bounds = array<i64: 1, 128>}, {pipeline_mode = #tpu.pipeline_mode<synchronous>, transform_indices = @transform_18, window_bounds = array<i64: 1, 128>}, {pipeline_mode = #tpu.pipeline_mode<synchronous>, transform_indices = @transform_19, window_bounds = array<i64: 1, 128>}, {pipeline_mode = #tpu.pipeline_mode<synchronous>, transform_indices = @transform_20, window_bounds = array<i64: 128, 512>}, {pipeline_mode = #tpu.pipeline_mode<synchronous>, transform_indices = @transform_21, window_bounds = array<i64: 1, 512>}, {pipeline_mode = #tpu.pipeline_mode<synchronous>, transform_indices = @transform_22, window_bounds = array<i64: 512, 128>}, {pipeline_mode = #tpu.pipeline_mode<synchronous>, transform_indices = @transform_23, window_bounds = array<i64: 1, 128>}, {pipeline_mode = #tpu.pipeline_mode<synchronous>, transform_indices = @transform_24, window_bounds = array<i64: 1, 128>}, {pipeline_mode = #tpu.pipeline_mode<synchronous>, transform_indices = @transform_25, window_bounds = array<i64: 1, 128>}, {pipeline_mode = #tpu.pipeline_mode<synchronous>, transform_indices = @transform_26, window_bounds = array<i64: 128, 128>}, {pipeline_mode = #tpu.pipeline_mode<synchronous>, transform_indices = @transform_27, window_bounds = array<i64: 1, 128>}, {pipeline_mode = #tpu.pipeline_mode<synchronous>, transform_indices = @transform_28, window_bounds = array<i64: 16, 128>}]} {
    %c0 = arith.constant 0 : index
    %c0_0 = arith.constant 0 : index
    %0 = vector.load %arg2[%c0, %c0_0] : memref<8x128xf32, #tpu.memory_space<vmem>>, vector<8x128xf32>
    %c0_1 = arith.constant 0 : index
    %c0_2 = arith.constant 0 : index
    %1 = vector.load %arg1[%c0_1, %c0_2] : memref<16x128xf32, #tpu.memory_space<vmem>>, vector<16x128xf32>
    %2 = tpu.concatenate %0, %0 in 0 : vector<8x128xf32>, vector<8x128xf32> -> vector<16x128xf32>
    %3 = arith.addf %1, %2 : vector<16x128xf32>
    %4 = tpu.iota {dimensions = array<i32: 0>} : vector<8x8xi32>
    %5 = tpu.iota {dimensions = array<i32: 1>} : vector<8x8xi32>
    %6 = arith.cmpi sge, %4, %5 : vector<8x8xi32>
    %c0_3 = arith.constant 0 : index
    %c0_4 = arith.constant 0 : index
    %7 = vector.load %arg3[%c0_3, %c0_4] : memref<1x128xf32, #tpu.memory_space<vmem>>, vector<1x128xf32>
    %c0_5 = arith.constant 0 : index
    %c0_6 = arith.constant 0 : index
    %8 = vector.load %arg4[%c0_5, %c0_6] : memref<1x128xf32, #tpu.memory_space<vmem>>, vector<1x128xf32>
    %cst = arith.constant dense<0.000000e+00> : vector<16xf32>
    %9 = vector.multi_reduction <add>, %3, %cst [1] : vector<16x128xf32> to vector<16xf32>
    %10 = vector.shape_cast %9 : vector<16xf32> to vector<16x1xf32>
    %cst_7 = arith.constant 1.280000e+02 : f32
    %11 = vector.broadcast %cst_7 : f32 to vector<16x1xf32>
    %12 = arith.divf %10, %11 : vector<16x1xf32>
    %13 = vector.broadcast %12 : vector<16x1xf32> to vector<16x128xf32>
    %14 = arith.subf %3, %13 : vector<16x128xf32>
    %15 = arith.mulf %14, %14 : vector<16x128xf32>
    %cst_8 = arith.constant dense<0.000000e+00> : vector<16xf32>
    %16 = vector.multi_reduction <add>, %15, %cst_8 [1] : vector<16x128xf32> to vector<16xf32>
    %17 = vector.shape_cast %16 : vector<16xf32> to vector<16x1xf32>
    %cst_9 = arith.constant 1.280000e+02 : f32
    %18 = vector.broadcast %cst_9 : f32 to vector<16x1xf32>
    %19 = arith.divf %17, %18 : vector<16x1xf32>
    %20 = vector.broadcast %12 : vector<16x1xf32> to vector<16x128xf32>
    %21 = arith.subf %3, %20 : vector<16x128xf32>
    %cst_10 = arith.constant 9.99999974E-6 : f32
    %22 = vector.broadcast %cst_10 : f32 to vector<16x1xf32>
    %23 = arith.addf %19, %22 : vector<16x1xf32>
    %24 = math.rsqrt %23 : vector<16x1xf32>
    %25 = vector.broadcast %24 : vector<16x1xf32> to vector<16x128xf32>
    %26 = arith.mulf %21, %25 : vector<16x128xf32>
    %27 = vector.broadcast %7 : vector<1x128xf32> to vector<16x128xf32>
    %28 = arith.mulf %26, %27 : vector<16x128xf32>
    %29 = vector.broadcast %8 : vector<1x128xf32> to vector<16x128xf32>
    %30 = arith.addf %28, %29 : vector<16x128xf32>
    %31 = arith.truncf %30 : vector<16x128xf32> to vector<16x128xbf16>
    %c0_11 = arith.constant 0 : index
    %c0_12 = arith.constant 0 : index
    %32 = vector.load %arg5[%c0_11, %c0_12] : memref<128x384xbf16, #tpu.memory_space<vmem>>, vector<128x384xbf16>
    %cst_13 = arith.constant dense<0.000000e+00> : vector<16x384xf32>
    %33 = tpu.matmul %31, %32, %cst_13 {dimension_numbers = #tpu.dot_dimension_numbers<[1], [0], [0], [1], [0, 0, 1, 1], [], []>} : vector<16x128xbf16>, vector<128x384xbf16>, vector<16x384xf32> -> vector<16x384xf32>
    %34 = vector.extract_strided_slice %33 {offsets = [0, 0], sizes = [16, 128], strides = [1, 1]} : vector<16x384xf32> to vector<16x128xf32>
    %35 = vector.extract_strided_slice %33 {offsets = [0, 128], sizes = [16, 128], strides = [1, 1]} : vector<16x384xf32> to vector<16x128xf32>
    %36 = vector.extract_strided_slice %33 {offsets = [0, 256], sizes = [16, 128], strides = [1, 1]} : vector<16x384xf32> to vector<16x128xf32>
    %c0_14 = arith.constant 0 : index
    %c0_15 = arith.constant 0 : index
    %37 = vector.load %arg6[%c0_14, %c0_15] : memref<128x128xbf16, #tpu.memory_space<vmem>>, vector<128x128xbf16>
    %cst_16 = arith.constant 0.000000e+00 : f32
    %38 = vector.broadcast %cst_16 : f32 to vector<8x128xf32>
    %39 = vector.extract_strided_slice %34 {offsets = [0, 0], sizes = [8, 64], strides = [1, 1]} : vector<16x128xf32> to vector<8x64xf32>
    %40 = vector.extract_strided_slice %35 {offsets = [0, 0], sizes = [8, 64], strides = [1, 1]} : vector<16x128xf32> to vector<8x64xf32>
    %41 = vector.extract_strided_slice %36 {offsets = [0, 0], sizes = [8, 64], strides = [1, 1]} : vector<16x128xf32> to vector<8x64xf32>
    %cst_17 = arith.constant dense<0.000000e+00> : vector<8x8xf32>
    %42 = tpu.matmul %39, %40, %cst_17 {dimension_numbers = #tpu.dot_dimension_numbers<[1], [1], [0], [0], [0, 0, 1, 0], [], []>} : vector<8x64xf32>, vector<8x64xf32>, vector<8x8xf32> -> vector<8x8xf32>
    %cst_18 = arith.constant 0.707106769 : f32
    %43 = vector.broadcast %cst_18 : f32 to vector<8x8xf32>
    %44 = arith.mulf %42, %43 : vector<8x8xf32>
    %cst_19 = arith.constant -1.000000e+30 : f32
    %45 = vector.broadcast %cst_19 : f32 to vector<8x8xf32>
    %46 = arith.select %6, %44, %45 : vector<8x8xi1>, vector<8x8xf32>
    %cst_20 = arith.constant dense<0xFF800000> : vector<8xf32>
    %47 = vector.multi_reduction <maximumf>, %46, %cst_20 [1] : vector<8x8xf32> to vector<8xf32>
    %48 = vector.shape_cast %47 : vector<8xf32> to vector<8x1xf32>
    %49 = vector.broadcast %48 : vector<8x1xf32> to vector<8x8xf32>
    %50 = arith.subf %46, %49 : vector<8x8xf32>
    %51 = math.exp %50 : vector<8x8xf32>
    %cst_21 = arith.constant dense<0.000000e+00> : vector<8xf32>
    %52 = vector.multi_reduction <add>, %51, %cst_21 [1] : vector<8x8xf32> to vector<8xf32>
    %53 = vector.shape_cast %52 : vector<8xf32> to vector<8x1xf32>
    %54 = tpu.reciprocal %53 {approx = true} : vector<8x1xf32> -> vector<8x1xf32>
    %55 = vector.broadcast %54 : vector<8x1xf32> to vector<8x8xf32>
    %56 = arith.mulf %51, %55 : vector<8x8xf32>
    %cst_22 = arith.constant dense<0.000000e+00> : vector<8x64xf32>
    %57 = tpu.matmul %56, %41, %cst_22 {dimension_numbers = #tpu.dot_dimension_numbers<[1], [0], [0], [1], [0, 0, 1, 1], [], []>} : vector<8x8xf32>, vector<8x64xf32>, vector<8x64xf32> -> vector<8x64xf32>
    %58 = arith.truncf %57 : vector<8x64xf32> to vector<8x64xbf16>
    %59 = vector.extract_strided_slice %37 {offsets = [0, 0], sizes = [64, 128], strides = [1, 1]} : vector<128x128xbf16> to vector<64x128xbf16>
    %cst_23 = arith.constant dense<0.000000e+00> : vector<8x128xf32>
    %60 = tpu.matmul %58, %59, %cst_23 {dimension_numbers = #tpu.dot_dimension_numbers<[1], [0], [0], [1], [0, 0, 1, 1], [], []>} : vector<8x64xbf16>, vector<64x128xbf16>, vector<8x128xf32> -> vector<8x128xf32>
    %61 = arith.addf %38, %60 : vector<8x128xf32>
    %62 = vector.extract_strided_slice %34 {offsets = [0, 64], sizes = [8, 64], strides = [1, 1]} : vector<16x128xf32> to vector<8x64xf32>
    %63 = vector.extract_strided_slice %35 {offsets = [0, 64], sizes = [8, 64], strides = [1, 1]} : vector<16x128xf32> to vector<8x64xf32>
    %64 = vector.extract_strided_slice %36 {offsets = [0, 64], sizes = [8, 64], strides = [1, 1]} : vector<16x128xf32> to vector<8x64xf32>
    %cst_24 = arith.constant dense<0.000000e+00> : vector<8x8xf32>
    %65 = tpu.matmul %62, %63, %cst_24 {dimension_numbers = #tpu.dot_dimension_numbers<[1], [1], [0], [0], [0, 0, 1, 0], [], []>} : vector<8x64xf32>, vector<8x64xf32>, vector<8x8xf32> -> vector<8x8xf32>
    %cst_25 = arith.constant 0.707106769 : f32
    %66 = vector.broadcast %cst_25 : f32 to vector<8x8xf32>
    %67 = arith.mulf %65, %66 : vector<8x8xf32>
    %cst_26 = arith.constant -1.000000e+30 : f32
    %68 = vector.broadcast %cst_26 : f32 to vector<8x8xf32>
    %69 = arith.select %6, %67, %68 : vector<8x8xi1>, vector<8x8xf32>
    %cst_27 = arith.constant dense<0xFF800000> : vector<8xf32>
    %70 = vector.multi_reduction <maximumf>, %69, %cst_27 [1] : vector<8x8xf32> to vector<8xf32>
    %71 = vector.shape_cast %70 : vector<8xf32> to vector<8x1xf32>
    %72 = vector.broadcast %71 : vector<8x1xf32> to vector<8x8xf32>
    %73 = arith.subf %69, %72 : vector<8x8xf32>
    %74 = math.exp %73 : vector<8x8xf32>
    %cst_28 = arith.constant dense<0.000000e+00> : vector<8xf32>
    %75 = vector.multi_reduction <add>, %74, %cst_28 [1] : vector<8x8xf32> to vector<8xf32>
    %76 = vector.shape_cast %75 : vector<8xf32> to vector<8x1xf32>
    %77 = tpu.reciprocal %76 {approx = true} : vector<8x1xf32> -> vector<8x1xf32>
    %78 = vector.broadcast %77 : vector<8x1xf32> to vector<8x8xf32>
    %79 = arith.mulf %74, %78 : vector<8x8xf32>
    %cst_29 = arith.constant dense<0.000000e+00> : vector<8x64xf32>
    %80 = tpu.matmul %79, %64, %cst_29 {dimension_numbers = #tpu.dot_dimension_numbers<[1], [0], [0], [1], [0, 0, 1, 1], [], []>} : vector<8x8xf32>, vector<8x64xf32>, vector<8x64xf32> -> vector<8x64xf32>
    %81 = arith.truncf %80 : vector<8x64xf32> to vector<8x64xbf16>
    %82 = vector.extract_strided_slice %37 {offsets = [64, 0], sizes = [64, 128], strides = [1, 1]} : vector<128x128xbf16> to vector<64x128xbf16>
    %cst_30 = arith.constant dense<0.000000e+00> : vector<8x128xf32>
    %83 = tpu.matmul %81, %82, %cst_30 {dimension_numbers = #tpu.dot_dimension_numbers<[1], [0], [0], [1], [0, 0, 1, 1], [], []>} : vector<8x64xbf16>, vector<64x128xbf16>, vector<8x128xf32> -> vector<8x128xf32>
    %84 = arith.addf %61, %83 : vector<8x128xf32>
    %cst_31 = arith.constant 0.000000e+00 : f32
    %85 = vector.broadcast %cst_31 : f32 to vector<8x128xf32>
    %86 = vector.extract_strided_slice %34 {offsets = [8, 0], sizes = [8, 64], strides = [1, 1]} : vector<16x128xf32> to vector<8x64xf32>
    %87 = vector.extract_strided_slice %35 {offsets = [8, 0], sizes = [8, 64], strides = [1, 1]} : vector<16x128xf32> to vector<8x64xf32>
    %88 = vector.extract_strided_slice %36 {offsets = [8, 0], sizes = [8, 64], strides = [1, 1]} : vector<16x128xf32> to vector<8x64xf32>
    %cst_32 = arith.constant dense<0.000000e+00> : vector<8x8xf32>
    %89 = tpu.matmul %86, %87, %cst_32 {dimension_numbers = #tpu.dot_dimension_numbers<[1], [1], [0], [0], [0, 0, 1, 0], [], []>} : vector<8x64xf32>, vector<8x64xf32>, vector<8x8xf32> -> vector<8x8xf32>
    %cst_33 = arith.constant 0.707106769 : f32
    %90 = vector.broadcast %cst_33 : f32 to vector<8x8xf32>
    %91 = arith.mulf %89, %90 : vector<8x8xf32>
    %cst_34 = arith.constant -1.000000e+30 : f32
    %92 = vector.broadcast %cst_34 : f32 to vector<8x8xf32>
    %93 = arith.select %6, %91, %92 : vector<8x8xi1>, vector<8x8xf32>
    %cst_35 = arith.constant dense<0xFF800000> : vector<8xf32>
    %94 = vector.multi_reduction <maximumf>, %93, %cst_35 [1] : vector<8x8xf32> to vector<8xf32>
    %95 = vector.shape_cast %94 : vector<8xf32> to vector<8x1xf32>
    %96 = vector.broadcast %95 : vector<8x1xf32> to vector<8x8xf32>
    %97 = arith.subf %93, %96 : vector<8x8xf32>
    %98 = math.exp %97 : vector<8x8xf32>
    %cst_36 = arith.constant dense<0.000000e+00> : vector<8xf32>
    %99 = vector.multi_reduction <add>, %98, %cst_36 [1] : vector<8x8xf32> to vector<8xf32>
    %100 = vector.shape_cast %99 : vector<8xf32> to vector<8x1xf32>
    %101 = tpu.reciprocal %100 {approx = true} : vector<8x1xf32> -> vector<8x1xf32>
    %102 = vector.broadcast %101 : vector<8x1xf32> to vector<8x8xf32>
    %103 = arith.mulf %98, %102 : vector<8x8xf32>
    %cst_37 = arith.constant dense<0.000000e+00> : vector<8x64xf32>
    %104 = tpu.matmul %103, %88, %cst_37 {dimension_numbers = #tpu.dot_dimension_numbers<[1], [0], [0], [1], [0, 0, 1, 1], [], []>} : vector<8x8xf32>, vector<8x64xf32>, vector<8x64xf32> -> vector<8x64xf32>
    %105 = arith.truncf %104 : vector<8x64xf32> to vector<8x64xbf16>
    %106 = vector.extract_strided_slice %37 {offsets = [0, 0], sizes = [64, 128], strides = [1, 1]} : vector<128x128xbf16> to vector<64x128xbf16>
    %cst_38 = arith.constant dense<0.000000e+00> : vector<8x128xf32>
    %107 = tpu.matmul %105, %106, %cst_38 {dimension_numbers = #tpu.dot_dimension_numbers<[1], [0], [0], [1], [0, 0, 1, 1], [], []>} : vector<8x64xbf16>, vector<64x128xbf16>, vector<8x128xf32> -> vector<8x128xf32>
    %108 = arith.addf %85, %107 : vector<8x128xf32>
    %109 = vector.extract_strided_slice %34 {offsets = [8, 64], sizes = [8, 64], strides = [1, 1]} : vector<16x128xf32> to vector<8x64xf32>
    %110 = vector.extract_strided_slice %35 {offsets = [8, 64], sizes = [8, 64], strides = [1, 1]} : vector<16x128xf32> to vector<8x64xf32>
    %111 = vector.extract_strided_slice %36 {offsets = [8, 64], sizes = [8, 64], strides = [1, 1]} : vector<16x128xf32> to vector<8x64xf32>
    %cst_39 = arith.constant dense<0.000000e+00> : vector<8x8xf32>
    %112 = tpu.matmul %109, %110, %cst_39 {dimension_numbers = #tpu.dot_dimension_numbers<[1], [1], [0], [0], [0, 0, 1, 0], [], []>} : vector<8x64xf32>, vector<8x64xf32>, vector<8x8xf32> -> vector<8x8xf32>
    %cst_40 = arith.constant 0.707106769 : f32
    %113 = vector.broadcast %cst_40 : f32 to vector<8x8xf32>
    %114 = arith.mulf %112, %113 : vector<8x8xf32>
    %cst_41 = arith.constant -1.000000e+30 : f32
    %115 = vector.broadcast %cst_41 : f32 to vector<8x8xf32>
    %116 = arith.select %6, %114, %115 : vector<8x8xi1>, vector<8x8xf32>
    %cst_42 = arith.constant dense<0xFF800000> : vector<8xf32>
    %117 = vector.multi_reduction <maximumf>, %116, %cst_42 [1] : vector<8x8xf32> to vector<8xf32>
    %118 = vector.shape_cast %117 : vector<8xf32> to vector<8x1xf32>
    %119 = vector.broadcast %118 : vector<8x1xf32> to vector<8x8xf32>
    %120 = arith.subf %116, %119 : vector<8x8xf32>
    %121 = math.exp %120 : vector<8x8xf32>
    %cst_43 = arith.constant dense<0.000000e+00> : vector<8xf32>
    %122 = vector.multi_reduction <add>, %121, %cst_43 [1] : vector<8x8xf32> to vector<8xf32>
    %123 = vector.shape_cast %122 : vector<8xf32> to vector<8x1xf32>
    %124 = tpu.reciprocal %123 {approx = true} : vector<8x1xf32> -> vector<8x1xf32>
    %125 = vector.broadcast %124 : vector<8x1xf32> to vector<8x8xf32>
    %126 = arith.mulf %121, %125 : vector<8x8xf32>
    %cst_44 = arith.constant dense<0.000000e+00> : vector<8x64xf32>
    %127 = tpu.matmul %126, %111, %cst_44 {dimension_numbers = #tpu.dot_dimension_numbers<[1], [0], [0], [1], [0, 0, 1, 1], [], []>} : vector<8x8xf32>, vector<8x64xf32>, vector<8x64xf32> -> vector<8x64xf32>
    %128 = arith.truncf %127 : vector<8x64xf32> to vector<8x64xbf16>
    %129 = vector.extract_strided_slice %37 {offsets = [64, 0], sizes = [64, 128], strides = [1, 1]} : vector<128x128xbf16> to vector<64x128xbf16>
    %cst_45 = arith.constant dense<0.000000e+00> : vector<8x128xf32>
    %130 = tpu.matmul %128, %129, %cst_45 {dimension_numbers = #tpu.dot_dimension_numbers<[1], [0], [0], [1], [0, 0, 1, 1], [], []>} : vector<8x64xbf16>, vector<64x128xbf16>, vector<8x128xf32> -> vector<8x128xf32>
    %131 = arith.addf %108, %130 : vector<8x128xf32>
    %132 = tpu.concatenate %84, %131 in 0 : vector<8x128xf32>, vector<8x128xf32> -> vector<16x128xf32>
    %c0_46 = arith.constant 0 : index
    %c0_47 = arith.constant 0 : index
    %133 = vector.load %arg7[%c0_46, %c0_47] : memref<1x128xf32, #tpu.memory_space<vmem>>, vector<1x128xf32>
    %134 = vector.broadcast %133 : vector<1x128xf32> to vector<16x128xf32>
    %135 = arith.addf %132, %134 : vector<16x128xf32>
    %136 = arith.addf %3, %135 : vector<16x128xf32>
    %c0_48 = arith.constant 0 : index
    %c0_49 = arith.constant 0 : index
    %137 = vector.load %arg8[%c0_48, %c0_49] : memref<1x128xf32, #tpu.memory_space<vmem>>, vector<1x128xf32>
    %c0_50 = arith.constant 0 : index
    %c0_51 = arith.constant 0 : index
    %138 = vector.load %arg9[%c0_50, %c0_51] : memref<1x128xf32, #tpu.memory_space<vmem>>, vector<1x128xf32>
    %cst_52 = arith.constant dense<0.000000e+00> : vector<16xf32>
    %139 = vector.multi_reduction <add>, %136, %cst_52 [1] : vector<16x128xf32> to vector<16xf32>
    %140 = vector.shape_cast %139 : vector<16xf32> to vector<16x1xf32>
    %cst_53 = arith.constant 1.280000e+02 : f32
    %141 = vector.broadcast %cst_53 : f32 to vector<16x1xf32>
    %142 = arith.divf %140, %141 : vector<16x1xf32>
    %143 = vector.broadcast %142 : vector<16x1xf32> to vector<16x128xf32>
    %144 = arith.subf %136, %143 : vector<16x128xf32>
    %145 = arith.mulf %144, %144 : vector<16x128xf32>
    %cst_54 = arith.constant dense<0.000000e+00> : vector<16xf32>
    %146 = vector.multi_reduction <add>, %145, %cst_54 [1] : vector<16x128xf32> to vector<16xf32>
    %147 = vector.shape_cast %146 : vector<16xf32> to vector<16x1xf32>
    %cst_55 = arith.constant 1.280000e+02 : f32
    %148 = vector.broadcast %cst_55 : f32 to vector<16x1xf32>
    %149 = arith.divf %147, %148 : vector<16x1xf32>
    %150 = vector.broadcast %142 : vector<16x1xf32> to vector<16x128xf32>
    %151 = arith.subf %136, %150 : vector<16x128xf32>
    %cst_56 = arith.constant 9.99999974E-6 : f32
    %152 = vector.broadcast %cst_56 : f32 to vector<16x1xf32>
    %153 = arith.addf %149, %152 : vector<16x1xf32>
    %154 = math.rsqrt %153 : vector<16x1xf32>
    %155 = vector.broadcast %154 : vector<16x1xf32> to vector<16x128xf32>
    %156 = arith.mulf %151, %155 : vector<16x128xf32>
    %157 = vector.broadcast %137 : vector<1x128xf32> to vector<16x128xf32>
    %158 = arith.mulf %156, %157 : vector<16x128xf32>
    %159 = vector.broadcast %138 : vector<1x128xf32> to vector<16x128xf32>
    %160 = arith.addf %158, %159 : vector<16x128xf32>
    %161 = arith.truncf %160 : vector<16x128xf32> to vector<16x128xbf16>
    %c0_57 = arith.constant 0 : index
    %c0_58 = arith.constant 0 : index
    %162 = vector.load %arg10[%c0_57, %c0_58] : memref<128x512xbf16, #tpu.memory_space<vmem>>, vector<128x512xbf16>
    %cst_59 = arith.constant dense<0.000000e+00> : vector<16x512xf32>
    %163 = tpu.matmul %161, %162, %cst_59 {dimension_numbers = #tpu.dot_dimension_numbers<[1], [0], [0], [1], [0, 0, 1, 1], [], []>} : vector<16x128xbf16>, vector<128x512xbf16>, vector<16x512xf32> -> vector<16x512xf32>
    %c0_60 = arith.constant 0 : index
    %c0_61 = arith.constant 0 : index
    %164 = vector.load %arg11[%c0_60, %c0_61] : memref<1x512xf32, #tpu.memory_space<vmem>>, vector<1x512xf32>
    %165 = vector.broadcast %164 : vector<1x512xf32> to vector<16x512xf32>
    %166 = arith.addf %163, %165 : vector<16x512xf32>
    %cst_62 = arith.constant 0.000000e+00 : f32
    %167 = vector.broadcast %cst_62 : f32 to vector<16x512xf32>
    %168 = arith.maximumf %166, %167 : vector<16x512xf32>
    %169 = arith.truncf %168 : vector<16x512xf32> to vector<16x512xbf16>
    %c0_63 = arith.constant 0 : index
    %c0_64 = arith.constant 0 : index
    %170 = vector.load %arg12[%c0_63, %c0_64] : memref<512x128xbf16, #tpu.memory_space<vmem>>, vector<512x128xbf16>
    %cst_65 = arith.constant dense<0.000000e+00> : vector<16x128xf32>
    %171 = tpu.matmul %169, %170, %cst_65 {dimension_numbers = #tpu.dot_dimension_numbers<[1], [0], [0], [1], [0, 0, 1, 1], [], []>} : vector<16x512xbf16>, vector<512x128xbf16>, vector<16x128xf32> -> vector<16x128xf32>
    %c0_66 = arith.constant 0 : index
    %c0_67 = arith.constant 0 : index
    %172 = vector.load %arg13[%c0_66, %c0_67] : memref<1x128xf32, #tpu.memory_space<vmem>>, vector<1x128xf32>
    %173 = vector.broadcast %172 : vector<1x128xf32> to vector<16x128xf32>
    %174 = arith.addf %171, %173 : vector<16x128xf32>
    %175 = arith.addf %136, %174 : vector<16x128xf32>
    %c0_68 = arith.constant 0 : index
    %c0_69 = arith.constant 0 : index
    %176 = vector.load %arg14[%c0_68, %c0_69] : memref<1x128xf32, #tpu.memory_space<vmem>>, vector<1x128xf32>
    %c0_70 = arith.constant 0 : index
    %c0_71 = arith.constant 0 : index
    %177 = vector.load %arg15[%c0_70, %c0_71] : memref<1x128xf32, #tpu.memory_space<vmem>>, vector<1x128xf32>
    %cst_72 = arith.constant dense<0.000000e+00> : vector<16xf32>
    %178 = vector.multi_reduction <add>, %175, %cst_72 [1] : vector<16x128xf32> to vector<16xf32>
    %179 = vector.shape_cast %178 : vector<16xf32> to vector<16x1xf32>
    %cst_73 = arith.constant 1.280000e+02 : f32
    %180 = vector.broadcast %cst_73 : f32 to vector<16x1xf32>
    %181 = arith.divf %179, %180 : vector<16x1xf32>
    %182 = vector.broadcast %181 : vector<16x1xf32> to vector<16x128xf32>
    %183 = arith.subf %175, %182 : vector<16x128xf32>
    %184 = arith.mulf %183, %183 : vector<16x128xf32>
    %cst_74 = arith.constant dense<0.000000e+00> : vector<16xf32>
    %185 = vector.multi_reduction <add>, %184, %cst_74 [1] : vector<16x128xf32> to vector<16xf32>
    %186 = vector.shape_cast %185 : vector<16xf32> to vector<16x1xf32>
    %cst_75 = arith.constant 1.280000e+02 : f32
    %187 = vector.broadcast %cst_75 : f32 to vector<16x1xf32>
    %188 = arith.divf %186, %187 : vector<16x1xf32>
    %189 = vector.broadcast %181 : vector<16x1xf32> to vector<16x128xf32>
    %190 = arith.subf %175, %189 : vector<16x128xf32>
    %cst_76 = arith.constant 9.99999974E-6 : f32
    %191 = vector.broadcast %cst_76 : f32 to vector<16x1xf32>
    %192 = arith.addf %188, %191 : vector<16x1xf32>
    %193 = math.rsqrt %192 : vector<16x1xf32>
    %194 = vector.broadcast %193 : vector<16x1xf32> to vector<16x128xf32>
    %195 = arith.mulf %190, %194 : vector<16x128xf32>
    %196 = vector.broadcast %176 : vector<1x128xf32> to vector<16x128xf32>
    %197 = arith.mulf %195, %196 : vector<16x128xf32>
    %198 = vector.broadcast %177 : vector<1x128xf32> to vector<16x128xf32>
    %199 = arith.addf %197, %198 : vector<16x128xf32>
    %200 = arith.truncf %199 : vector<16x128xf32> to vector<16x128xbf16>
    %c0_77 = arith.constant 0 : index
    %c0_78 = arith.constant 0 : index
    %201 = vector.load %arg16[%c0_77, %c0_78] : memref<128x384xbf16, #tpu.memory_space<vmem>>, vector<128x384xbf16>
    %cst_79 = arith.constant dense<0.000000e+00> : vector<16x384xf32>
    %202 = tpu.matmul %200, %201, %cst_79 {dimension_numbers = #tpu.dot_dimension_numbers<[1], [0], [0], [1], [0, 0, 1, 1], [], []>} : vector<16x128xbf16>, vector<128x384xbf16>, vector<16x384xf32> -> vector<16x384xf32>
    %203 = vector.extract_strided_slice %202 {offsets = [0, 0], sizes = [16, 128], strides = [1, 1]} : vector<16x384xf32> to vector<16x128xf32>
    %204 = vector.extract_strided_slice %202 {offsets = [0, 128], sizes = [16, 128], strides = [1, 1]} : vector<16x384xf32> to vector<16x128xf32>
    %205 = vector.extract_strided_slice %202 {offsets = [0, 256], sizes = [16, 128], strides = [1, 1]} : vector<16x384xf32> to vector<16x128xf32>
    %c0_80 = arith.constant 0 : index
    %c0_81 = arith.constant 0 : index
    %206 = vector.load %arg17[%c0_80, %c0_81] : memref<128x128xbf16, #tpu.memory_space<vmem>>, vector<128x128xbf16>
    %cst_82 = arith.constant 0.000000e+00 : f32
    %207 = vector.broadcast %cst_82 : f32 to vector<8x128xf32>
    %208 = vector.extract_strided_slice %203 {offsets = [0, 0], sizes = [8, 64], strides = [1, 1]} : vector<16x128xf32> to vector<8x64xf32>
    %209 = vector.extract_strided_slice %204 {offsets = [0, 0], sizes = [8, 64], strides = [1, 1]} : vector<16x128xf32> to vector<8x64xf32>
    %210 = vector.extract_strided_slice %205 {offsets = [0, 0], sizes = [8, 64], strides = [1, 1]} : vector<16x128xf32> to vector<8x64xf32>
    %cst_83 = arith.constant dense<0.000000e+00> : vector<8x8xf32>
    %211 = tpu.matmul %208, %209, %cst_83 {dimension_numbers = #tpu.dot_dimension_numbers<[1], [1], [0], [0], [0, 0, 1, 0], [], []>} : vector<8x64xf32>, vector<8x64xf32>, vector<8x8xf32> -> vector<8x8xf32>
    %cst_84 = arith.constant 0.707106769 : f32
    %212 = vector.broadcast %cst_84 : f32 to vector<8x8xf32>
    %213 = arith.mulf %211, %212 : vector<8x8xf32>
    %cst_85 = arith.constant -1.000000e+30 : f32
    %214 = vector.broadcast %cst_85 : f32 to vector<8x8xf32>
    %215 = arith.select %6, %213, %214 : vector<8x8xi1>, vector<8x8xf32>
    %cst_86 = arith.constant dense<0xFF800000> : vector<8xf32>
    %216 = vector.multi_reduction <maximumf>, %215, %cst_86 [1] : vector<8x8xf32> to vector<8xf32>
    %217 = vector.shape_cast %216 : vector<8xf32> to vector<8x1xf32>
    %218 = vector.broadcast %217 : vector<8x1xf32> to vector<8x8xf32>
    %219 = arith.subf %215, %218 : vector<8x8xf32>
    %220 = math.exp %219 : vector<8x8xf32>
    %cst_87 = arith.constant dense<0.000000e+00> : vector<8xf32>
    %221 = vector.multi_reduction <add>, %220, %cst_87 [1] : vector<8x8xf32> to vector<8xf32>
    %222 = vector.shape_cast %221 : vector<8xf32> to vector<8x1xf32>
    %223 = tpu.reciprocal %222 {approx = true} : vector<8x1xf32> -> vector<8x1xf32>
    %224 = vector.broadcast %223 : vector<8x1xf32> to vector<8x8xf32>
    %225 = arith.mulf %220, %224 : vector<8x8xf32>
    %cst_88 = arith.constant dense<0.000000e+00> : vector<8x64xf32>
    %226 = tpu.matmul %225, %210, %cst_88 {dimension_numbers = #tpu.dot_dimension_numbers<[1], [0], [0], [1], [0, 0, 1, 1], [], []>} : vector<8x8xf32>, vector<8x64xf32>, vector<8x64xf32> -> vector<8x64xf32>
    %227 = arith.truncf %226 : vector<8x64xf32> to vector<8x64xbf16>
    %228 = vector.extract_strided_slice %206 {offsets = [0, 0], sizes = [64, 128], strides = [1, 1]} : vector<128x128xbf16> to vector<64x128xbf16>
    %cst_89 = arith.constant dense<0.000000e+00> : vector<8x128xf32>
    %229 = tpu.matmul %227, %228, %cst_89 {dimension_numbers = #tpu.dot_dimension_numbers<[1], [0], [0], [1], [0, 0, 1, 1], [], []>} : vector<8x64xbf16>, vector<64x128xbf16>, vector<8x128xf32> -> vector<8x128xf32>
    %230 = arith.addf %207, %229 : vector<8x128xf32>
    %231 = vector.extract_strided_slice %203 {offsets = [0, 64], sizes = [8, 64], strides = [1, 1]} : vector<16x128xf32> to vector<8x64xf32>
    %232 = vector.extract_strided_slice %204 {offsets = [0, 64], sizes = [8, 64], strides = [1, 1]} : vector<16x128xf32> to vector<8x64xf32>
    %233 = vector.extract_strided_slice %205 {offsets = [0, 64], sizes = [8, 64], strides = [1, 1]} : vector<16x128xf32> to vector<8x64xf32>
    %cst_90 = arith.constant dense<0.000000e+00> : vector<8x8xf32>
    %234 = tpu.matmul %231, %232, %cst_90 {dimension_numbers = #tpu.dot_dimension_numbers<[1], [1], [0], [0], [0, 0, 1, 0], [], []>} : vector<8x64xf32>, vector<8x64xf32>, vector<8x8xf32> -> vector<8x8xf32>
    %cst_91 = arith.constant 0.707106769 : f32
    %235 = vector.broadcast %cst_91 : f32 to vector<8x8xf32>
    %236 = arith.mulf %234, %235 : vector<8x8xf32>
    %cst_92 = arith.constant -1.000000e+30 : f32
    %237 = vector.broadcast %cst_92 : f32 to vector<8x8xf32>
    %238 = arith.select %6, %236, %237 : vector<8x8xi1>, vector<8x8xf32>
    %cst_93 = arith.constant dense<0xFF800000> : vector<8xf32>
    %239 = vector.multi_reduction <maximumf>, %238, %cst_93 [1] : vector<8x8xf32> to vector<8xf32>
    %240 = vector.shape_cast %239 : vector<8xf32> to vector<8x1xf32>
    %241 = vector.broadcast %240 : vector<8x1xf32> to vector<8x8xf32>
    %242 = arith.subf %238, %241 : vector<8x8xf32>
    %243 = math.exp %242 : vector<8x8xf32>
    %cst_94 = arith.constant dense<0.000000e+00> : vector<8xf32>
    %244 = vector.multi_reduction <add>, %243, %cst_94 [1] : vector<8x8xf32> to vector<8xf32>
    %245 = vector.shape_cast %244 : vector<8xf32> to vector<8x1xf32>
    %246 = tpu.reciprocal %245 {approx = true} : vector<8x1xf32> -> vector<8x1xf32>
    %247 = vector.broadcast %246 : vector<8x1xf32> to vector<8x8xf32>
    %248 = arith.mulf %243, %247 : vector<8x8xf32>
    %cst_95 = arith.constant dense<0.000000e+00> : vector<8x64xf32>
    %249 = tpu.matmul %248, %233, %cst_95 {dimension_numbers = #tpu.dot_dimension_numbers<[1], [0], [0], [1], [0, 0, 1, 1], [], []>} : vector<8x8xf32>, vector<8x64xf32>, vector<8x64xf32> -> vector<8x64xf32>
    %250 = arith.truncf %249 : vector<8x64xf32> to vector<8x64xbf16>
    %251 = vector.extract_strided_slice %206 {offsets = [64, 0], sizes = [64, 128], strides = [1, 1]} : vector<128x128xbf16> to vector<64x128xbf16>
    %cst_96 = arith.constant dense<0.000000e+00> : vector<8x128xf32>
    %252 = tpu.matmul %250, %251, %cst_96 {dimension_numbers = #tpu.dot_dimension_numbers<[1], [0], [0], [1], [0, 0, 1, 1], [], []>} : vector<8x64xbf16>, vector<64x128xbf16>, vector<8x128xf32> -> vector<8x128xf32>
    %253 = arith.addf %230, %252 : vector<8x128xf32>
    %cst_97 = arith.constant 0.000000e+00 : f32
    %254 = vector.broadcast %cst_97 : f32 to vector<8x128xf32>
    %255 = vector.extract_strided_slice %203 {offsets = [8, 0], sizes = [8, 64], strides = [1, 1]} : vector<16x128xf32> to vector<8x64xf32>
    %256 = vector.extract_strided_slice %204 {offsets = [8, 0], sizes = [8, 64], strides = [1, 1]} : vector<16x128xf32> to vector<8x64xf32>
    %257 = vector.extract_strided_slice %205 {offsets = [8, 0], sizes = [8, 64], strides = [1, 1]} : vector<16x128xf32> to vector<8x64xf32>
    %cst_98 = arith.constant dense<0.000000e+00> : vector<8x8xf32>
    %258 = tpu.matmul %255, %256, %cst_98 {dimension_numbers = #tpu.dot_dimension_numbers<[1], [1], [0], [0], [0, 0, 1, 0], [], []>} : vector<8x64xf32>, vector<8x64xf32>, vector<8x8xf32> -> vector<8x8xf32>
    %cst_99 = arith.constant 0.707106769 : f32
    %259 = vector.broadcast %cst_99 : f32 to vector<8x8xf32>
    %260 = arith.mulf %258, %259 : vector<8x8xf32>
    %cst_100 = arith.constant -1.000000e+30 : f32
    %261 = vector.broadcast %cst_100 : f32 to vector<8x8xf32>
    %262 = arith.select %6, %260, %261 : vector<8x8xi1>, vector<8x8xf32>
    %cst_101 = arith.constant dense<0xFF800000> : vector<8xf32>
    %263 = vector.multi_reduction <maximumf>, %262, %cst_101 [1] : vector<8x8xf32> to vector<8xf32>
    %264 = vector.shape_cast %263 : vector<8xf32> to vector<8x1xf32>
    %265 = vector.broadcast %264 : vector<8x1xf32> to vector<8x8xf32>
    %266 = arith.subf %262, %265 : vector<8x8xf32>
    %267 = math.exp %266 : vector<8x8xf32>
    %cst_102 = arith.constant dense<0.000000e+00> : vector<8xf32>
    %268 = vector.multi_reduction <add>, %267, %cst_102 [1] : vector<8x8xf32> to vector<8xf32>
    %269 = vector.shape_cast %268 : vector<8xf32> to vector<8x1xf32>
    %270 = tpu.reciprocal %269 {approx = true} : vector<8x1xf32> -> vector<8x1xf32>
    %271 = vector.broadcast %270 : vector<8x1xf32> to vector<8x8xf32>
    %272 = arith.mulf %267, %271 : vector<8x8xf32>
    %cst_103 = arith.constant dense<0.000000e+00> : vector<8x64xf32>
    %273 = tpu.matmul %272, %257, %cst_103 {dimension_numbers = #tpu.dot_dimension_numbers<[1], [0], [0], [1], [0, 0, 1, 1], [], []>} : vector<8x8xf32>, vector<8x64xf32>, vector<8x64xf32> -> vector<8x64xf32>
    %274 = arith.truncf %273 : vector<8x64xf32> to vector<8x64xbf16>
    %275 = vector.extract_strided_slice %206 {offsets = [0, 0], sizes = [64, 128], strides = [1, 1]} : vector<128x128xbf16> to vector<64x128xbf16>
    %cst_104 = arith.constant dense<0.000000e+00> : vector<8x128xf32>
    %276 = tpu.matmul %274, %275, %cst_104 {dimension_numbers = #tpu.dot_dimension_numbers<[1], [0], [0], [1], [0, 0, 1, 1], [], []>} : vector<8x64xbf16>, vector<64x128xbf16>, vector<8x128xf32> -> vector<8x128xf32>
    %277 = arith.addf %254, %276 : vector<8x128xf32>
    %278 = vector.extract_strided_slice %203 {offsets = [8, 64], sizes = [8, 64], strides = [1, 1]} : vector<16x128xf32> to vector<8x64xf32>
    %279 = vector.extract_strided_slice %204 {offsets = [8, 64], sizes = [8, 64], strides = [1, 1]} : vector<16x128xf32> to vector<8x64xf32>
    %280 = vector.extract_strided_slice %205 {offsets = [8, 64], sizes = [8, 64], strides = [1, 1]} : vector<16x128xf32> to vector<8x64xf32>
    %cst_105 = arith.constant dense<0.000000e+00> : vector<8x8xf32>
    %281 = tpu.matmul %278, %279, %cst_105 {dimension_numbers = #tpu.dot_dimension_numbers<[1], [1], [0], [0], [0, 0, 1, 0], [], []>} : vector<8x64xf32>, vector<8x64xf32>, vector<8x8xf32> -> vector<8x8xf32>
    %cst_106 = arith.constant 0.707106769 : f32
    %282 = vector.broadcast %cst_106 : f32 to vector<8x8xf32>
    %283 = arith.mulf %281, %282 : vector<8x8xf32>
    %cst_107 = arith.constant -1.000000e+30 : f32
    %284 = vector.broadcast %cst_107 : f32 to vector<8x8xf32>
    %285 = arith.select %6, %283, %284 : vector<8x8xi1>, vector<8x8xf32>
    %cst_108 = arith.constant dense<0xFF800000> : vector<8xf32>
    %286 = vector.multi_reduction <maximumf>, %285, %cst_108 [1] : vector<8x8xf32> to vector<8xf32>
    %287 = vector.shape_cast %286 : vector<8xf32> to vector<8x1xf32>
    %288 = vector.broadcast %287 : vector<8x1xf32> to vector<8x8xf32>
    %289 = arith.subf %285, %288 : vector<8x8xf32>
    %290 = math.exp %289 : vector<8x8xf32>
    %cst_109 = arith.constant dense<0.000000e+00> : vector<8xf32>
    %291 = vector.multi_reduction <add>, %290, %cst_109 [1] : vector<8x8xf32> to vector<8xf32>
    %292 = vector.shape_cast %291 : vector<8xf32> to vector<8x1xf32>
    %293 = tpu.reciprocal %292 {approx = true} : vector<8x1xf32> -> vector<8x1xf32>
    %294 = vector.broadcast %293 : vector<8x1xf32> to vector<8x8xf32>
    %295 = arith.mulf %290, %294 : vector<8x8xf32>
    %cst_110 = arith.constant dense<0.000000e+00> : vector<8x64xf32>
    %296 = tpu.matmul %295, %280, %cst_110 {dimension_numbers = #tpu.dot_dimension_numbers<[1], [0], [0], [1], [0, 0, 1, 1], [], []>} : vector<8x8xf32>, vector<8x64xf32>, vector<8x64xf32> -> vector<8x64xf32>
    %297 = arith.truncf %296 : vector<8x64xf32> to vector<8x64xbf16>
    %298 = vector.extract_strided_slice %206 {offsets = [64, 0], sizes = [64, 128], strides = [1, 1]} : vector<128x128xbf16> to vector<64x128xbf16>
    %cst_111 = arith.constant dense<0.000000e+00> : vector<8x128xf32>
    %299 = tpu.matmul %297, %298, %cst_111 {dimension_numbers = #tpu.dot_dimension_numbers<[1], [0], [0], [1], [0, 0, 1, 1], [], []>} : vector<8x64xbf16>, vector<64x128xbf16>, vector<8x128xf32> -> vector<8x128xf32>
    %300 = arith.addf %277, %299 : vector<8x128xf32>
    %301 = tpu.concatenate %253, %300 in 0 : vector<8x128xf32>, vector<8x128xf32> -> vector<16x128xf32>
    %c0_112 = arith.constant 0 : index
    %c0_113 = arith.constant 0 : index
    %302 = vector.load %arg18[%c0_112, %c0_113] : memref<1x128xf32, #tpu.memory_space<vmem>>, vector<1x128xf32>
    %303 = vector.broadcast %302 : vector<1x128xf32> to vector<16x128xf32>
    %304 = arith.addf %301, %303 : vector<16x128xf32>
    %305 = arith.addf %175, %304 : vector<16x128xf32>
    %c0_114 = arith.constant 0 : index
    %c0_115 = arith.constant 0 : index
    %306 = vector.load %arg19[%c0_114, %c0_115] : memref<1x128xf32, #tpu.memory_space<vmem>>, vector<1x128xf32>
    %c0_116 = arith.constant 0 : index
    %c0_117 = arith.constant 0 : index
    %307 = vector.load %arg20[%c0_116, %c0_117] : memref<1x128xf32, #tpu.memory_space<vmem>>, vector<1x128xf32>
    %cst_118 = arith.constant dense<0.000000e+00> : vector<16xf32>
    %308 = vector.multi_reduction <add>, %305, %cst_118 [1] : vector<16x128xf32> to vector<16xf32>
    %309 = vector.shape_cast %308 : vector<16xf32> to vector<16x1xf32>
    %cst_119 = arith.constant 1.280000e+02 : f32
    %310 = vector.broadcast %cst_119 : f32 to vector<16x1xf32>
    %311 = arith.divf %309, %310 : vector<16x1xf32>
    %312 = vector.broadcast %311 : vector<16x1xf32> to vector<16x128xf32>
    %313 = arith.subf %305, %312 : vector<16x128xf32>
    %314 = arith.mulf %313, %313 : vector<16x128xf32>
    %cst_120 = arith.constant dense<0.000000e+00> : vector<16xf32>
    %315 = vector.multi_reduction <add>, %314, %cst_120 [1] : vector<16x128xf32> to vector<16xf32>
    %316 = vector.shape_cast %315 : vector<16xf32> to vector<16x1xf32>
    %cst_121 = arith.constant 1.280000e+02 : f32
    %317 = vector.broadcast %cst_121 : f32 to vector<16x1xf32>
    %318 = arith.divf %316, %317 : vector<16x1xf32>
    %319 = vector.broadcast %311 : vector<16x1xf32> to vector<16x128xf32>
    %320 = arith.subf %305, %319 : vector<16x128xf32>
    %cst_122 = arith.constant 9.99999974E-6 : f32
    %321 = vector.broadcast %cst_122 : f32 to vector<16x1xf32>
    %322 = arith.addf %318, %321 : vector<16x1xf32>
    %323 = math.rsqrt %322 : vector<16x1xf32>
    %324 = vector.broadcast %323 : vector<16x1xf32> to vector<16x128xf32>
    %325 = arith.mulf %320, %324 : vector<16x128xf32>
    %326 = vector.broadcast %306 : vector<1x128xf32> to vector<16x128xf32>
    %327 = arith.mulf %325, %326 : vector<16x128xf32>
    %328 = vector.broadcast %307 : vector<1x128xf32> to vector<16x128xf32>
    %329 = arith.addf %327, %328 : vector<16x128xf32>
    %330 = arith.truncf %329 : vector<16x128xf32> to vector<16x128xbf16>
    %c0_123 = arith.constant 0 : index
    %c0_124 = arith.constant 0 : index
    %331 = vector.load %arg21[%c0_123, %c0_124] : memref<128x512xbf16, #tpu.memory_space<vmem>>, vector<128x512xbf16>
    %cst_125 = arith.constant dense<0.000000e+00> : vector<16x512xf32>
    %332 = tpu.matmul %330, %331, %cst_125 {dimension_numbers = #tpu.dot_dimension_numbers<[1], [0], [0], [1], [0, 0, 1, 1], [], []>} : vector<16x128xbf16>, vector<128x512xbf16>, vector<16x512xf32> -> vector<16x512xf32>
    %c0_126 = arith.constant 0 : index
    %c0_127 = arith.constant 0 : index
    %333 = vector.load %arg22[%c0_126, %c0_127] : memref<1x512xf32, #tpu.memory_space<vmem>>, vector<1x512xf32>
    %334 = vector.broadcast %333 : vector<1x512xf32> to vector<16x512xf32>
    %335 = arith.addf %332, %334 : vector<16x512xf32>
    %cst_128 = arith.constant 0.000000e+00 : f32
    %336 = vector.broadcast %cst_128 : f32 to vector<16x512xf32>
    %337 = arith.maximumf %335, %336 : vector<16x512xf32>
    %338 = arith.truncf %337 : vector<16x512xf32> to vector<16x512xbf16>
    %c0_129 = arith.constant 0 : index
    %c0_130 = arith.constant 0 : index
    %339 = vector.load %arg23[%c0_129, %c0_130] : memref<512x128xbf16, #tpu.memory_space<vmem>>, vector<512x128xbf16>
    %cst_131 = arith.constant dense<0.000000e+00> : vector<16x128xf32>
    %340 = tpu.matmul %338, %339, %cst_131 {dimension_numbers = #tpu.dot_dimension_numbers<[1], [0], [0], [1], [0, 0, 1, 1], [], []>} : vector<16x512xbf16>, vector<512x128xbf16>, vector<16x128xf32> -> vector<16x128xf32>
    %c0_132 = arith.constant 0 : index
    %c0_133 = arith.constant 0 : index
    %341 = vector.load %arg24[%c0_132, %c0_133] : memref<1x128xf32, #tpu.memory_space<vmem>>, vector<1x128xf32>
    %342 = vector.broadcast %341 : vector<1x128xf32> to vector<16x128xf32>
    %343 = arith.addf %340, %342 : vector<16x128xf32>
    %344 = arith.addf %305, %343 : vector<16x128xf32>
    %c0_134 = arith.constant 0 : index
    %c0_135 = arith.constant 0 : index
    %345 = vector.load %arg25[%c0_134, %c0_135] : memref<1x128xf32, #tpu.memory_space<vmem>>, vector<1x128xf32>
    %c0_136 = arith.constant 0 : index
    %c0_137 = arith.constant 0 : index
    %346 = vector.load %arg26[%c0_136, %c0_137] : memref<1x128xf32, #tpu.memory_space<vmem>>, vector<1x128xf32>
    %cst_138 = arith.constant dense<0.000000e+00> : vector<16xf32>
    %347 = vector.multi_reduction <add>, %344, %cst_138 [1] : vector<16x128xf32> to vector<16xf32>
    %348 = vector.shape_cast %347 : vector<16xf32> to vector<16x1xf32>
    %cst_139 = arith.constant 1.280000e+02 : f32
    %349 = vector.broadcast %cst_139 : f32 to vector<16x1xf32>
    %350 = arith.divf %348, %349 : vector<16x1xf32>
    %351 = vector.broadcast %350 : vector<16x1xf32> to vector<16x128xf32>
    %352 = arith.subf %344, %351 : vector<16x128xf32>
    %353 = arith.mulf %352, %352 : vector<16x128xf32>
    %cst_140 = arith.constant dense<0.000000e+00> : vector<16xf32>
    %354 = vector.multi_reduction <add>, %353, %cst_140 [1] : vector<16x128xf32> to vector<16xf32>
    %355 = vector.shape_cast %354 : vector<16xf32> to vector<16x1xf32>
    %cst_141 = arith.constant 1.280000e+02 : f32
    %356 = vector.broadcast %cst_141 : f32 to vector<16x1xf32>
    %357 = arith.divf %355, %356 : vector<16x1xf32>
    %358 = vector.broadcast %350 : vector<16x1xf32> to vector<16x128xf32>
    %359 = arith.subf %344, %358 : vector<16x128xf32>
    %cst_142 = arith.constant 9.99999974E-6 : f32
    %360 = vector.broadcast %cst_142 : f32 to vector<16x1xf32>
    %361 = arith.addf %357, %360 : vector<16x1xf32>
    %362 = math.rsqrt %361 : vector<16x1xf32>
    %363 = vector.broadcast %362 : vector<16x1xf32> to vector<16x128xf32>
    %364 = arith.mulf %359, %363 : vector<16x128xf32>
    %365 = vector.broadcast %345 : vector<1x128xf32> to vector<16x128xf32>
    %366 = arith.mulf %364, %365 : vector<16x128xf32>
    %367 = vector.broadcast %346 : vector<1x128xf32> to vector<16x128xf32>
    %368 = arith.addf %366, %367 : vector<16x128xf32>
    %369 = arith.truncf %368 : vector<16x128xf32> to vector<16x128xbf16>
    %c0_143 = arith.constant 0 : index
    %c0_144 = arith.constant 0 : index
    %370 = vector.load %arg27[%c0_143, %c0_144] : memref<128x128xbf16, #tpu.memory_space<vmem>>, vector<128x128xbf16>
    %cst_145 = arith.constant dense<0.000000e+00> : vector<16x128xf32>
    %371 = tpu.matmul %369, %370, %cst_145 {dimension_numbers = #tpu.dot_dimension_numbers<[1], [0], [0], [1], [0, 0, 1, 1], [], []>} : vector<16x128xbf16>, vector<128x128xbf16>, vector<16x128xf32> -> vector<16x128xf32>
    %c0_146 = arith.constant 0 : index
    %c0_147 = arith.constant 0 : index
    %372 = vector.load %arg28[%c0_146, %c0_147] : memref<1x128xf32, #tpu.memory_space<vmem>>, vector<1x128xf32>
    %373 = vector.broadcast %372 : vector<1x128xf32> to vector<16x128xf32>
    %374 = arith.addf %371, %373 : vector<16x128xf32>
    %c0_148 = arith.constant 0 : index
    %c0_149 = arith.constant 0 : index
    %375 = vector.load %arg29[%c0_148, %c0_149] : memref<16x128xf32, #tpu.memory_space<vmem>>, vector<16x128xf32>
    tpu.vector_store %arg29[%c0_148, %c0_149], %374 {strides = array<i32>} : memref<16x128xf32, #tpu.memory_space<vmem>>, vector<16x128xf32>,
    return
  }
  func.func @transform_0(%arg0: i32) -> (i32, i32) {
    %c0_i32 = arith.constant 0 : i32
    %c0_i32_0 = arith.constant 0 : i32
    %c0_i32_1 = arith.constant 0 : i32
    return %c0_i32, %c0_i32_0 : i32, i32
  }
  func.func @transform_1(%arg0: i32) -> (i32, i32) {
    %c0_i32 = arith.constant 0 : i32
    %c0_i32_0 = arith.constant 0 : i32
    %c0_i32_1 = arith.constant 0 : i32
    return %c0_i32, %c0_i32_0 : i32, i32
  }
  func.func @transform_2(%arg0: i32) -> (i32, i32) {
    %c0_i32 = arith.constant 0 : i32
    %c0_i32_0 = arith.constant 0 : i32
    %c0_i32_1 = arith.constant 0 : i32
    return %c0_i32, %c0_i32_0 : i32, i32
  }
  func.func @transform_3(%arg0: i32) -> (i32, i32) {
    %c0_i32 = arith.constant 0 : i32
    %c0_i32_0 = arith.constant 0 : i32
    %c0_i32_1 = arith.constant 0 : i32
    return %c0_i32, %c0_i32_0 : i32, i32
  }
  func.func @transform_4(%arg0: i32) -> (i32, i32) {
    %c0_i32 = arith.constant 0 : i32
    %c0_i32_0 = arith.constant 0 : i32
    %c0_i32_1 = arith.constant 0 : i32
    return %c0_i32, %c0_i32_0 : i32, i32
  }
  func.func @transform_5(%arg0: i32) -> (i32, i32) {
    %c0_i32 = arith.constant 0 : i32
    %c0_i32_0 = arith.constant 0 : i32
    %c0_i32_1 = arith.constant 0 : i32
    return %c0_i32, %c0_i32_0 : i32, i32
  }
  func.func @transform_6(%arg0: i32) -> (i32, i32) {
    %c0_i32 = arith.constant 0 : i32
    %c0_i32_0 = arith.constant 0 : i32
    %c0_i32_1 = arith.constant 0 : i32
    return %c0_i32, %c0_i32_0 : i32, i32
  }
  func.func @transform_7(%arg0: i32) -> (i32, i32) {
    %c0_i32 = arith.constant 0 : i32
    %c0_i32_0 = arith.constant 0 : i32
    %c0_i32_1 = arith.constant 0 : i32
    return %c0_i32, %c0_i32_0 : i32, i32
  }
  func.func @transform_8(%arg0: i32) -> (i32, i32) {
    %c0_i32 = arith.constant 0 : i32
    %c0_i32_0 = arith.constant 0 : i32
    %c0_i32_1 = arith.constant 0 : i32
    return %c0_i32, %c0_i32_0 : i32, i32
  }
  func.func @transform_9(%arg0: i32) -> (i32, i32) {
    %c0_i32 = arith.constant 0 : i32
    %c0_i32_0 = arith.constant 0 : i32
    %c0_i32_1 = arith.constant 0 : i32
    return %c0_i32, %c0_i32_0 : i32, i32
  }
  func.func @transform_10(%arg0: i32) -> (i32, i32) {
    %c0_i32 = arith.constant 0 : i32
    %c0_i32_0 = arith.constant 0 : i32
    %c0_i32_1 = arith.constant 0 : i32
    return %c0_i32, %c0_i32_0 : i32, i32
  }
  func.func @transform_11(%arg0: i32) -> (i32, i32) {
    %c0_i32 = arith.constant 0 : i32
    %c0_i32_0 = arith.constant 0 : i32
    %c0_i32_1 = arith.constant 0 : i32
    return %c0_i32, %c0_i32_0 : i32, i32
  }
  func.func @transform_12(%arg0: i32) -> (i32, i32) {
    %c0_i32 = arith.constant 0 : i32
    %c0_i32_0 = arith.constant 0 : i32
    %c0_i32_1 = arith.constant 0 : i32
    return %c0_i32, %c0_i32_0 : i32, i32
  }
  func.func @transform_13(%arg0: i32) -> (i32, i32) {
    %c0_i32 = arith.constant 0 : i32
    %c0_i32_0 = arith.constant 0 : i32
    %c0_i32_1 = arith.constant 0 : i32
    return %c0_i32, %c0_i32_0 : i32, i32
  }
  func.func @transform_14(%arg0: i32) -> (i32, i32) {
    %c0_i32 = arith.constant 0 : i32
    %c0_i32_0 = arith.constant 0 : i32
    %c0_i32_1 = arith.constant 0 : i32
    return %c0_i32, %c0_i32_0 : i32, i32
  }
  func.func @transform_15(%arg0: i32) -> (i32, i32) {
    %c0_i32 = arith.constant 0 : i32
    %c0_i32_0 = arith.constant 0 : i32
    %c0_i32_1 = arith.constant 0 : i32
    return %c0_i32, %c0_i32_0 : i32, i32
  }
  func.func @transform_16(%arg0: i32) -> (i32, i32) {
    %c0_i32 = arith.constant 0 : i32
    %c0_i32_0 = arith.constant 0 : i32
    %c0_i32_1 = arith.constant 0 : i32
    return %c0_i32, %c0_i32_0 : i32, i32
  }
  func.func @transform_17(%arg0: i32) -> (i32, i32) {
    %c0_i32 = arith.constant 0 : i32
    %c0_i32_0 = arith.constant 0 : i32
    %c0_i32_1 = arith.constant 0 : i32
    return %c0_i32, %c0_i32_0 : i32, i32
  }
  func.func @transform_18(%arg0: i32) -> (i32, i32) {
    %c0_i32 = arith.constant 0 : i32
    %c0_i32_0 = arith.constant 0 : i32
    %c0_i32_1 = arith.constant 0 : i32
    return %c0_i32, %c0_i32_0 : i32, i32
  }
  func.func @transform_19(%arg0: i32) -> (i32, i32) {
    %c0_i32 = arith.constant 0 : i32
    %c0_i32_0 = arith.constant 0 : i32
    %c0_i32_1 = arith.constant 0 : i32
    return %c0_i32, %c0_i32_0 : i32, i32
  }
  func.func @transform_20(%arg0: i32) -> (i32, i32) {
    %c0_i32 = arith.constant 0 : i32
    %c0_i32_0 = arith.constant 0 : i32
    %c0_i32_1 = arith.constant 0 : i32
    return %c0_i32, %c0_i32_0 : i32, i32
  }
  func.func @transform_21(%arg0: i32) -> (i32, i32) {
    %c0_i32 = arith.constant 0 : i32
    %c0_i32_0 = arith.constant 0 : i32
    %c0_i32_1 = arith.constant 0 : i32
    return %c0_i32, %c0_i32_0 : i32, i32
  }
  func.func @transform_22(%arg0: i32) -> (i32, i32) {
    %c0_i32 = arith.constant 0 : i32
    %c0_i32_0 = arith.constant 0 : i32
    %c0_i32_1 = arith.constant 0 : i32
    return %c0_i32, %c0_i32_0 : i32, i32
  }
  func.func @transform_23(%arg0: i32) -> (i32, i32) {
    %c0_i32 = arith.constant 0 : i32
    %c0_i32_0 = arith.constant 0 : i32
    %c0_i32_1 = arith.constant 0 : i32
    return %c0_i32, %c0_i32_0 : i32, i32
  }
  func.func @transform_24(%arg0: i32) -> (i32, i32) {
    %c0_i32 = arith.constant 0 : i32
    %c0_i32_0 = arith.constant 0 : i32
    %c0_i32_1 = arith.constant 0 : i32
    return %c0_i32, %c0_i32_0 : i32, i32
  }
  func.func @transform_25(%arg0: i32) -> (i32, i32) {
    %c0_i32 = arith.constant 0 : i32
    %c0_i32_0 = arith.constant 0 : i32
    %c0_i32_1 = arith.constant 0 : i32
    return %c0_i32, %c0_i32_0 : i32, i32
  }
  func.func @transform_26(%arg0: i32) -> (i32, i32) {
    %c0_i32 = arith.constant 0 : i32
    %c0_i32_0 = arith.constant 0 : i32
    %c0_i32_1 = arith.constant 0 : i32
    return %c0_i32, %c0_i32_0 : i32, i32
  }
  func.func @transform_27(%arg0: i32) -> (i32, i32) {
    %c0_i32 = arith.constant 0 : i32
    %c0_i32_0 = arith.constant 0 : i32
    %c0_i32_1 = arith.constant 0 : i32
    return %c0_i32, %c0_i32_0 : i32, i32
  }
  func.func @transform_28(%arg0: i32) -> (i32, i32) {
    %c0_i32 = arith.constant 0 : i32
    %c0_i32_0 = arith.constant 0 : i32
    %c0_i32_1 = arith.constant 0 : i32
    return %c0_i32, %c0_i32_0 : i32, i32
  }
}

</mosaic_0001>

<llo_original>
// kernel: transformer_language_model.1
$region0: #{transformer_language_model.1}
  #allocation0 [shape = 'u32[]', space=smem, size = 0x4, offset = 0x4, fixed_abs, tag = 'smem constant byte address 0x4 - core index']
  #allocation1 [shape = 'u32[144,128]{1,0:T(1,128)}', space=vmem, size = 0x12000, scoped, tag = 'internal scratch']
  %s0 = inlined_call_operand.vmem [shape: f32[16,128], index: 0, kind: input, shape index: {}]
  %s1 = inlined_call_operand.vmem [shape: f32[8,128], index: 1, kind: input, shape index: {}]
  %s2 = inlined_call_operand.vmem [shape: f32[1,128], index: 2, kind: input, shape index: {}]
  %s3 = inlined_call_operand.vmem [shape: f32[1,128], index: 3, kind: input, shape index: {}]
  %s4 = inlined_call_operand.vmem [shape: bf16[128,384], index: 4, kind: input, shape index: {}]
  %s5 = inlined_call_operand.hbm [shape: bf16[128,128], index: 5, kind: input, shape index: {}]
  %s6 = inlined_call_operand.vmem [shape: f32[1,128], index: 6, kind: input, shape index: {}]
  %s7 = inlined_call_operand.vmem [shape: f32[1,128], index: 7, kind: input, shape index: {}]
  %s8 = inlined_call_operand.vmem [shape: f32[1,128], index: 8, kind: input, shape index: {}]
  %s9 = inlined_call_operand.hbm [shape: bf16[128,512], index: 9, kind: input, shape index: {}]
  %s10 = inlined_call_operand.vmem [shape: f32[1,512], index: 10, kind: input, shape index: {}]
  %s11 = inlined_call_operand.hbm [shape: bf16[512,128], index: 11, kind: input, shape index: {}]
  %s12 = inlined_call_operand.vmem [shape: f32[1,128], index: 12, kind: input, shape index: {}]
  %s13 = inlined_call_operand.vmem [shape: f32[1,128], index: 13, kind: input, shape index: {}]
  %s14 = inlined_call_operand.vmem [shape: f32[1,128], index: 14, kind: input, shape index: {}]
  %s15 = inlined_call_operand.hbm [shape: bf16[128,384], index: 15, kind: input, shape index: {}]
  %s16 = inlined_call_operand.hbm [shape: bf16[128,128], index: 16, kind: input, shape index: {}]
  %s17 = inlined_call_operand.vmem [shape: f32[1,128], index: 17, kind: input, shape index: {}]
  %s18 = inlined_call_operand.vmem [shape: f32[1,128], index: 18, kind: input, shape index: {}]
  %s19 = inlined_call_operand.vmem [shape: f32[1,128], index: 19, kind: input, shape index: {}]
  %s20 = inlined_call_operand.hbm [shape: bf16[128,512], index: 20, kind: input, shape index: {}]
  %s21 = inlined_call_operand.vmem [shape: f32[1,512], index: 21, kind: input, shape index: {}]
  %s22 = inlined_call_operand.hbm [shape: bf16[512,128], index: 22, kind: input, shape index: {}]
  %s23 = inlined_call_operand.hbm [shape: f32[1,128], index: 23, kind: input, shape index: {}]
  %s24 = inlined_call_operand.vmem [shape: f32[1,128], index: 24, kind: input, shape index: {}]
  %s25 = inlined_call_operand.vmem [shape: f32[1,128], index: 25, kind: input, shape index: {}]
  %s26 = inlined_call_operand.hbm [shape: bf16[128,128], index: 26, kind: input, shape index: {}]
  %s27 = inlined_call_operand.hbm [shape: f32[1,128], index: 27, kind: input, shape index: {}]
  %s28 = inlined_call_operand.hbm [shape: f32[16,128], index: 28, kind: output, shape index: {}]
  %s29 = sld [smem:[#allocation0]]
  $region162: #{transformer_language_model.1} parent=0
    _
  %s31 = ssub.s32 1, %s29
  %s32 = scalar_select 0, %s31, %s29
  $region1: #{transformer_language_model.1} parent=0
    #allocation2 [shape = 'u8[32768]{0}', space=vmem, size = 0x8000, scoped, tag = 'input window, operand 5, single buffered']
    #allocation3 [shape = 's32[1]{0}', space=sflag, size = 0x4, scoped, tag = 'scoped memory for transformer_language_model.1']
    #allocation4 [shape = 's32[1]{0}', space=sflag, size = 0x4, scoped, tag = 'scoped memory for transformer_language_model.1']
    #allocation5 [shape = 'u8[131072]{0}', space=vmem, size = 0x20000, scoped, tag = 'input window, operand 9, single buffered']
    #allocation6 [shape = 's32[1]{0}', space=sflag, size = 0x4, scoped, tag = 'scoped memory for transformer_language_model.1']
    #allocation7 [shape = 'u8[131072]{0}', space=vmem, size = 0x20000, scoped, tag = 'input window, operand 11, single buffered']
    #allocation8 [shape = 'u8[98304]{0}', space=vmem, size = 0x18000, scoped, tag = 'input window, operand 15, single buffered']
    #allocation9 [shape = 's32[1]{0}', space=sflag, size = 0x4, scoped, tag = 'scoped memory for transformer_language_model.1']
    #allocation10 [shape = 'u8[32768]{0}', space=vmem, size = 0x8000, scoped, tag = 'input window, operand 16, single buffered']
    #allocation11 [shape = 'u8[131072]{0}', space=vmem, size = 0x20000, scoped, tag = 'input window, operand 20, single buffered']
    #allocation12 [shape = 's32[1]{0}', space=sflag, size = 0x4, scoped, tag = 'scoped memory for transformer_language_model.1']
    #allocation13 [shape = 'u8[131072]{0}', space=vmem, size = 0x20000, scoped, tag = 'input window, operand 22, single buffered']
    #allocation14 [shape = 'u8[512]{0}', space=vmem, size = 0x400, scoped, tag = 'input window, operand 23, single buffered']
    #allocation15 [shape = 's32[1]{0}', space=sflag, size = 0x4, scoped, tag = 'scoped memory for transformer_language_model.1']
    #allocation16 [shape = 'u8[32768]{0}', space=vmem, size = 0x8000, scoped, tag = 'input window, operand 26, single buffered']
    #allocation17 [shape = 'u8[512]{0}', space=vmem, size = 0x400, scoped, tag = 'input window, operand 27, single buffered']
    #allocation18 [shape = 's32[1]{0}', space=sflag, size = 0x4, scoped, tag = 'scoped memory for transformer_language_model.1']
    #allocation19 [shape = 'u8[8192]{0}', space=vmem, size = 0x2000, scoped, tag = 'output window, operand 0, single buffered']
    %33 = vsyncpa [#allocation3], 0
    %34 = vsyncpa [#allocation6], 0
    %35 = vsyncpa [#allocation9], 0
    %36 = vsyncpa [#allocation12], 0
    %37 = vsyncpa [#allocation15], 0
    %38 = vsyncpa [#allocation18], 0
    %39 = vsyncpa [#allocation4], 0
    // Predicated region
    $region2: #{transformer_language_model.1} parent=1 // pred_check
      _
    $region3: #{transformer_language_model.1} parent=1 // pred_check_branch
      %41 = sbr.rel (0) target = $region5
    $region4: #{transformer_language_model.1} parent=1 // pred_region
      _
    $region5: #{transformer_language_model.1} parent=1 // pred_fallthru
      _
    // Predicated region
    $region6: #{transformer_language_model.1} parent=1 // pred_check
      _
    $region7: #{transformer_language_model.1} parent=1 // pred_check_branch
      %43 = sbr.rel (0) target = $region9
    $region8: #{transformer_language_model.1} parent=1 // pred_region
      _
    $region9: #{transformer_language_model.1} parent=1 // pred_fallthru
      _
    // Predicated region
    $region10: #{transformer_language_model.1} parent=1 // pred_check
      _
    $region11: #{transformer_language_model.1} parent=1 // pred_check_branch
      %45 = sbr.rel (0) target = $region13
    $region12: #{transformer_language_model.1} parent=1 // pred_region
      _
    $region13: #{transformer_language_model.1} parent=1 // pred_fallthru
      _
    // Predicated region
    $region14: #{transformer_language_model.1} parent=1 // pred_check
      _
    $region15: #{transformer_language_model.1} parent=1 // pred_check_branch
      %47 = sbr.rel (0) target = $region17
    $region16: #{transformer_language_model.1} parent=1 // pred_region
      _
    $region17: #{transformer_language_model.1} parent=1 // pred_fallthru
      _
    // Predicated region
    $region18: #{transformer_language_model.1} parent=1 // pred_check
      _
    $region19: #{transformer_language_model.1} parent=1 // pred_check_branch
      %49 = sbr.rel (0) target = $region21
    $region20: #{transformer_language_model.1} parent=1 // pred_region
      _
    $region21: #{transformer_language_model.1} parent=1 // pred_fallthru
      _
    // Predicated region
    $region22: #{transformer_language_model.1} parent=1 // pred_check
      _
    $region23: #{transformer_language_model.1} parent=1 // pred_check_branch
      %51 = sbr.rel (0) target = $region25
    $region24: #{transformer_language_model.1} parent=1 // pred_region
      %s53 = ssub.s32 1024, 1024
      %54 = vsyncadd [#allocation3], %s53
      %s55 = sshll.u32 [#allocation2], 4
      %s56 = int_to_ptr.vmem [resolvable:$true] %s55
      %61 = dma.hbm_to_vmem [thread:$0]  %s5, 1024, %s56, [#allocation3], 64, 64, 4
    $region25: #{transformer_language_model.1} parent=1 // pred_fallthru
      _
    // Predicated region
    $region26: #{transformer_language_model.1} parent=1 // pred_check
      _
    $region27: #{transformer_language_model.1} parent=1 // pred_check_branch
      %63 = sbr.rel (0) target = $region29
    $region28: #{transformer_language_model.1} parent=1 // pred_region
      _
    $region29: #{transformer_language_model.1} parent=1 // pred_fallthru
      _
    // Predicated region
    $region30: #{transformer_language_model.1} parent=1 // pred_check
      _
    $region31: #{transformer_language_model.1} parent=1 // pred_check_branch
      %65 = sbr.rel (0) target = $region33
    $region32: #{transformer_language_model.1} parent=1 // pred_region
      _
    $region33: #{transformer_language_model.1} parent=1 // pred_fallthru
      _
    // Predicated region
    $region34: #{transformer_language_model.1} parent=1 // pred_check
      _
    $region35: #{transformer_language_model.1} parent=1 // pred_check_branch
      %67 = sbr.rel (0) target = $region37
    $region36: #{transformer_language_model.1} parent=1 // pred_region
      _
    $region37: #{transformer_language_model.1} parent=1 // pred_fallthru
      _
    // Predicated region
    $region38: #{transformer_language_model.1} parent=1 // pred_check
      _
    $region39: #{transformer_language_model.1} parent=1 // pred_check_branch
      %69 = sbr.rel (0) target = $region41
    $region40: #{transformer_language_model.1} parent=1 // pred_region
      %s71 = ssub.s32 4096, 4096
      %72 = vsyncadd [#allocation6], %s71
      %s73 = sshll.u32 [#allocation5], 4
      %s74 = int_to_ptr.vmem [resolvable:$true] %s73
      %79 = dma.hbm_to_vmem [thread:$0]  %s9, 4096, %s74, [#allocation6], 256, 256, 16
    $region41: #{transformer_language_model.1} parent=1 // pred_fallthru
      _
    // Predicated region
    $region42: #{transformer_language_model.1} parent=1 // pred_check
      _
    $region43: #{transformer_language_model.1} parent=1 // pred_check_branch
      %81 = sbr.rel (0) target = $region45
    $region44: #{transformer_language_model.1} parent=1 // pred_region
      _
    $region45: #{transformer_language_model.1} parent=1 // pred_fallthru
      _
    // Predicated region
    $region46: #{transformer_language_model.1} parent=1 // pred_check
      _
    $region47: #{transformer_language_model.1} parent=1 // pred_check_branch
      %83 = sbr.rel (0) target = $region49
    $region48: #{transformer_language_model.1} parent=1 // pred_region
      %s85 = ssub.s32 4096, 4096
      %86 = vsyncadd [#allocation6], %s85
      %s87 = sshll.u32 [#allocation7], 4
      %s88 = int_to_ptr.vmem [resolvable:$true] %s87
      %93 = dma.hbm_to_vmem [thread:$0]  %s11, 4096, %s88, [#allocation6], 64, 64, 4
    $region49: #{transformer_language_model.1} parent=1 // pred_fallthru
      _
    // Predicated region
    $region50: #{transformer_language_model.1} parent=1 // pred_check
      _
    $region51: #{transformer_language_model.1} parent=1 // pred_check_branch
      %95 = sbr.rel (0) target = $region53
    $region52: #{transformer_language_model.1} parent=1 // pred_region
      _
    $region53: #{transformer_language_model.1} parent=1 // pred_fallthru
      _
    // Predicated region
    $region54: #{transformer_language_model.1} parent=1 // pred_check
      _
    $region55: #{transformer_language_model.1} parent=1 // pred_check_branch
      %97 = sbr.rel (0) target = $region57
    $region56: #{transformer_language_model.1} parent=1 // pred_region
      _
    $region57: #{transformer_language_model.1} parent=1 // pred_fallthru
      _
    // Predicated region
    $region58: #{transformer_language_model.1} parent=1 // pred_check
      _
    $region59: #{transformer_language_model.1} parent=1 // pred_check_branch
      %99 = sbr.rel (0) target = $region61
    $region60: #{transformer_language_model.1} parent=1 // pred_region
      _
    $region61: #{transformer_language_model.1} parent=1 // pred_fallthru
      _
    // Predicated region
    $region62: #{transformer_language_model.1} parent=1 // pred_check
      _
    $region63: #{transformer_language_model.1} parent=1 // pred_check_branch
      %101 = sbr.rel (0) target = $region65
    $region64: #{transformer_language_model.1} parent=1 // pred_region
      %s103 = ssub.s32 3072, 3072
      %104 = vsyncadd [#allocation9], %s103
      %s105 = sshll.u32 [#allocation8], 4
      %s106 = int_to_ptr.vmem [resolvable:$true] %s105
      %111 = dma.hbm_to_vmem [thread:$0]  %s15, 3072, %s106, [#allocation9], 192, 192, 12
    $region65: #{transformer_language_model.1} parent=1 // pred_fallthru
      _
    // Predicated region
    $region66: #{transformer_language_model.1} parent=1 // pred_check
      _
    $region67: #{transformer_language_model.1} parent=1 // pred_check_branch
      %113 = sbr.rel (0) target = $region69
    $region68: #{transformer_language_model.1} parent=1 // pred_region
      %s115 = ssub.s32 1024, 1024
      %116 = vsyncadd [#allocation9], %s115
      %s117 = sshll.u32 [#allocation10], 4
      %s118 = int_to_ptr.vmem [resolvable:$true] %s117
      %123 = dma.hbm_to_vmem [thread:$0]  %s16, 1024, %s118, [#allocation9], 64, 64, 4
    $region69: #{transformer_language_model.1} parent=1 // pred_fallthru
      _
    // Predicated region
    $region70: #{transformer_language_model.1} parent=1 // pred_check
      _
    $region71: #{transformer_language_model.1} parent=1 // pred_check_branch
      %125 = sbr.rel (0) target = $region73
    $region72: #{transformer_language_model.1} parent=1 // pred_region
      _
    $region73: #{transformer_language_model.1} parent=1 // pred_fallthru
      _
    // Predicated region
    $region74: #{transformer_language_model.1} parent=1 // pred_check
      _
    $region75: #{transformer_language_model.1} parent=1 // pred_check_branch
      %127 = sbr.rel (0) target = $region77
    $region76: #{transformer_language_model.1} parent=1 // pred_region
      _
    $region77: #{transformer_language_model.1} parent=1 // pred_fallthru
      _
    // Predicated region
    $region78: #{transformer_language_model.1} parent=1 // pred_check
      _
    $region79: #{transformer_language_model.1} parent=1 // pred_check_branch
      %129 = sbr.rel (0) target = $region81
    $region80: #{transformer_language_model.1} parent=1 // pred_region
      _
    $region81: #{transformer_language_model.1} parent=1 // pred_fallthru
      _
    // Predicated region
    $region82: #{transformer_language_model.1} parent=1 // pred_check
      _
    $region83: #{transformer_language_model.1} parent=1 // pred_check_branch
      %131 = sbr.rel (0) target = $region85
    $region84: #{transformer_language_model.1} parent=1 // pred_region
      %s133 = ssub.s32 4096, 4096
      %134 = vsyncadd [#allocation12], %s133
      %s135 = sshll.u32 [#allocation11], 4
      %s136 = int_to_ptr.vmem [resolvable:$true] %s135
      %141 = dma.hbm_to_vmem [thread:$0]  %s20, 4096, %s136, [#allocation12], 256, 256, 16
    $region85: #{transformer_language_model.1} parent=1 // pred_fallthru
      _
    // Predicated region
    $region86: #{transformer_language_model.1} parent=1 // pred_check
      _
    $region87: #{transformer_language_model.1} parent=1 // pred_check_branch
      %143 = sbr.rel (0) target = $region89
    $region88: #{transformer_language_model.1} parent=1 // pred_region
      _
    $region89: #{transformer_language_model.1} parent=1 // pred_fallthru
      _
    // Predicated region
    $region90: #{transformer_language_model.1} parent=1 // pred_check
      _
    $region91: #{transformer_language_model.1} parent=1 // pred_check_branch
      %145 = sbr.rel (0) target = $region93
    $region92: #{transformer_language_model.1} parent=1 // pred_region
      %s147 = ssub.s32 4096, 4096
      %148 = vsyncadd [#allocation12], %s147
      %s149 = sshll.u32 [#allocation13], 4
      %s150 = int_to_ptr.vmem [resolvable:$true] %s149
      %155 = dma.hbm_to_vmem [thread:$0]  %s22, 4096, %s150, [#allocation12], 64, 64, 4
    $region93: #{transformer_language_model.1} parent=1 // pred_fallthru
      _
    // Predicated region
    $region94: #{transformer_language_model.1} parent=1 // pred_check
      _
    $region95: #{transformer_language_model.1} parent=1 // pred_check_branch
      %157 = sbr.rel (0) target = $region97
    $region96: #{transformer_language_model.1} parent=1 // pred_region
      %s159 = ssub.s32 16, 16
      %160 = vsyncadd [#allocation15], %s159
      %s162 = sshll.u32 [#allocation14], 4
      %s163 = int_to_ptr.vmem [resolvable:$true] %s162
      %165 = dma.hbm_to_vmem [thread:$0]  %s23, 16, %s163, [#allocation15]
    $region97: #{transformer_language_model.1} parent=1 // pred_fallthru
      _
    // Predicated region
    $region98: #{transformer_language_model.1} parent=1 // pred_check
      _
    $region99: #{transformer_language_model.1} parent=1 // pred_check_branch
      %167 = sbr.rel (0) target = $region101
    $region100: #{transformer_language_model.1} parent=1 // pred_region
      _
    $region101: #{transformer_language_model.1} parent=1 // pred_fallthru
      _
    // Predicated region
    $region102: #{transformer_language_model.1} parent=1 // pred_check
      _
    $region103: #{transformer_language_model.1} parent=1 // pred_check_branch
      %169 = sbr.rel (0) target = $region105
    $region104: #{transformer_language_model.1} parent=1 // pred_region
      _
    $region105: #{transformer_language_model.1} parent=1 // pred_fallthru
      _
    // Predicated region
    $region106: #{transformer_language_model.1} parent=1 // pred_check
      _
    $region107: #{transformer_language_model.1} parent=1 // pred_check_branch
      %171 = sbr.rel (0) target = $region109
    $region108: #{transformer_language_model.1} parent=1 // pred_region
      %s173 = ssub.s32 1024, 1024
      %174 = vsyncadd [#allocation15], %s173
      %s175 = sshll.u32 [#allocation16], 4
      %s176 = int_to_ptr.vmem [resolvable:$true] %s175
      %181 = dma.hbm_to_vmem [thread:$0]  %s26, 1024, %s176, [#allocation15], 64, 64, 4
    $region109: #{transformer_language_model.1} parent=1 // pred_fallthru
      _
    // Predicated region
    $region110: #{transformer_language_model.1} parent=1 // pred_check
      _
    $region111: #{transformer_language_model.1} parent=1 // pred_check_branch
      %183 = sbr.rel (0) target = $region113
    $region112: #{transformer_language_model.1} parent=1 // pred_region
      %s185 = ssub.s32 16, 16
      %186 = vsyncadd [#allocation18], %s185
      %s188 = sshll.u32 [#allocation17], 4
      %s189 = int_to_ptr.vmem [resolvable:$true] %s188
      %191 = dma.hbm_to_vmem [thread:$0]  %s27, 16, %s189, [#allocation18]
    $region113: #{transformer_language_model.1} parent=1 // pred_fallthru
      _
    // Predicated region
    $region114: #{transformer_language_model.1} parent=1 // pred_check
      _
    $region115: #{transformer_language_model.1} parent=1 // pred_check_branch
      %193 = sbr.rel (0) target = $region117
    $region116: #{transformer_language_model.1} parent=1 // pred_region
      %194 = dma.done [#allocation3], 1024
    $region117: #{transformer_language_model.1} parent=1 // pred_fallthru
      _
    // Predicated region
    $region118: #{transformer_language_model.1} parent=1 // pred_check
      _
    $region119: #{transformer_language_model.1} parent=1 // pred_check_branch
      %196 = sbr.rel (0) target = $region121
    $region120: #{transformer_language_model.1} parent=1 // pred_region
      %197 = dma.done [#allocation6], 4096
    $region121: #{transformer_language_model.1} parent=1 // pred_fallthru
      _
    // Predicated region
    $region122: #{transformer_language_model.1} parent=1 // pred_check
      _
    $region123: #{transformer_language_model.1} parent=1 // pred_check_branch
      %199 = sbr.rel (0) target = $region125
    $region124: #{transformer_language_model.1} parent=1 // pred_region
      %200 = dma.done [#allocation6], 4096
    $region125: #{transformer_language_model.1} parent=1 // pred_fallthru
      _
    // Predicated region
    $region126: #{transformer_language_model.1} parent=1 // pred_check
      _
    $region127: #{transformer_language_model.1} parent=1 // pred_check_branch
      %202 = sbr.rel (0) target = $region129
    $region128: #{transformer_language_model.1} parent=1 // pred_region
      %203 = dma.done [#allocation9], 3072
    $region129: #{transformer_language_model.1} parent=1 // pred_fallthru
      _
    // Predicated region
    $region130: #{transformer_language_model.1} parent=1 // pred_check
      _
    $region131: #{transformer_language_model.1} parent=1 // pred_check_branch
      %205 = sbr.rel (0) target = $region133
    $region132: #{transformer_language_model.1} parent=1 // pred_region
      %206 = dma.done [#allocation9], 1024
    $region133: #{transformer_language_model.1} parent=1 // pred_fallthru
      _
    // Predicated region
    $region134: #{transformer_language_model.1} parent=1 // pred_check
      _
    $region135: #{transformer_language_model.1} parent=1 // pred_check_branch
      %208 = sbr.rel (0) target = $region137
    $region136: #{transformer_language_model.1} parent=1 // pred_region
      %209 = dma.done [#allocation12], 4096
    $region137: #{transformer_language_model.1} parent=1 // pred_fallthru
      _
    // Predicated region
    $region138: #{transformer_language_model.1} parent=1 // pred_check
      _
    $region139: #{transformer_language_model.1} parent=1 // pred_check_branch
      %211 = sbr.rel (0) target = $region141
    $region140: #{transformer_language_model.1} parent=1 // pred_region
      %212 = dma.done [#allocation12], 4096
    $region141: #{transformer_language_model.1} parent=1 // pred_fallthru
      _
    // Predicated region
    $region142: #{transformer_language_model.1} parent=1 // pred_check
      _
    $region143: #{transformer_language_model.1} parent=1 // pred_check_branch
      %214 = sbr.rel (0) target = $region145
    $region144: #{transformer_language_model.1} parent=1 // pred_region
      %215 = dma.done [#allocation15], 16
    $region145: #{transformer_language_model.1} parent=1 // pred_fallthru
      _
    // Predicated region
    $region146: #{transformer_language_model.1} parent=1 // pred_check
      _
    $region147: #{transformer_language_model.1} parent=1 // pred_check_branch
      %217 = sbr.rel (0) target = $region149
    $region148: #{transformer_language_model.1} parent=1 // pred_region
      %218 = dma.done [#allocation15], 1024
    $region149: #{transformer_language_model.1} parent=1 // pred_fallthru
      _
    // Predicated region
    $region150: #{transformer_language_model.1} parent=1 // pred_check
      _
    $region151: #{transformer_language_model.1} parent=1 // pred_check_branch
      %220 = sbr.rel (0) target = $region153
    $region152: #{transformer_language_model.1} parent=1 // pred_region
      %221 = dma.done [#allocation18], 16
    $region153: #{transformer_language_model.1} parent=1 // pred_fallthru
      _
    %v223 = vld [vmem:[%s1] sm:$0xff]
    %v224 = vld [vmem:[%s0] sm:$0xff]
    %v225 = vld [vmem:[%s0 + $0x8] sm:$0xff]
    %v226 = vadd.f32 %v224, %v223
    %v227 = vadd.f32 %v225, %v223
    %v228 = vlaneseq
    %v229 = vshrl.u32 %v228, 7
    %v230 = vlaneseq
    %v231 = vand.u32 %v230, 127
    %vm232 = vcmp.ge.s32.totalorder %v229, %v231
    %v233 = vld [vmem:[%s2] sm:$0x1]
    %v234 = vld [vmem:[%s3] sm:$0x1]
    %235 = vadd.xlane.f32.xlu0 %v226
    %v236 = vpop.xlane.xlu0 %235
    %237 = vadd.xlane.f32.xlu0 %v227
    %v238 = vpop.xlane.xlu0 %237
    %v239 = vrcp.pop 128.0
    %v240 = vmul.f32 %v236, %v239
    %v241 = vmul.f32 %v238, %v239
    %v242 = vsub.f32 %v226, %v240
    %v243 = vsub.f32 %v227, %v241
    %v244 = vmul.f32 %v242, %v242
    %v245 = vmul.f32 %v243, %v243
    %246 = vadd.xlane.f32.xlu0 %v244
    %v247 = vpop.xlane.xlu0 %246
    %248 = vadd.xlane.f32.xlu0 %v245
    %v249 = vpop.xlane.xlu0 %248
    %v250 = vmul.f32 %v247, %v239
    %v251 = vmul.f32 %v249, %v239
    %v252 = vadd.f32 %v250, 1e-05
    %v253 = vadd.f32 %v251, 1e-05
    %v254 = vrsqrt.pop %v252
    %v255 = vrsqrt.pop %v253
    %v256 = vmul.f32 %v242, %v254
    %v257 = vmul.f32 %v243, %v255
    %v259 = vlaneseq
    %v260 = vshrl.u32 %v259, 7
    %v261 = vsub.s32 0, %v260
    %v262 = vrot.slane %v233, %v261
    %v264 = vmul.f32 %v256, %v262
    %v265 = vmul.f32 %v257, %v262
    %v267 = vlaneseq
    %v268 = vshrl.u32 %v267, 7
    %v269 = vsub.s32 0, %v268
    %v270 = vrot.slane %v234, %v269
    %v272 = vadd.f32 %v264, %v270
    %v273 = vadd.f32 %v265, %v270
    %v274 = vpack.c.bf16 %v273, %v272
    %v275 = vld [vmem:[%s4] sm:$0xff]
    %v276 = vld [vmem:[%s4 + $0x8] sm:$0xf]
    %v277 = vld [vmem:[%s4 + $0xc] sm:$0xff]
    %v278 = vld [vmem:[%s4 + $0x14] sm:$0xf]
    %v279 = vld [vmem:[%s4 + $0x18] sm:$0xff]
    %v280 = vld [vmem:[%s4 + $0x20] sm:$0xf]
    %v281 = vld [vmem:[%s4 + $0x24] sm:$0xff]
    %v282 = vld [vmem:[%s4 + $0x2c] sm:$0xf]
    %v283 = vld [vmem:[%s4 + $0x30] sm:$0xff]
    %v284 = vld [vmem:[%s4 + $0x38] sm:$0xf]
    %v285 = vld [vmem:[%s4 + $0x3c] sm:$0xff]
    %v286 = vld [vmem:[%s4 + $0x44] sm:$0xf]
    %v287 = vld [vmem:[%s4 + $0x48] sm:$0xff]
    %v288 = vld [vmem:[%s4 + $0x50] sm:$0xf]
    %v289 = vld [vmem:[%s4 + $0x54] sm:$0xff]
    %v290 = vld [vmem:[%s4 + $0x5c] sm:$0xf]
    %v291 = vld [vmem:[%s4 + $0x60] sm:$0xff]
    %v292 = vld [vmem:[%s4 + $0x68] sm:$0xf]
    %v293 = vld [vmem:[%s4 + $0x6c] sm:$0xff]
    %v294 = vld [vmem:[%s4 + $0x74] sm:$0xf]
    %v295 = vld [vmem:[%s4 + $0x78] sm:$0xff]
    %v296 = vld [vmem:[%s4 + $0x80] sm:$0xf]
    %v297 = vld [vmem:[%s4 + $0x84] sm:$0xff]
    %v298 = vld [vmem:[%s4 + $0x8c] sm:$0xf]
    %v299 = vld [vmem:[%s4 + $0x90] sm:$0xff]
    %v300 = vld [vmem:[%s4 + $0x98] sm:$0xf]
    %v301 = vld [vmem:[%s4 + $0x9c] sm:$0xff]
    %v302 = vld [vmem:[%s4 + $0xa4] sm:$0xf]
    %v303 = vld [vmem:[%s4 + $0xa8] sm:$0xff]
    %v304 = vld [vmem:[%s4 + $0xb0] sm:$0xf]
    %v305 = vld [vmem:[%s4 + $0xb4] sm:$0xff]
    %v306 = vld [vmem:[%s4 + $0xbc] sm:$0xf]
    %v339 = vunpack.c.l.b16 %v275
    %v340 = vunpack.c.h.b16 %v275
    %v341 = vunpack.c.l.b16 %v276
    %v342 = vunpack.c.l.b16 %v277
    %v343 = vunpack.c.h.b16 %v277
    %v344 = vunpack.c.l.b16 %v278
    %v345 = vunpack.c.l.b16 %v279
    %v346 = vunpack.c.h.b16 %v279
    %v347 = vunpack.c.l.b16 %v280
    %v348 = vunpack.c.l.b16 %v281
    %v349 = vunpack.c.h.b16 %v281
    %v350 = vunpack.c.l.b16 %v282
    %v351 = vunpack.c.l.b16 %v283
    %v352 = vunpack.c.h.b16 %v283
    %v353 = vunpack.c.l.b16 %v284
    %v354 = vunpack.c.l.b16 %v285
    %v355 = vunpack.c.h.b16 %v285
    %v356 = vunpack.c.l.b16 %v286
    %v357 = vunpack.c.l.b16 %v287
    %v358 = vunpack.c.h.b16 %v287
    %v359 = vunpack.c.l.b16 %v288
    %v360 = vunpack.c.l.b16 %v289
    %v361 = vunpack.c.h.b16 %v289
    %v362 = vunpack.c.l.b16 %v290
    %v363 = vunpack.c.l.b16 %v291
    %v364 = vunpack.c.h.b16 %v291
    %v365 = vunpack.c.l.b16 %v292
    %v366 = vunpack.c.l.b16 %v293
    %v367 = vunpack.c.h.b16 %v293
    %v368 = vunpack.c.l.b16 %v294
    %v369 = vunpack.c.l.b16 %v295
    %v370 = vunpack.c.h.b16 %v295
    %v371 = vunpack.c.l.b16 %v296
    %v372 = vunpack.c.l.b16 %v297
    %v373 = vunpack.c.h.b16 %v297
    %v374 = vunpack.c.l.b16 %v298
    %v375 = vunpack.c.l.b16 %v299
    %v376 = vunpack.c.h.b16 %v299
    %v377 = vunpack.c.l.b16 %v300
    %v378 = vunpack.c.l.b16 %v301
    %v379 = vunpack.c.h.b16 %v301
    %v380 = vunpack.c.l.b16 %v302
    %v381 = vunpack.c.l.b16 %v303
    %v382 = vunpack.c.h.b16 %v303
    %v383 = vunpack.c.l.b16 %v304
    %v384 = vunpack.c.l.b16 %v305
    %v385 = vunpack.c.h.b16 %v305
    %v386 = vunpack.c.l.b16 %v306
    %v387 = vpack.c.b16 %v342, %v339
    %v388 = vpack.c.b16 %v343, %v340
    %v389 = vpack.c.b16 %v344, %v341
    %v390 = vpack.c.b16 %v348, %v345
    %v391 = vpack.c.b16 %v349, %v346
    %v392 = vpack.c.b16 %v350, %v347
    %v393 = vpack.c.b16 %v354, %v351
    %v394 = vpack.c.b16 %v355, %v352
    %v395 = vpack.c.b16 %v356, %v353
    %v396 = vpack.c.b16 %v360, %v357
    %v397 = vpack.c.b16 %v361, %v358
    %v398 = vpack.c.b16 %v362, %v359
    %v399 = vpack.c.b16 %v366, %v363
    %v400 = vpack.c.b16 %v367, %v364
    %v401 = vpack.c.b16 %v368, %v365
    %v402 = vpack.c.b16 %v372, %v369
    %v403 = vpack.c.b16 %v373, %v370
    %v404 = vpack.c.b16 %v374, %v371
    %v405 = vpack.c.b16 %v378, %v375
    %v406 = vpack.c.b16 %v379, %v376
    %v407 = vpack.c.b16 %v380, %v377
    %v408 = vpack.c.b16 %v384, %v381
    %v409 = vpack.c.b16 %v385, %v382
    %v410 = vpack.c.b16 %v386, %v383
    %435 = vmatprep.subr.bf16.mxu0 %v409
    %436 = vmatpush1.bf16.msra.mxu0 %v408
    %437 = vmatprep.subr.bf16.mxu0 %v406
    %438 = vmatpush1.bf16.msra.mxu0 %v405
    %439 = vmatprep.subr.bf16.mxu0 %v403
    %440 = vmatpush1.bf16.msra.mxu0 %v402
    %441 = vmatprep.subr.bf16.mxu0 %v400
    %442 = vmatpush1.bf16.msra.mxu0 %v399
    %443 = vmatprep.subr.bf16.mxu0 %v397
    %444 = vmatpush1.bf16.msra.mxu0 %v396
    %445 = vmatprep.subr.bf16.mxu0 %v394
    %446 = vmatpush1.bf16.msra.mxu0 %v393
    %447 = vmatprep.subr.bf16.mxu0 %v391
    %448 = vmatpush1.bf16.msra.mxu0 %v390
    %449 = vmatprep.subr.bf16.mxu0 %v388
    %450 = vmatpush1.bf16.msra.mxu0 %v387
    %451 = vmatprep.subr.bf16.mxu0 0
    %452 = vmatpush2.bf16.msra.mxu0 0
    %453 = vmatprep.subr.bf16.mxu0 0
    %454 = vmatpush2.bf16.msra.mxu0 0
    %455 = vmatprep.subr.bf16.mxu0 0
    %456 = vmatpush2.bf16.msra.mxu0 0
    %457 = vmatprep.subr.bf16.mxu0 0
    %458 = vmatpush2.bf16.msra.mxu0 0
    %459 = vmatprep.subr.bf16.mxu0 0
    %460 = vmatpush2.bf16.msra.mxu0 0
    %461 = vmatprep.subr.bf16.mxu0 0
    %462 = vmatpush2.bf16.msra.mxu0 0
    %463 = vmatprep.subr.bf16.mxu0 0
    %464 = vmatpush2.bf16.msra.mxu0 0
    %465 = vmatprep.subr.bf16.mxu0 0
    %466 = vmatpush2.bf16.msra.mxu0 0
    %467 = vmatprep.mubr.bf16.mxu0 0
    %468 = vmatmul.mubr.bf16.gmra.mxu0 %v274
    %v469 = vpop.f32.mrf.mxu0
    %v470 = vadd.f32 0.0, %v469
    %v471 = vpop.f32.mrf.mxu0
    %v472 = vadd.f32 0.0, %v471
    %v473 = vpop.f32.mrf.mxu0
    %v474 = vadd.f32 0.0, %v473
    %v475 = vpop.f32.mrf.mxu0
    %v476 = vadd.f32 0.0, %v475
    %477 = vdwg.mxu0
    %478 = vmatprep.subr.bf16.mxu0 0
    %479 = vmatpush1.bf16.msra.mxu0 %v410
    %480 = vmatprep.subr.bf16.mxu0 0
    %481 = vmatpush1.bf16.msra.mxu0 %v407
    %482 = vmatprep.subr.bf16.mxu0 0
    %483 = vmatpush1.bf16.msra.mxu0 %v404
    %484 = vmatprep.subr.bf16.mxu0 0
    %485 = vmatpush1.bf16.msra.mxu0 %v401
    %486 = vmatprep.subr.bf16.mxu0 0
    %487 = vmatpush1.bf16.msra.mxu0 %v398
    %488 = vmatprep.subr.bf16.mxu0 0
    %489 = vmatpush1.bf16.msra.mxu0 %v395
    %490 = vmatprep.subr.bf16.mxu0 0
    %491 = vmatpush1.bf16.msra.mxu0 %v392
    %492 = vmatprep.subr.bf16.mxu0 0
    %493 = vmatpush1.bf16.msra.mxu0 %v389
    %494 = vmatprep.subr.bf16.mxu0 0
    %495 = vmatpush2.bf16.msra.mxu0 0
    %496 = vmatprep.subr.bf16.mxu0 0
    %497 = vmatpush2.bf16.msra.mxu0 0
    %498 = vmatprep.subr.bf16.mxu0 0
    %499 = vmatpush2.bf16.msra.mxu0 0
    %500 = vmatprep.subr.bf16.mxu0 0
    %501 = vmatpush2.bf16.msra.mxu0 0
    %502 = vmatprep.subr.bf16.mxu0 0
    %503 = vmatpush2.bf16.msra.mxu0 0
    %504 = vmatprep.subr.bf16.mxu0 0
    %505 = vmatpush2.bf16.msra.mxu0 0
    %506 = vmatprep.subr.bf16.mxu0 0
    %507 = vmatpush2.bf16.msra.mxu0 0
    %508 = vmatprep.subr.bf16.mxu0 0
    %509 = vmatpush2.bf16.msra.mxu0 0
    %510 = vmatprep.mubr.bf16.mxu0 0
    %511 = vmatmul.mubr.bf16.gmra.mxu0 %v274
    %v512 = vpop.f32.mrf.mxu0
    %v513 = vadd.f32 0.0, %v512
    %v514 = vpop.f32.mrf.mxu0
    %v515 = vpop.f32.mrf.mxu0
    %v516 = vadd.f32 0.0, %v515
    %v517 = vpop.f32.mrf.mxu0
    %518 = vdwg.mxu0
    %v519 = vld [vmem:[#allocation2] sm:$0xf]
    %v520 = vld [vmem:[#allocation2 + $0x4] sm:$0xf]
    %v521 = vld [vmem:[#allocation2 + $0x8] sm:$0xf]
    %v522 = vld [vmem:[#allocation2 + $0xc] sm:$0xf]
    %v523 = vld [vmem:[#allocation2 + $0x10] sm:$0xf]
    %v524 = vld [vmem:[#allocation2 + $0x14] sm:$0xf]
    %v525 = vld [vmem:[#allocation2 + $0x18] sm:$0xf]
    %v526 = vld [vmem:[#allocation2 + $0x1c] sm:$0xf]
    %v527 = vld [vmem:[#allocation2 + $0x20] sm:$0xf]
    %v528 = vld [vmem:[#allocation2 + $0x24] sm:$0xf]
    %v529 = vld [vmem:[#allocation2 + $0x28] sm:$0xf]
    %v530 = vld [vmem:[#allocation2 + $0x2c] sm:$0xf]
    %v531 = vld [vmem:[#allocation2 + $0x30] sm:$0xf]
    %v532 = vld [vmem:[#allocation2 + $0x34] sm:$0xf]
    %v533 = vld [vmem:[#allocation2 + $0x38] sm:$0xf]
    %v534 = vld [vmem:[#allocation2 + $0x3c] sm:$0xf]
    %vm535 = vcmask 523264
    %v537 = vsel %vm535, %v470, 0
    %v540 = vsel %vm535, %v472, 0
    %542 = vmatprep.subr.mxu0 0.0
    %543 = vmatpush1.xpose.msra.mxu0 0.0
    %544 = vmatprep.subr.mxu0 0.0
    %545 = vmatpush1.xpose.msra.mxu0 0.0
    %546 = vmatprep.subr.mxu0 0.0
    %547 = vmatpush1.xpose.msra.mxu0 0.0
    %548 = vmatprep.subr.mxu0 0.0
    %549 = vmatpush1.xpose.msra.mxu0 0.0
    %550 = vmatprep.subr.mxu0 0.0
    %551 = vmatpush1.xpose.msra.mxu0 0.0
    %552 = vmatprep.subr.mxu0 0.0
    %553 = vmatpush1.xpose.msra.mxu0 0.0
    %554 = vmatprep.subr.mxu0 0.0
    %555 = vmatpush1.xpose.msra.mxu0 0.0
    %556 = vmatprep.subr.mxu0 0.0
    %557 = vmatpush1.xpose.msra.mxu0 0.0
    %558 = vmatprep.subr.mxu0 0.0
    %559 = vmatpush1.xpose.msra.mxu0 0.0
    %560 = vmatprep.subr.mxu0 0.0
    %561 = vmatpush1.xpose.msra.mxu0 0.0
    %562 = vmatprep.subr.mxu0 0.0
    %563 = vmatpush1.xpose.msra.mxu0 0.0
    %564 = vmatprep.subr.mxu0 0.0
    %565 = vmatpush1.xpose.msra.mxu0 0.0
    %566 = vmatprep.subr.mxu0 0.0
    %567 = vmatpush1.xpose.msra.mxu0 0.0
    %568 = vmatprep.subr.mxu0 0.0
    %569 = vmatpush1.xpose.msra.mxu0 0.0
    %570 = vmatprep.subr.mxu0 0.0
    %571 = vmatpush1.xpose.msra.mxu0 0.0
    %572 = vmatprep.subr.mxu0 0.0
    %573 = vmatpush1.xpose.msra.mxu0 %v540
    %574 = vmatprep.subr.mxu0 0.0
    %575 = vmatpush2.xpose.msra.mxu0 0.0
    %576 = vmatprep.subr.mxu0 0.0
    %577 = vmatpush2.xpose.msra.mxu0 0.0
    %578 = vmatprep.subr.mxu0 0.0
    %579 = vmatpush2.xpose.msra.mxu0 0.0
    %580 = vmatprep.subr.mxu0 0.0
    %581 = vmatpush2.xpose.msra.mxu0 0.0
    %582 = vmatprep.subr.mxu0 0.0
    %583 = vmatpush2.xpose.msra.mxu0 0.0
    %584 = vmatprep.subr.mxu0 0.0
    %585 = vmatpush2.xpose.msra.mxu0 0.0
    %586 = vmatprep.subr.mxu0 0.0
    %587 = vmatpush2.xpose.msra.mxu0 0.0
    %588 = vmatprep.subr.mxu0 0.0
    %589 = vmatpush2.xpose.msra.mxu0 0.0
    %590 = vmatprep.subr.mxu0 0.0
    %591 = vmatpush2.xpose.msra.mxu0 0.0
    %592 = vmatprep.subr.mxu0 0.0
    %593 = vmatpush2.xpose.msra.mxu0 0.0
    %594 = vmatprep.subr.mxu0 0.0
    %595 = vmatpush2.xpose.msra.mxu0 0.0
    %596 = vmatprep.subr.mxu0 0.0
    %597 = vmatpush2.xpose.msra.mxu0 0.0
    %598 = vmatprep.subr.mxu0 0.0
    %599 = vmatpush2.xpose.msra.mxu0 0.0
    %600 = vmatprep.subr.mxu0 0.0
    %601 = vmatpush2.xpose.msra.mxu0 0.0
    %602 = vmatprep.subr.mxu0 0.0
    %603 = vmatpush2.xpose.msra.mxu0 0.0
    %604 = vmatprep.subr.mxu0 0.0
    %605 = vmatpush2.xpose.msra.mxu0 0.0
    %606 = vmatprep.mubr.f32.mxu0 0.0
    %607 = vmatmul.mubr.f32.gmra.mxu0 %v537
    %v608 = vpop.f32.mrf.mxu0
    %v609 = vadd.f32 0.0, %v608
    %v610 = vpop.f32.mrf.mxu0
    %611 = vdwg.mxu0
    %v612 = vmul.f32 %v609, 0.70710677
    %v613 = vsel %vm232, %v612, -1e+30
    %vm614 = vcmask 64512
    %v615 = vsel %vm614, %v613, -inf
    %616 = vmax.xlane.f32.xlu0 %v615
    %v617 = vpop.xlane.xlu0 %616
    %v618 = vsub.f32 %v613, %v617
    %v619 = vmul.f32 %v618, 1.442695
    %v620 = vpow.pop %v619
    %v621 = vsel %vm614, %v620, 0.0
    %622 = vadd.xlane.f32.xlu0 %v621
    %v623 = vpop.xlane.xlu0 %622
    %v624 = vrcp.pop %v623
    %v625 = vmul.f32 %v620, %v624
    %v627 = vsel %vm614, %v625, 0
    %629 = vmatprep.subr.mxu0 0.0
    %630 = vmatpush1.msra.mxu0 0.0
    %631 = vmatprep.subr.mxu0 0.0
    %632 = vmatpush1.msra.mxu0 0.0
    %633 = vmatprep.subr.mxu0 0.0
    %634 = vmatpush1.msra.mxu0 0.0
    %635 = vmatprep.subr.mxu0 0.0
    %636 = vmatpush1.msra.mxu0 0.0
    %637 = vmatprep.subr.mxu0 0.0
    %638 = vmatpush1.msra.mxu0 0.0
    %639 = vmatprep.subr.mxu0 0.0
    %640 = vmatpush1.msra.mxu0 0.0
    %641 = vmatprep.subr.mxu0 0.0
    %642 = vmatpush1.msra.mxu0 0.0
    %643 = vmatprep.subr.mxu0 0.0
    %644 = vmatpush1.msra.mxu0 0.0
    %645 = vmatprep.subr.mxu0 0.0
    %646 = vmatpush1.msra.mxu0 0.0
    %647 = vmatprep.subr.mxu0 0.0
    %648 = vmatpush1.msra.mxu0 0.0
    %649 = vmatprep.subr.mxu0 0.0
    %650 = vmatpush1.msra.mxu0 0.0
    %651 = vmatprep.subr.mxu0 0.0
    %652 = vmatpush1.msra.mxu0 0.0
    %653 = vmatprep.subr.mxu0 0.0
    %654 = vmatpush1.msra.mxu0 0.0
    %655 = vmatprep.subr.mxu0 0.0
    %656 = vmatpush1.msra.mxu0 0.0
    %657 = vmatprep.subr.mxu0 0.0
    %658 = vmatpush1.msra.mxu0 0.0
    %659 = vmatprep.subr.mxu0 0.0
    %660 = vmatpush1.msra.mxu0 %v513
    %661 = vmatprep.subr.mxu0 0.0
    %662 = vmatpush2.msra.mxu0 0.0
    %663 = vmatprep.subr.mxu0 0.0
    %664 = vmatpush2.msra.mxu0 0.0
    %665 = vmatprep.subr.mxu0 0.0
    %666 = vmatpush2.msra.mxu0 0.0
    %667 = vmatprep.subr.mxu0 0.0
    %668 = vmatpush2.msra.mxu0 0.0
    %669 = vmatprep.subr.mxu0 0.0
    %670 = vmatpush2.msra.mxu0 0.0
    %671 = vmatprep.subr.mxu0 0.0
    %672 = vmatpush2.msra.mxu0 0.0
    %673 = vmatprep.subr.mxu0 0.0
    %674 = vmatpush2.msra.mxu0 0.0
    %675 = vmatprep.subr.mxu0 0.0
    %676 = vmatpush2.msra.mxu0 0.0
    %677 = vmatprep.subr.mxu0 0.0
    %678 = vmatpush2.msra.mxu0 0.0
    %679 = vmatprep.subr.mxu0 0.0
    %680 = vmatpush2.msra.mxu0 0.0
    %681 = vmatprep.subr.mxu0 0.0
    %682 = vmatpush2.msra.mxu0 0.0
    %683 = vmatprep.subr.mxu0 0.0
    %684 = vmatpush2.msra.mxu0 0.0
    %685 = vmatprep.subr.mxu0 0.0
    %686 = vmatpush2.msra.mxu0 0.0
    %687 = vmatprep.subr.mxu0 0.0
    %688 = vmatpush2.msra.mxu0 0.0
    %689 = vmatprep.subr.mxu0 0.0
    %690 = vmatpush2.msra.mxu0 0.0
    %691 = vmatprep.subr.mxu0 0.0
    %692 = vmatpush2.msra.mxu0 0.0
    %693 = vmatprep.mubr.f32.mxu0 0.0
    %694 = vmatmul.mubr.f32.gmra.mxu0 %v627
    %v695 = vpop.f32.mrf.mxu0
    %v696 = vadd.f32 0.0, %v695
    %v697 = vpop.f32.mrf.mxu0
    %698 = vdwg.mxu0
    %v699 = vpack.c.bf16 %v696, %v696
    %700 = vrot.lane.b32.xlu0 %v470, 64
    %v701 = vpop.permute.xlu0 %700
    %702 = vrot.lane.b32.xlu0 %v472, 64
    %v703 = vpop.permute.xlu0 %702
    %v704 = vsel %vm535, %v701, 0
    %v706 = vsel %vm535, %v703, 0
    %708 = vmatprep.subr.mxu0 0.0
    %709 = vmatpush1.xpose.msra.mxu0 0.0
    %710 = vmatprep.subr.mxu0 0.0
    %711 = vmatpush1.xpose.msra.mxu0 0.0
    %712 = vmatprep.subr.mxu0 0.0
    %713 = vmatpush1.xpose.msra.mxu0 0.0
    %714 = vmatprep.subr.mxu0 0.0
    %715 = vmatpush1.xpose.msra.mxu0 0.0
    %716 = vmatprep.subr.mxu0 0.0
    %717 = vmatpush1.xpose.msra.mxu0 0.0
    %718 = vmatprep.subr.mxu0 0.0
    %719 = vmatpush1.xpose.msra.mxu0 0.0
    %720 = vmatprep.subr.mxu0 0.0
    %721 = vmatpush1.xpose.msra.mxu0 0.0
    %722 = vmatprep.subr.mxu0 0.0
    %723 = vmatpush1.xpose.msra.mxu0 0.0
    %724 = vmatprep.subr.mxu0 0.0
    %725 = vmatpush1.xpose.msra.mxu0 0.0
    %726 = vmatprep.subr.mxu0 0.0
    %727 = vmatpush1.xpose.msra.mxu0 0.0
    %728 = vmatprep.subr.mxu0 0.0
    %729 = vmatpush1.xpose.msra.mxu0 0.0
    %730 = vmatprep.subr.mxu0 0.0
    %731 = vmatpush1.xpose.msra.mxu0 0.0
    %732 = vmatprep.subr.mxu0 0.0
    %733 = vmatpush1.xpose.msra.mxu0 0.0
    %734 = vmatprep.subr.mxu0 0.0
    %735 = vmatpush1.xpose.msra.mxu0 0.0
    %736 = vmatprep.subr.mxu0 0.0
    %737 = vmatpush1.xpose.msra.mxu0 0.0
    %738 = vmatprep.subr.mxu0 0.0
    %739 = vmatpush1.xpose.msra.mxu0 %v706
    %740 = vmatprep.subr.mxu0 0.0
    %741 = vmatpush2.xpose.msra.mxu0 0.0
    %742 = vmatprep.subr.mxu0 0.0
    %743 = vmatpush2.xpose.msra.mxu0 0.0
    %744 = vmatprep.subr.mxu0 0.0
    %745 = vmatpush2.xpose.msra.mxu0 0.0
    %746 = vmatprep.subr.mxu0 0.0
    %747 = vmatpush2.xpose.msra.mxu0 0.0
    %748 = vmatprep.subr.mxu0 0.0
    %749 = vmatpush2.xpose.msra.mxu0 0.0
    %750 = vmatprep.subr.mxu0 0.0
    %751 = vmatpush2.xpose.msra.mxu0 0.0
    %752 = vmatprep.subr.mxu0 0.0
    %753 = vmatpush2.xpose.msra.mxu0 0.0
    %754 = vmatprep.subr.mxu0 0.0
    %755 = vmatpush2.xpose.msra.mxu0 0.0
    %756 = vmatprep.subr.mxu0 0.0
    %757 = vmatpush2.xpose.msra.mxu0 0.0
    %758 = vmatprep.subr.mxu0 0.0
    %759 = vmatpush2.xpose.msra.mxu0 0.0
    %760 = vmatprep.subr.mxu0 0.0
    %761 = vmatpush2.xpose.msra.mxu0 0.0
    %762 = vmatprep.subr.mxu0 0.0
    %763 = vmatpush2.xpose.msra.mxu0 0.0
    %764 = vmatprep.subr.mxu0 0.0
    %765 = vmatpush2.xpose.msra.mxu0 0.0
    %766 = vmatprep.subr.mxu0 0.0
    %767 = vmatpush2.xpose.msra.mxu0 0.0
    %768 = vmatprep.subr.mxu0 0.0
    %769 = vmatpush2.xpose.msra.mxu0 0.0
    %770 = vmatprep.subr.mxu0 0.0
    %771 = vmatpush2.xpose.msra.mxu0 0.0
    %772 = vmatprep.mubr.f32.mxu0 0.0
    %773 = vmatmul.mubr.f32.gmra.mxu0 %v704
    %v774 = vpop.f32.mrf.mxu0
    %v775 = vadd.f32 0.0, %v774
    %v776 = vpop.f32.mrf.mxu0
    %777 = vdwg.mxu0
    %v778 = vmul.f32 %v775, 0.70710677
    %v779 = vsel %vm232, %v778, -1e+30
    %v780 = vsel %vm614, %v779, -inf
    %781 = vmax.xlane.f32.xlu0 %v780
    %v782 = vpop.xlane.xlu0 %781
    %v783 = vsub.f32 %v779, %v782
    %v784 = vmul.f32 %v783, 1.442695
    %v785 = vpow.pop %v784
    %v786 = vsel %vm614, %v785, 0.0
    %787 = vadd.xlane.f32.xlu0 %v786
    %v788 = vpop.xlane.xlu0 %787
    %v789 = vrcp.pop %v788
    %v790 = vmul.f32 %v785, %v789
    %792 = vrot.lane.b32.xlu0 %v513, 64
    %v793 = vpop.permute.xlu0 %792
    %v796 = vsel %vm614, %v790, 0
    %798 = vmatprep.subr.mxu0 0.0
    %799 = vmatpush1.msra.mxu0 0.0
    %800 = vmatprep.subr.mxu0 0.0
    %801 = vmatpush1.msra.mxu0 0.0
    %802 = vmatprep.subr.mxu0 0.0
    %803 = vmatpush1.msra.mxu0 0.0
    %804 = vmatprep.subr.mxu0 0.0
    %805 = vmatpush1.msra.mxu0 0.0
    %806 = vmatprep.subr.mxu0 0.0
    %807 = vmatpush1.msra.mxu0 0.0
    %808 = vmatprep.subr.mxu0 0.0
    %809 = vmatpush1.msra.mxu0 0.0
    %810 = vmatprep.subr.mxu0 0.0
    %811 = vmatpush1.msra.mxu0 0.0
    %812 = vmatprep.subr.mxu0 0.0
    %813 = vmatpush1.msra.mxu0 0.0
    %814 = vmatprep.subr.mxu0 0.0
    %815 = vmatpush1.msra.mxu0 0.0
    %816 = vmatprep.subr.mxu0 0.0
    %817 = vmatpush1.msra.mxu0 0.0
    %818 = vmatprep.subr.mxu0 0.0
    %819 = vmatpush1.msra.mxu0 0.0
    %820 = vmatprep.subr.mxu0 0.0
    %821 = vmatpush1.msra.mxu0 0.0
    %822 = vmatprep.subr.mxu0 0.0
    %823 = vmatpush1.msra.mxu0 0.0
    %824 = vmatprep.subr.mxu0 0.0
    %825 = vmatpush1.msra.mxu0 0.0
    %826 = vmatprep.subr.mxu0 0.0
    %827 = vmatpush1.msra.mxu0 0.0
    %828 = vmatprep.subr.mxu0 0.0
    %829 = vmatpush1.msra.mxu0 %v793
    %830 = vmatprep.subr.mxu0 0.0
    %831 = vmatpush2.msra.mxu0 0.0
    %832 = vmatprep.subr.mxu0 0.0
    %833 = vmatpush2.msra.mxu0 0.0
    %834 = vmatprep.subr.mxu0 0.0
    %835 = vmatpush2.msra.mxu0 0.0
    %836 = vmatprep.subr.mxu0 0.0
    %837 = vmatpush2.msra.mxu0 0.0
    %838 = vmatprep.subr.mxu0 0.0
    %839 = vmatpush2.msra.mxu0 0.0
    %840 = vmatprep.subr.mxu0 0.0
    %841 = vmatpush2.msra.mxu0 0.0
    %842 = vmatprep.subr.mxu0 0.0
    %843 = vmatpush2.msra.mxu0 0.0
    %844 = vmatprep.subr.mxu0 0.0
    %845 = vmatpush2.msra.mxu0 0.0
    %846 = vmatprep.subr.mxu0 0.0
    %847 = vmatpush2.msra.mxu0 0.0
    %848 = vmatprep.subr.mxu0 0.0
    %849 = vmatpush2.msra.mxu0 0.0
    %850 = vmatprep.subr.mxu0 0.0
    %851 = vmatpush2.msra.mxu0 0.0
    %852 = vmatprep.subr.mxu0 0.0
    %853 = vmatpush2.msra.mxu0 0.0
    %854 = vmatprep.subr.mxu0 0.0
    %855 = vmatpush2.msra.mxu0 0.0
    %856 = vmatprep.subr.mxu0 0.0
    %857 = vmatpush2.msra.mxu0 0.0
    %858 = vmatprep.subr.mxu0 0.0
    %859 = vmatpush2.msra.mxu0 0.0
    %860 = vmatprep.subr.mxu0 0.0
    %861 = vmatpush2.msra.mxu0 0.0
    %862 = vmatprep.mubr.f32.mxu0 0.0
    %863 = vmatmul.mubr.f32.gmra.mxu0 %v796
    %v864 = vpop.f32.mrf.mxu0
    %v865 = vadd.f32 0.0, %v864
    %v866 = vpop.f32.mrf.mxu0
    %867 = vdwg.mxu0
    %v868 = vpack.c.bf16 %v865, %v865
    %v877 = vunpack.c.l.b16 %v527
    %v878 = vunpack.c.l.b16 %v528
    %v879 = vunpack.c.l.b16 %v529
    %v880 = vunpack.c.l.b16 %v530
    %v881 = vunpack.c.l.b16 %v531
    %v882 = vunpack.c.l.b16 %v532
    %v883 = vunpack.c.l.b16 %v533
    %v884 = vunpack.c.l.b16 %v534
    %v885 = vpack.c.b16 %v878, %v877
    %v886 = vpack.c.b16 %v880, %v879
    %v887 = vpack.c.b16 %v882, %v881
    %v888 = vpack.c.b16 %v884, %v883
    %v894 = vsel %vm535, %v868, 0
    %896 = vmatprep.subr.bf16.mxu0 0
    %897 = vmatpush1.bf16.msra.mxu0 0
    %898 = vmatprep.subr.bf16.mxu0 0
    %899 = vmatpush1.bf16.msra.mxu0 0
    %900 = vmatprep.subr.bf16.mxu0 0
    %901 = vmatpush1.bf16.msra.mxu0 0
    %902 = vmatprep.subr.bf16.mxu0 0
    %903 = vmatpush1.bf16.msra.mxu0 0
    %904 = vmatprep.subr.bf16.mxu0 0
    %905 = vmatpush1.bf16.msra.mxu0 %v888
    %906 = vmatprep.subr.bf16.mxu0 0
    %907 = vmatpush1.bf16.msra.mxu0 %v887
    %908 = vmatprep.subr.bf16.mxu0 0
    %909 = vmatpush1.bf16.msra.mxu0 %v886
    %910 = vmatprep.subr.bf16.mxu0 0
    %911 = vmatpush1.bf16.msra.mxu0 %v885
    %912 = vmatprep.subr.bf16.mxu0 0
    %913 = vmatpush2.bf16.msra.mxu0 0
    %914 = vmatprep.subr.bf16.mxu0 0
    %915 = vmatpush2.bf16.msra.mxu0 0
    %916 = vmatprep.subr.bf16.mxu0 0
    %917 = vmatpush2.bf16.msra.mxu0 0
    %918 = vmatprep.subr.bf16.mxu0 0
    %919 = vmatpush2.bf16.msra.mxu0 0
    %920 = vmatprep.subr.bf16.mxu0 0
    %921 = vmatpush2.bf16.msra.mxu0 0
    %922 = vmatprep.subr.bf16.mxu0 0
    %923 = vmatpush2.bf16.msra.mxu0 0
    %924 = vmatprep.subr.bf16.mxu0 0
    %925 = vmatpush2.bf16.msra.mxu0 0
    %926 = vmatprep.subr.bf16.mxu0 0
    %927 = vmatpush2.bf16.msra.mxu0 0
    %928 = vmatprep.mubr.bf16.mxu0 0
    %929 = vmatmul.mubr.bf16.gmra.mxu0 %v894
    %v930 = vpop.f32.mrf.mxu0
    %v931 = vadd.f32 0.0, %v930
    %v932 = vpop.f32.mrf.mxu0
    %v933 = vpop.f32.mrf.mxu0
    %v934 = vpop.f32.mrf.mxu0
    %935 = vdwg.mxu0
    %v944 = vunpack.c.l.b16 %v519
    %v945 = vunpack.c.l.b16 %v520
    %v946 = vunpack.c.l.b16 %v521
    %v947 = vunpack.c.l.b16 %v522
    %v948 = vunpack.c.l.b16 %v523
    %v949 = vunpack.c.l.b16 %v524
    %v950 = vunpack.c.l.b16 %v525
    %v951 = vunpack.c.l.b16 %v526
    %v952 = vpack.c.b16 %v945, %v944
    %v953 = vpack.c.b16 %v947, %v946
    %v954 = vpack.c.b16 %v949, %v948
    %v955 = vpack.c.b16 %v951, %v950
    %v961 = vsel %vm535, %v699, 0
    %963 = vmatprep.subr.bf16.mxu0 0
    %964 = vmatpush1.bf16.msra.mxu0 0
    %965 = vmatprep.subr.bf16.mxu0 0
    %966 = vmatpush1.bf16.msra.mxu0 0
    %967 = vmatprep.subr.bf16.mxu0 0
    %968 = vmatpush1.bf16.msra.mxu0 0
    %969 = vmatprep.subr.bf16.mxu0 0
    %970 = vmatpush1.bf16.msra.mxu0 0
    %971 = vmatprep.subr.bf16.mxu0 0
    %972 = vmatpush1.bf16.msra.mxu0 %v955
    %973 = vmatprep.subr.bf16.mxu0 0
    %974 = vmatpush1.bf16.msra.mxu0 %v954
    %975 = vmatprep.subr.bf16.mxu0 0
    %976 = vmatpush1.bf16.msra.mxu0 %v953
    %977 = vmatprep.subr.bf16.mxu0 0
    %978 = vmatpush1.bf16.msra.mxu0 %v952
    %979 = vmatprep.subr.bf16.mxu0 0
    %980 = vmatpush2.bf16.msra.mxu0 0
    %981 = vmatprep.subr.bf16.mxu0 0
    %982 = vmatpush2.bf16.msra.mxu0 0
    %983 = vmatprep.subr.bf16.mxu0 0
    %984 = vmatpush2.bf16.msra.mxu0 0
    %985 = vmatprep.subr.bf16.mxu0 0
    %986 = vmatpush2.bf16.msra.mxu0 0
    %987 = vmatprep.subr.bf16.mxu0 0
    %988 = vmatpush2.bf16.msra.mxu0 0
    %989 = vmatprep.subr.bf16.mxu0 0
    %990 = vmatpush2.bf16.msra.mxu0 0
    %991 = vmatprep.subr.bf16.mxu0 0
    %992 = vmatpush2.bf16.msra.mxu0 0
    %993 = vmatprep.subr.bf16.mxu0 0
    %994 = vmatpush2.bf16.msra.mxu0 0
    %995 = vmatprep.mubr.bf16.mxu0 0
    %996 = vmatmul.mubr.bf16.gmra.mxu0 %v961
    %v997 = vpop.f32.mrf.mxu0
    %v998 = vadd.f32 %v931, %v997
    %v999 = vpop.f32.mrf.mxu0
    %v1000 = vpop.f32.mrf.mxu0
    %v1001 = vpop.f32.mrf.mxu0
    %1002 = vdwg.mxu0
    %v1004 = vsel %vm535, %v474, 0
    %v1007 = vsel %vm535, %v476, 0
    %1009 = vmatprep.subr.mxu0 0.0
    %1010 = vmatpush1.xpose.msra.mxu0 0.0
    %1011 = vmatprep.subr.mxu0 0.0
    %1012 = vmatpush1.xpose.msra.mxu0 0.0
    %1013 = vmatprep.subr.mxu0 0.0
    %1014 = vmatpush1.xpose.msra.mxu0 0.0
    %1015 = vmatprep.subr.mxu0 0.0
    %1016 = vmatpush1.xpose.msra.mxu0 0.0
    %1017 = vmatprep.subr.mxu0 0.0
    %1018 = vmatpush1.xpose.msra.mxu0 0.0
    %1019 = vmatprep.subr.mxu0 0.0
    %1020 = vmatpush1.xpose.msra.mxu0 0.0
    %1021 = vmatprep.subr.mxu0 0.0
    %1022 = vmatpush1.xpose.msra.mxu0 0.0
    %1023 = vmatprep.subr.mxu0 0.0
    %1024 = vmatpush1.xpose.msra.mxu0 0.0
    %1025 = vmatprep.subr.mxu0 0.0
    %1026 = vmatpush1.xpose.msra.mxu0 0.0
    %1027 = vmatprep.subr.mxu0 0.0
    %1028 = vmatpush1.xpose.msra.mxu0 0.0
    %1029 = vmatprep.subr.mxu0 0.0
    %1030 = vmatpush1.xpose.msra.mxu0 0.0
    %1031 = vmatprep.subr.mxu0 0.0
    %1032 = vmatpush1.xpose.msra.mxu0 0.0
    %1033 = vmatprep.subr.mxu0 0.0
    %1034 = vmatpush1.xpose.msra.mxu0 0.0
    %1035 = vmatprep.subr.mxu0 0.0
    %1036 = vmatpush1.xpose.msra.mxu0 0.0
    %1037 = vmatprep.subr.mxu0 0.0
    %1038 = vmatpush1.xpose.msra.mxu0 0.0
    %1039 = vmatprep.subr.mxu0 0.0
    %1040 = vmatpush1.xpose.msra.mxu0 %v1007
    %1041 = vmatprep.subr.mxu0 0.0
    %1042 = vmatpush2.xpose.msra.mxu0 0.0
    %1043 = vmatprep.subr.mxu0 0.0
    %1044 = vmatpush2.xpose.msra.mxu0 0.0
    %1045 = vmatprep.subr.mxu0 0.0
    %1046 = vmatpush2.xpose.msra.mxu0 0.0
    %1047 = vmatprep.subr.mxu0 0.0
    %1048 = vmatpush2.xpose.msra.mxu0 0.0
    %1049 = vmatprep.subr.mxu0 0.0
    %1050 = vmatpush2.xpose.msra.mxu0 0.0
    %1051 = vmatprep.subr.mxu0 0.0
    %1052 = vmatpush2.xpose.msra.mxu0 0.0
    %1053 = vmatprep.subr.mxu0 0.0
    %1054 = vmatpush2.xpose.msra.mxu0 0.0
    %1055 = vmatprep.subr.mxu0 0.0
    %1056 = vmatpush2.xpose.msra.mxu0 0.0
    %1057 = vmatprep.subr.mxu0 0.0
    %1058 = vmatpush2.xpose.msra.mxu0 0.0
    %1059 = vmatprep.subr.mxu0 0.0
    %1060 = vmatpush2.xpose.msra.mxu0 0.0
    %1061 = vmatprep.subr.mxu0 0.0
    %1062 = vmatpush2.xpose.msra.mxu0 0.0
    %1063 = vmatprep.subr.mxu0 0.0
    %1064 = vmatpush2.xpose.msra.mxu0 0.0
    %1065 = vmatprep.subr.mxu0 0.0
    %1066 = vmatpush2.xpose.msra.mxu0 0.0
    %1067 = vmatprep.subr.mxu0 0.0
    %1068 = vmatpush2.xpose.msra.mxu0 0.0
    %1069 = vmatprep.subr.mxu0 0.0
    %1070 = vmatpush2.xpose.msra.mxu0 0.0
    %1071 = vmatprep.subr.mxu0 0.0
    %1072 = vmatpush2.xpose.msra.mxu0 0.0
    %1073 = vmatprep.mubr.f32.mxu0 0.0
    %1074 = vmatmul.mubr.f32.gmra.mxu0 %v1004
    %v1075 = vpop.f32.mrf.mxu0
    %v1076 = vadd.f32 0.0, %v1075
    %v1077 = vpop.f32.mrf.mxu0
    %1078 = vdwg.mxu0
    %v1079 = vmul.f32 %v1076, 0.70710677
    %v1080 = vsel %vm232, %v1079, -1e+30
    %v1081 = vsel %vm614, %v1080, -inf
    %1082 = vmax.xlane.f32.xlu0 %v1081
    %v1083 = vpop.xlane.xlu0 %1082
    %v1084 = vsub.f32 %v1080, %v1083
    %v1085 = vmul.f32 %v1084, 1.442695
    %v1086 = vpow.pop %v1085
    %v1087 = vsel %vm614, %v1086, 0.0
    %1088 = vadd.xlane.f32.xlu0 %v1087
    %v1089 = vpop.xlane.xlu0 %1088
    %v1090 = vrcp.pop %v1089
    %v1091 = vmul.f32 %v1086, %v1090
    %v1093 = vsel %vm614, %v1091, 0
    %1095 = vmatprep.subr.mxu0 0.0
    %1096 = vmatpush1.msra.mxu0 0.0
    %1097 = vmatprep.subr.mxu0 0.0
    %1098 = vmatpush1.msra.mxu0 0.0
    %1099 = vmatprep.subr.mxu0 0.0
    %1100 = vmatpush1.msra.mxu0 0.0
    %1101 = vmatprep.subr.mxu0 0.0
    %1102 = vmatpush1.msra.mxu0 0.0
    %1103 = vmatprep.subr.mxu0 0.0
    %1104 = vmatpush1.msra.mxu0 0.0
    %1105 = vmatprep.subr.mxu0 0.0
    %1106 = vmatpush1.msra.mxu0 0.0
    %1107 = vmatprep.subr.mxu0 0.0
    %1108 = vmatpush1.msra.mxu0 0.0
    %1109 = vmatprep.subr.mxu0 0.0
    %1110 = vmatpush1.msra.mxu0 0.0
    %1111 = vmatprep.subr.mxu0 0.0
    %1112 = vmatpush1.msra.mxu0 0.0
    %1113 = vmatprep.subr.mxu0 0.0
    %1114 = vmatpush1.msra.mxu0 0.0
    %1115 = vmatprep.subr.mxu0 0.0
    %1116 = vmatpush1.msra.mxu0 0.0
    %1117 = vmatprep.subr.mxu0 0.0
    %1118 = vmatpush1.msra.mxu0 0.0
    %1119 = vmatprep.subr.mxu0 0.0
    %1120 = vmatpush1.msra.mxu0 0.0
    %1121 = vmatprep.subr.mxu0 0.0
    %1122 = vmatpush1.msra.mxu0 0.0
    %1123 = vmatprep.subr.mxu0 0.0
    %1124 = vmatpush1.msra.mxu0 0.0
    %1125 = vmatprep.subr.mxu0 0.0
    %1126 = vmatpush1.msra.mxu0 %v516
    %1127 = vmatprep.subr.mxu0 0.0
    %1128 = vmatpush2.msra.mxu0 0.0
    %1129 = vmatprep.subr.mxu0 0.0
    %1130 = vmatpush2.msra.mxu0 0.0
    %1131 = vmatprep.subr.mxu0 0.0
    %1132 = vmatpush2.msra.mxu0 0.0
    %1133 = vmatprep.subr.mxu0 0.0
    %1134 = vmatpush2.msra.mxu0 0.0
    %1135 = vmatprep.subr.mxu0 0.0
    %1136 = vmatpush2.msra.mxu0 0.0
    %1137 = vmatprep.subr.mxu0 0.0
    %1138 = vmatpush2.msra.mxu0 0.0
    %1139 = vmatprep.subr.mxu0 0.0
    %1140 = vmatpush2.msra.mxu0 0.0
    %1141 = vmatprep.subr.mxu0 0.0
    %1142 = vmatpush2.msra.mxu0 0.0
    %1143 = vmatprep.subr.mxu0 0.0
    %1144 = vmatpush2.msra.mxu0 0.0
    %1145 = vmatprep.subr.mxu0 0.0
    %1146 = vmatpush2.msra.mxu0 0.0
    %1147 = vmatprep.subr.mxu0 0.0
    %1148 = vmatpush2.msra.mxu0 0.0
    %1149 = vmatprep.subr.mxu0 0.0
    %1150 = vmatpush2.msra.mxu0 0.0
    %1151 = vmatprep.subr.mxu0 0.0
    %1152 = vmatpush2.msra.mxu0 0.0
    %1153 = vmatprep.subr.mxu0 0.0
    %1154 = vmatpush2.msra.mxu0 0.0
    %1155 = vmatprep.subr.mxu0 0.0
    %1156 = vmatpush2.msra.mxu0 0.0
    %1157 = vmatprep.subr.mxu0 0.0
    %1158 = vmatpush2.msra.mxu0 0.0
    %1159 = vmatprep.mubr.f32.mxu0 0.0
    %1160 = vmatmul.mubr.f32.gmra.mxu0 %v1093
    %v1161 = vpop.f32.mrf.mxu0
    %v1162 = vadd.f32 0.0, %v1161
    %v1163 = vpop.f32.mrf.mxu0
    %1164 = vdwg.mxu0
    %v1165 = vpack.c.bf16 %v1162, %v1162
    %1166 = vrot.lane.b32.xlu0 %v474, 64
    %v1167 = vpop.permute.xlu0 %1166
    %1168 = vrot.lane.b32.xlu0 %v476, 64
    %v1169 = vpop.permute.xlu0 %1168
    %v1170 = vsel %vm535, %v1167, 0
    %v1172 = vsel %vm535, %v1169, 0
    %1174 = vmatprep.subr.mxu0 0.0
    %1175 = vmatpush1.xpose.msra.mxu0 0.0
    %1176 = vmatprep.subr.mxu0 0.0
    %1177 = vmatpush1.xpose.msra.mxu0 0.0
    %1178 = vmatprep.subr.mxu0 0.0
    %1179 = vmatpush1.xpose.msra.mxu0 0.0
    %1180 = vmatprep.subr.mxu0 0.0
    %1181 = vmatpush1.xpose.msra.mxu0 0.0
    %1182 = vmatprep.subr.mxu0 0.0
    %1183 = vmatpush1.xpose.msra.mxu0 0.0
    %1184 = vmatprep.subr.mxu0 0.0
    %1185 = vmatpush1.xpose.msra.mxu0 0.0
    %1186 = vmatprep.subr.mxu0 0.0
    %1187 = vmatpush1.xpose.msra.mxu0 0.0
    %1188 = vmatprep.subr.mxu0 0.0
    %1189 = vmatpush1.xpose.msra.mxu0 0.0
    %1190 = vmatprep.subr.mxu0 0.0
    %1191 = vmatpush1.xpose.msra.mxu0 0.0
    %1192 = vmatprep.subr.mxu0 0.0
    %1193 = vmatpush1.xpose.msra.mxu0 0.0
    %1194 = vmatprep.subr.mxu0 0.0
    %1195 = vmatpush1.xpose.msra.mxu0 0.0
    %1196 = vmatprep.subr.mxu0 0.0
    %1197 = vmatpush1.xpose.msra.mxu0 0.0
    %1198 = vmatprep.subr.mxu0 0.0
    %1199 = vmatpush1.xpose.msra.mxu0 0.0
    %1200 = vmatprep.subr.mxu0 0.0
    %1201 = vmatpush1.xpose.msra.mxu0 0.0
    %1202 = vmatprep.subr.mxu0 0.0
    %1203 = vmatpush1.xpose.msra.mxu0 0.0
    %1204 = vmatprep.subr.mxu0 0.0
    %1205 = vmatpush1.xpose.msra.mxu0 %v1172
    %1206 = vmatprep.subr.mxu0 0.0
    %1207 = vmatpush2.xpose.msra.mxu0 0.0
    %1208 = vmatprep.subr.mxu0 0.0
    %1209 = vmatpush2.xpose.msra.mxu0 0.0
    %1210 = vmatprep.subr.mxu0 0.0
    %1211 = vmatpush2.xpose.msra.mxu0 0.0
    %1212 = vmatprep.subr.mxu0 0.0
    %1213 = vmatpush2.xpose.msra.mxu0 0.0
    %1214 = vmatprep.subr.mxu0 0.0
    %1215 = vmatpush2.xpose.msra.mxu0 0.0
    %1216 = vmatprep.subr.mxu0 0.0
    %1217 = vmatpush2.xpose.msra.mxu0 0.0
    %1218 = vmatprep.subr.mxu0 0.0
    %1219 = vmatpush2.xpose.msra.mxu0 0.0
    %1220 = vmatprep.subr.mxu0 0.0
    %1221 = vmatpush2.xpose.msra.mxu0 0.0
    %1222 = vmatprep.subr.mxu0 0.0
    %1223 = vmatpush2.xpose.msra.mxu0 0.0
    %1224 = vmatprep.subr.mxu0 0.0
    %1225 = vmatpush2.xpose.msra.mxu0 0.0
    %1226 = vmatprep.subr.mxu0 0.0
    %1227 = vmatpush2.xpose.msra.mxu0 0.0
    %1228 = vmatprep.subr.mxu0 0.0
    %1229 = vmatpush2.xpose.msra.mxu0 0.0
    %1230 = vmatprep.subr.mxu0 0.0
    %1231 = vmatpush2.xpose.msra.mxu0 0.0
    %1232 = vmatprep.subr.mxu0 0.0
    %1233 = vmatpush2.xpose.msra.mxu0 0.0
    %1234 = vmatprep.subr.mxu0 0.0
    %1235 = vmatpush2.xpose.msra.mxu0 0.0
    %1236 = vmatprep.subr.mxu0 0.0
    %1237 = vmatpush2.xpose.msra.mxu0 0.0
    %1238 = vmatprep.mubr.f32.mxu0 0.0
    %1239 = vmatmul.mubr.f32.gmra.mxu0 %v1170
    %v1240 = vpop.f32.mrf.mxu0
    %v1241 = vadd.f32 0.0, %v1240
    %v1242 = vpop.f32.mrf.mxu0
    %1243 = vdwg.mxu0
    %v1244 = vmul.f32 %v1241, 0.70710677
    %v1245 = vsel %vm232, %v1244, -1e+30
    %v1246 = vsel %vm614, %v1245, -inf
    %1247 = vmax.xlane.f32.xlu0 %v1246
    %v1248 = vpop.xlane.xlu0 %1247
    %v1249 = vsub.f32 %v1245, %v1248
    %v1250 = vmul.f32 %v1249, 1.442695
    %v1251 = vpow.pop %v1250
    %v1252 = vsel %vm614, %v1251, 0.0
    %1253 = vadd.xlane.f32.xlu0 %v1252
    %v1254 = vpop.xlane.xlu0 %1253
    %v1255 = vrcp.pop %v1254
    %v1256 = vmul.f32 %v1251, %v1255
    %1258 = vrot.lane.b32.xlu0 %v516, 64
    %v1259 = vpop.permute.xlu0 %1258
    %v1262 = vsel %vm614, %v1256, 0
    %1264 = vmatprep.subr.mxu0 0.0
    %1265 = vmatpush1.msra.mxu0 0.0
    %1266 = vmatprep.subr.mxu0 0.0
    %1267 = vmatpush1.msra.mxu0 0.0
    %1268 = vmatprep.subr.mxu0 0.0
    %1269 = vmatpush1.msra.mxu0 0.0
    %1270 = vmatprep.subr.mxu0 0.0
    %1271 = vmatpush1.msra.mxu0 0.0
    %1272 = vmatprep.subr.mxu0 0.0
    %1273 = vmatpush1.msra.mxu0 0.0
    %1274 = vmatprep.subr.mxu0 0.0
    %1275 = vmatpush1.msra.mxu0 0.0
    %1276 = vmatprep.subr.mxu0 0.0
    %1277 = vmatpush1.msra.mxu0 0.0
    %1278 = vmatprep.subr.mxu0 0.0
    %1279 = vmatpush1.msra.mxu0 0.0
    %1280 = vmatprep.subr.mxu0 0.0
    %1281 = vmatpush1.msra.mxu0 0.0
    %1282 = vmatprep.subr.mxu0 0.0
    %1283 = vmatpush1.msra.mxu0 0.0
    %1284 = vmatprep.subr.mxu0 0.0
    %1285 = vmatpush1.msra.mxu0 0.0
    %1286 = vmatprep.subr.mxu0 0.0
    %1287 = vmatpush1.msra.mxu0 0.0
    %1288 = vmatprep.subr.mxu0 0.0
    %1289 = vmatpush1.msra.mxu0 0.0
    %1290 = vmatprep.subr.mxu0 0.0
    %1291 = vmatpush1.msra.mxu0 0.0
    %1292 = vmatprep.subr.mxu0 0.0
    %1293 = vmatpush1.msra.mxu0 0.0
    %1294 = vmatprep.subr.mxu0 0.0
    %1295 = vmatpush1.msra.mxu0 %v1259
    %1296 = vmatprep.subr.mxu0 0.0
    %1297 = vmatpush2.msra.mxu0 0.0
    %1298 = vmatprep.subr.mxu0 0.0
    %1299 = vmatpush2.msra.mxu0 0.0
    %1300 = vmatprep.subr.mxu0 0.0
    %1301 = vmatpush2.msra.mxu0 0.0
    %1302 = vmatprep.subr.mxu0 0.0
    %1303 = vmatpush2.msra.mxu0 0.0
    %1304 = vmatprep.subr.mxu0 0.0
    %1305 = vmatpush2.msra.mxu0 0.0
    %1306 = vmatprep.subr.mxu0 0.0
    %1307 = vmatpush2.msra.mxu0 0.0
    %1308 = vmatprep.subr.mxu0 0.0
    %1309 = vmatpush2.msra.mxu0 0.0
    %1310 = vmatprep.subr.mxu0 0.0
    %1311 = vmatpush2.msra.mxu0 0.0
    %1312 = vmatprep.subr.mxu0 0.0
    %1313 = vmatpush2.msra.mxu0 0.0
    %1314 = vmatprep.subr.mxu0 0.0
    %1315 = vmatpush2.msra.mxu0 0.0
    %1316 = vmatprep.subr.mxu0 0.0
    %1317 = vmatpush2.msra.mxu0 0.0
    %1318 = vmatprep.subr.mxu0 0.0
    %1319 = vmatpush2.msra.mxu0 0.0
    %1320 = vmatprep.subr.mxu0 0.0
    %1321 = vmatpush2.msra.mxu0 0.0
    %1322 = vmatprep.subr.mxu0 0.0
    %1323 = vmatpush2.msra.mxu0 0.0
    %1324 = vmatprep.subr.mxu0 0.0
    %1325 = vmatpush2.msra.mxu0 0.0
    %1326 = vmatprep.subr.mxu0 0.0
    %1327 = vmatpush2.msra.mxu0 0.0
    %1328 = vmatprep.mubr.f32.mxu0 0.0
    %1329 = vmatmul.mubr.f32.gmra.mxu0 %v1262
    %v1330 = vpop.f32.mrf.mxu0
    %v1331 = vadd.f32 0.0, %v1330
    %v1332 = vpop.f32.mrf.mxu0
    %1333 = vdwg.mxu0
    %v1334 = vpack.c.bf16 %v1331, %v1331
    %v1336 = vsel %vm535, %v1334, 0
    %1338 = vmatprep.subr.bf16.mxu0 0
    %1339 = vmatpush1.bf16.msra.mxu0 0
    %1340 = vmatprep.subr.bf16.mxu0 0
    %1341 = vmatpush1.bf16.msra.mxu0 0
    %1342 = vmatprep.subr.bf16.mxu0 0
    %1343 = vmatpush1.bf16.msra.mxu0 0
    %1344 = vmatprep.subr.bf16.mxu0 0
    %1345 = vmatpush1.bf16.msra.mxu0 0
    %1346 = vmatprep.subr.bf16.mxu0 0
    %1347 = vmatpush1.bf16.msra.mxu0 %v888
    %1348 = vmatprep.subr.bf16.mxu0 0
    %1349 = vmatpush1.bf16.msra.mxu0 %v887
    %1350 = vmatprep.subr.bf16.mxu0 0
    %1351 = vmatpush1.bf16.msra.mxu0 %v886
    %1352 = vmatprep.subr.bf16.mxu0 0
    %1353 = vmatpush1.bf16.msra.mxu0 %v885
    %1354 = vmatprep.subr.bf16.mxu0 0
    %1355 = vmatpush2.bf16.msra.mxu0 0
    %1356 = vmatprep.subr.bf16.mxu0 0
    %1357 = vmatpush2.bf16.msra.mxu0 0
    %1358 = vmatprep.subr.bf16.mxu0 0
    %1359 = vmatpush2.bf16.msra.mxu0 0
    %1360 = vmatprep.subr.bf16.mxu0 0
    %1361 = vmatpush2.bf16.msra.mxu0 0
    %1362 = vmatprep.subr.bf16.mxu0 0
    %1363 = vmatpush2.bf16.msra.mxu0 0
    %1364 = vmatprep.subr.bf16.mxu0 0
    %1365 = vmatpush2.bf16.msra.mxu0 0
    %1366 = vmatprep.subr.bf16.mxu0 0
    %1367 = vmatpush2.bf16.msra.mxu0 0
    %1368 = vmatprep.subr.bf16.mxu0 0
    %1369 = vmatpush2.bf16.msra.mxu0 0
    %1370 = vmatprep.mubr.bf16.mxu0 0
    %1371 = vmatmul.mubr.bf16.gmra.mxu0 %v1336
    %v1372 = vpop.f32.mrf.mxu0
    %v1373 = vadd.f32 0.0, %v1372
    %v1374 = vpop.f32.mrf.mxu0
    %v1375 = vpop.f32.mrf.mxu0
    %v1376 = vpop.f32.mrf.mxu0
    %1377 = vdwg.mxu0
    %v1379 = vsel %vm535, %v1165, 0
    %1381 = vmatprep.subr.bf16.mxu0 0
    %1382 = vmatpush1.bf16.msra.mxu0 0
    %1383 = vmatprep.subr.bf16.mxu0 0
    %1384 = vmatpush1.bf16.msra.mxu0 0
    %1385 = vmatprep.subr.bf16.mxu0 0
    %1386 = vmatpush1.bf16.msra.mxu0 0
    %1387 = vmatprep.subr.bf16.mxu0 0
    %1388 = vmatpush1.bf16.msra.mxu0 0
    %1389 = vmatprep.subr.bf16.mxu0 0
    %1390 = vmatpush1.bf16.msra.mxu0 %v955
    %1391 = vmatprep.subr.bf16.mxu0 0
    %1392 = vmatpush1.bf16.msra.mxu0 %v954
    %1393 = vmatprep.subr.bf16.mxu0 0
    %1394 = vmatpush1.bf16.msra.mxu0 %v953
    %1395 = vmatprep.subr.bf16.mxu0 0
    %1396 = vmatpush1.bf16.msra.mxu0 %v952
    %1397 = vmatprep.subr.bf16.mxu0 0
    %1398 = vmatpush2.bf16.msra.mxu0 0
    %1399 = vmatprep.subr.bf16.mxu0 0
    %1400 = vmatpush2.bf16.msra.mxu0 0
    %1401 = vmatprep.subr.bf16.mxu0 0
    %1402 = vmatpush2.bf16.msra.mxu0 0
    %1403 = vmatprep.subr.bf16.mxu0 0
    %1404 = vmatpush2.bf16.msra.mxu0 0
    %1405 = vmatprep.subr.bf16.mxu0 0
    %1406 = vmatpush2.bf16.msra.mxu0 0
    %1407 = vmatprep.subr.bf16.mxu0 0
    %1408 = vmatpush2.bf16.msra.mxu0 0
    %1409 = vmatprep.subr.bf16.mxu0 0
    %1410 = vmatpush2.bf16.msra.mxu0 0
    %1411 = vmatprep.subr.bf16.mxu0 0
    %1412 = vmatpush2.bf16.msra.mxu0 0
    %1413 = vmatprep.mubr.bf16.mxu0 0
    %1414 = vmatmul.mubr.bf16.gmra.mxu0 %v1379
    %v1415 = vpop.f32.mrf.mxu0
    %v1416 = vadd.f32 %v1373, %v1415
    %v1417 = vpop.f32.mrf.mxu0
    %v1418 = vpop.f32.mrf.mxu0
    %v1419 = vpop.f32.mrf.mxu0
    %1420 = vdwg.mxu0
    %v1421 = vld [vmem:[%s6] sm:$0x1]
    %v1423 = vlaneseq
    %v1424 = vshrl.u32 %v1423, 7
    %v1425 = vsub.s32 0, %v1424
    %v1426 = vrot.slane %v1421, %v1425
    %v1428 = vadd.f32 %v998, %v1426
    %v1429 = vadd.f32 %v1416, %v1426
    %v1430 = vadd.f32 %v226, %v1428
    %v1431 = vadd.f32 %v227, %v1429
    %v1432 = vld [vmem:[%s7] sm:$0x1]
    %v1433 = vld [vmem:[%s8] sm:$0x1]
    %1434 = vadd.xlane.f32.xlu0 %v1430
    %v1435 = vpop.xlane.xlu0 %1434
    %1436 = vadd.xlane.f32.xlu0 %v1431
    %v1437 = vpop.xlane.xlu0 %1436
    %v1438 = vmul.f32 %v1435, %v239
    %v1439 = vmul.f32 %v1437, %v239
    %v1440 = vsub.f32 %v1430, %v1438
    %v1441 = vsub.f32 %v1431, %v1439
    %v1442 = vmul.f32 %v1440, %v1440
    %v1443 = vmul.f32 %v1441, %v1441
    %1444 = vadd.xlane.f32.xlu0 %v1442
    %v1445 = vpop.xlane.xlu0 %1444
    %1446 = vadd.xlane.f32.xlu0 %v1443
    %v1447 = vpop.xlane.xlu0 %1446
    %v1448 = vmul.f32 %v1445, %v239
    %v1449 = vmul.f32 %v1447, %v239
    %v1450 = vadd.f32 %v1448, 1e-05
    %v1451 = vadd.f32 %v1449, 1e-05
    %v1452 = vrsqrt.pop %v1450
    %v1453 = vrsqrt.pop %v1451
    %v1454 = vmul.f32 %v1440, %v1452
    %v1455 = vmul.f32 %v1441, %v1453
    %v1457 = vlaneseq
    %v1458 = vshrl.u32 %v1457, 7
    %v1459 = vsub.s32 0, %v1458
    %v1460 = vrot.slane %v1432, %v1459
    %v1462 = vmul.f32 %v1454, %v1460
    %v1463 = vmul.f32 %v1455, %v1460
    %v1465 = vlaneseq
    %v1466 = vshrl.u32 %v1465, 7
    %v1467 = vsub.s32 0, %v1466
    %v1468 = vrot.slane %v1433, %v1467
    %v1470 = vadd.f32 %v1462, %v1468
    %v1471 = vadd.f32 %v1463, %v1468
    %v1472 = vpack.c.bf16 %v1471, %v1470
    %v1473 = vld [vmem:[#allocation5] sm:$0xff]
    %v1474 = vld [vmem:[#allocation5 + $0x8] sm:$0xff]
    %v1475 = vld [vmem:[#allocation5 + $0x10] sm:$0xff]
    %v1476 = vld [vmem:[#allocation5 + $0x18] sm:$0xff]
    %v1477 = vld [vmem:[#allocation5 + $0x20] sm:$0xff]
    %v1478 = vld [vmem:[#allocation5 + $0x28] sm:$0xff]
    %v1479 = vld [vmem:[#allocation5 + $0x30] sm:$0xff]
    %v1480 = vld [vmem:[#allocation5 + $0x38] sm:$0xff]
    %v1481 = vld [vmem:[#allocation5 + $0x40] sm:$0xff]
    %v1482 = vld [vmem:[#allocation5 + $0x48] sm:$0xff]
    %v1483 = vld [vmem:[#allocation5 + $0x50] sm:$0xff]
    %v1484 = vld [vmem:[#allocation5 + $0x58] sm:$0xff]
    %v1485 = vld [vmem:[#allocation5 + $0x60] sm:$0xff]
    %v1486 = vld [vmem:[#allocation5 + $0x68] sm:$0xff]
    %v1487 = vld [vmem:[#allocation5 + $0x70] sm:$0xff]
    %v1488 = vld [vmem:[#allocation5 + $0x78] sm:$0xff]
    %v1489 = vld [vmem:[#allocation5 + $0x80] sm:$0xff]
    %v1490 = vld [vmem:[#allocation5 + $0x88] sm:$0xff]
    %v1491 = vld [vmem:[#allocation5 + $0x90] sm:$0xff]
    %v1492 = vld [vmem:[#allocation5 + $0x98] sm:$0xff]
    %v1493 = vld [vmem:[#allocation5 + $0xa0] sm:$0xff]
    %v1494 = vld [vmem:[#allocation5 + $0xa8] sm:$0xff]
    %v1495 = vld [vmem:[#allocation5 + $0xb0] sm:$0xff]
    %v1496 = vld [vmem:[#allocation5 + $0xb8] sm:$0xff]
    %v1497 = vld [vmem:[#allocation5 + $0xc0] sm:$0xff]
    %v1498 = vld [vmem:[#allocation5 + $0xc8] sm:$0xff]
    %v1499 = vld [vmem:[#allocation5 + $0xd0] sm:$0xff]
    %v1500 = vld [vmem:[#allocation5 + $0xd8] sm:$0xff]
    %v1501 = vld [vmem:[#allocation5 + $0xe0] sm:$0xff]
    %v1502 = vld [vmem:[#allocation5 + $0xe8] sm:$0xff]
    %v1503 = vld [vmem:[#allocation5 + $0xf0] sm:$0xff]
    %v1504 = vld [vmem:[#allocation5 + $0xf8] sm:$0xff]
    %v1505 = vld [vmem:[%s10] sm:$0xf]
    %v1507 = vlaneseq
    %v1508 = vshrl.u32 %v1507, 7
    %v1509 = vsub.s32 0, %v1508
    %v1510 = vrot.slane %v1505, %v1509
    %v1511 = vlaneseq
    %v1512 = vshrl.u32 %v1511, 7
    %v1513 = vsub.s32 1, %v1512
    %v1514 = vrot.slane %v1505, %v1513
    %v1515 = vlaneseq
    %v1516 = vshrl.u32 %v1515, 7
    %v1517 = vsub.s32 2, %v1516
    %v1518 = vrot.slane %v1505, %v1517
    %v1519 = vlaneseq
    %v1520 = vshrl.u32 %v1519, 7
    %v1521 = vsub.s32 3, %v1520
    %v1522 = vrot.slane %v1505, %v1521
    %v1559 = vunpack.c.l.b16 %v1473
    %v1560 = vunpack.c.h.b16 %v1473
    %v1561 = vunpack.c.l.b16 %v1474
    %v1562 = vunpack.c.h.b16 %v1474
    %v1563 = vunpack.c.l.b16 %v1475
    %v1564 = vunpack.c.h.b16 %v1475
    %v1565 = vunpack.c.l.b16 %v1476
    %v1566 = vunpack.c.h.b16 %v1476
    %v1567 = vunpack.c.l.b16 %v1477
    %v1568 = vunpack.c.h.b16 %v1477
    %v1569 = vunpack.c.l.b16 %v1478
    %v1570 = vunpack.c.h.b16 %v1478
    %v1571 = vunpack.c.l.b16 %v1479
    %v1572 = vunpack.c.h.b16 %v1479
    %v1573 = vunpack.c.l.b16 %v1480
    %v1574 = vunpack.c.h.b16 %v1480
    %v1575 = vunpack.c.l.b16 %v1481
    %v1576 = vunpack.c.h.b16 %v1481
    %v1577 = vunpack.c.l.b16 %v1482
    %v1578 = vunpack.c.h.b16 %v1482
    %v1579 = vunpack.c.l.b16 %v1483
    %v1580 = vunpack.c.h.b16 %v1483
    %v1581 = vunpack.c.l.b16 %v1484
    %v1582 = vunpack.c.h.b16 %v1484
    %v1583 = vunpack.c.l.b16 %v1485
    %v1584 = vunpack.c.h.b16 %v1485
    %v1585 = vunpack.c.l.b16 %v1486
    %v1586 = vunpack.c.h.b16 %v1486
    %v1587 = vunpack.c.l.b16 %v1487
    %v1588 = vunpack.c.h.b16 %v1487
    %v1589 = vunpack.c.l.b16 %v1488
    %v1590 = vunpack.c.h.b16 %v1488
    %v1591 = vunpack.c.l.b16 %v1489
    %v1592 = vunpack.c.h.b16 %v1489
    %v1593 = vunpack.c.l.b16 %v1490
    %v1594 = vunpack.c.h.b16 %v1490
    %v1595 = vunpack.c.l.b16 %v1491
    %v1596 = vunpack.c.h.b16 %v1491
    %v1597 = vunpack.c.l.b16 %v1492
    %v1598 = vunpack.c.h.b16 %v1492
    %v1599 = vunpack.c.l.b16 %v1493
    %v1600 = vunpack.c.h.b16 %v1493
    %v1601 = vunpack.c.l.b16 %v1494
    %v1602 = vunpack.c.h.b16 %v1494
    %v1603 = vunpack.c.l.b16 %v1495
    %v1604 = vunpack.c.h.b16 %v1495
    %v1605 = vunpack.c.l.b16 %v1496
    %v1606 = vunpack.c.h.b16 %v1496
    %v1607 = vunpack.c.l.b16 %v1497
    %v1608 = vunpack.c.h.b16 %v1497
    %v1609 = vunpack.c.l.b16 %v1498
    %v1610 = vunpack.c.h.b16 %v1498
    %v1611 = vunpack.c.l.b16 %v1499
    %v1612 = vunpack.c.h.b16 %v1499
    %v1613 = vunpack.c.l.b16 %v1500
    %v1614 = vunpack.c.h.b16 %v1500
    %v1615 = vunpack.c.l.b16 %v1501
    %v1616 = vunpack.c.h.b16 %v1501
    %v1617 = vunpack.c.l.b16 %v1502
    %v1618 = vunpack.c.h.b16 %v1502
    %v1619 = vunpack.c.l.b16 %v1503
    %v1620 = vunpack.c.h.b16 %v1503
    %v1621 = vunpack.c.l.b16 %v1504
    %v1622 = vunpack.c.h.b16 %v1504
    %v1623 = vpack.c.b16 %v1563, %v1559
    %v1624 = vpack.c.b16 %v1564, %v1560
    %v1625 = vpack.c.b16 %v1565, %v1561
    %v1626 = vpack.c.b16 %v1566, %v1562
    %v1627 = vpack.c.b16 %v1571, %v1567
    %v1628 = vpack.c.b16 %v1572, %v1568
    %v1629 = vpack.c.b16 %v1573, %v1569
    %v1630 = vpack.c.b16 %v1574, %v1570
    %v1631 = vpack.c.b16 %v1579, %v1575
    %v1632 = vpack.c.b16 %v1580, %v1576
    %v1633 = vpack.c.b16 %v1581, %v1577
    %v1634 = vpack.c.b16 %v1582, %v1578
    %v1635 = vpack.c.b16 %v1587, %v1583
    %v1636 = vpack.c.b16 %v1588, %v1584
    %v1637 = vpack.c.b16 %v1589, %v1585
    %v1638 = vpack.c.b16 %v1590, %v1586
    %v1639 = vpack.c.b16 %v1595, %v1591
    %v1640 = vpack.c.b16 %v1596, %v1592
    %v1641 = vpack.c.b16 %v1597, %v1593
    %v1642 = vpack.c.b16 %v1598, %v1594
    %v1643 = vpack.c.b16 %v1603, %v1599
    %v1644 = vpack.c.b16 %v1604, %v1600
    %v1645 = vpack.c.b16 %v1605, %v1601
    %v1646 = vpack.c.b16 %v1606, %v1602
    %v1647 = vpack.c.b16 %v1611, %v1607
    %v1648 = vpack.c.b16 %v1612, %v1608
    %v1649 = vpack.c.b16 %v1613, %v1609
    %v1650 = vpack.c.b16 %v1614, %v1610
    %v1651 = vpack.c.b16 %v1619, %v1615
    %v1652 = vpack.c.b16 %v1620, %v1616
    %v1653 = vpack.c.b16 %v1621, %v1617
    %v1654 = vpack.c.b16 %v1622, %v1618
    %1687 = vmatprep.subr.bf16.mxu0 %v1652
    %1688 = vmatpush1.bf16.msra.mxu0 %v1651
    %1689 = vmatprep.subr.bf16.mxu0 %v1648
    %1690 = vmatpush1.bf16.msra.mxu0 %v1647
    %1691 = vmatprep.subr.bf16.mxu0 %v1644
    %1692 = vmatpush1.bf16.msra.mxu0 %v1643
    %1693 = vmatprep.subr.bf16.mxu0 %v1640
    %1694 = vmatpush1.bf16.msra.mxu0 %v1639
    %1695 = vmatprep.subr.bf16.mxu0 %v1636
    %1696 = vmatpush1.bf16.msra.mxu0 %v1635
    %1697 = vmatprep.subr.bf16.mxu0 %v1632
    %1698 = vmatpush1.bf16.msra.mxu0 %v1631
    %1699 = vmatprep.subr.bf16.mxu0 %v1628
    %1700 = vmatpush1.bf16.msra.mxu0 %v1627
    %1701 = vmatprep.subr.bf16.mxu0 %v1624
    %1702 = vmatpush1.bf16.msra.mxu0 %v1623
    %1703 = vmatprep.subr.bf16.mxu0 0
    %1704 = vmatpush2.bf16.msra.mxu0 0
    %1705 = vmatprep.subr.bf16.mxu0 0
    %1706 = vmatpush2.bf16.msra.mxu0 0
    %1707 = vmatprep.subr.bf16.mxu0 0
    %1708 = vmatpush2.bf16.msra.mxu0 0
    %1709 = vmatprep.subr.bf16.mxu0 0
    %1710 = vmatpush2.bf16.msra.mxu0 0
    %1711 = vmatprep.subr.bf16.mxu0 0
    %1712 = vmatpush2.bf16.msra.mxu0 0
    %1713 = vmatprep.subr.bf16.mxu0 0
    %1714 = vmatpush2.bf16.msra.mxu0 0
    %1715 = vmatprep.subr.bf16.mxu0 0
    %1716 = vmatpush2.bf16.msra.mxu0 0
    %1717 = vmatprep.subr.bf16.mxu0 0
    %1718 = vmatpush2.bf16.msra.mxu0 0
    %1719 = vmatprep.mubr.bf16.mxu0 0
    %1720 = vmatmul.mubr.bf16.gmra.mxu0 %v1472
    %v1721 = vpop.f32.mrf.mxu0
    %v1722 = vadd.f32 %v1510, %v1721
    %v1723 = vpop.f32.mrf.mxu0
    %v1724 = vadd.f32 %v1514, %v1723
    %v1725 = vpop.f32.mrf.mxu0
    %v1726 = vadd.f32 %v1510, %v1725
    %v1727 = vpop.f32.mrf.mxu0
    %v1728 = vadd.f32 %v1514, %v1727
    %1729 = vdwg.mxu0
    %1730 = vmatprep.subr.bf16.mxu0 %v1654
    %1731 = vmatpush1.bf16.msra.mxu0 %v1653
    %1732 = vmatprep.subr.bf16.mxu0 %v1650
    %1733 = vmatpush1.bf16.msra.mxu0 %v1649
    %1734 = vmatprep.subr.bf16.mxu0 %v1646
    %1735 = vmatpush1.bf16.msra.mxu0 %v1645
    %1736 = vmatprep.subr.bf16.mxu0 %v1642
    %1737 = vmatpush1.bf16.msra.mxu0 %v1641
    %1738 = vmatprep.subr.bf16.mxu0 %v1638
    %1739 = vmatpush1.bf16.msra.mxu0 %v1637
    %1740 = vmatprep.subr.bf16.mxu0 %v1634
    %1741 = vmatpush1.bf16.msra.mxu0 %v1633
    %1742 = vmatprep.subr.bf16.mxu0 %v1630
    %1743 = vmatpush1.bf16.msra.mxu0 %v1629
    %1744 = vmatprep.subr.bf16.mxu0 %v1626
    %1745 = vmatpush1.bf16.msra.mxu0 %v1625
    %1746 = vmatprep.subr.bf16.mxu0 0
    %1747 = vmatpush2.bf16.msra.mxu0 0
    %1748 = vmatprep.subr.bf16.mxu0 0
    %1749 = vmatpush2.bf16.msra.mxu0 0
    %1750 = vmatprep.subr.bf16.mxu0 0
    %1751 = vmatpush2.bf16.msra.mxu0 0
    %1752 = vmatprep.subr.bf16.mxu0 0
    %1753 = vmatpush2.bf16.msra.mxu0 0
    %1754 = vmatprep.subr.bf16.mxu0 0
    %1755 = vmatpush2.bf16.msra.mxu0 0
    %1756 = vmatprep.subr.bf16.mxu0 0
    %1757 = vmatpush2.bf16.msra.mxu0 0
    %1758 = vmatprep.subr.bf16.mxu0 0
    %1759 = vmatpush2.bf16.msra.mxu0 0
    %1760 = vmatprep.subr.bf16.mxu0 0
    %1761 = vmatpush2.bf16.msra.mxu0 0
    %1762 = vmatprep.mubr.bf16.mxu0 0
    %1763 = vmatmul.mubr.bf16.gmra.mxu0 %v1472
    %v1764 = vpop.f32.mrf.mxu0
    %v1765 = vadd.f32 %v1518, %v1764
    %v1766 = vpop.f32.mrf.mxu0
    %v1767 = vadd.f32 %v1522, %v1766
    %v1768 = vpop.f32.mrf.mxu0
    %v1769 = vadd.f32 %v1518, %v1768
    %v1770 = vpop.f32.mrf.mxu0
    %v1771 = vadd.f32 %v1522, %v1770
    %1772 = vdwg.mxu0
    %v1773 = vmax.f32 %v1722, 0.0
    %v1774 = vmax.f32 %v1724, 0.0
    %v1775 = vmax.f32 %v1765, 0.0
    %v1776 = vmax.f32 %v1767, 0.0
    %v1777 = vmax.f32 %v1726, 0.0
    %v1778 = vmax.f32 %v1728, 0.0
    %v1779 = vmax.f32 %v1769, 0.0
    %v1780 = vmax.f32 %v1771, 0.0
    %v1781 = vpack.c.bf16 %v1777, %v1773
    %v1782 = vpack.c.bf16 %v1778, %v1774
    %v1783 = vpack.c.bf16 %v1779, %v1775
    %v1784 = vpack.c.bf16 %v1780, %v1776
    %v1785 = vld [vmem:[#allocation7] sm:$0xf]
    %v1786 = vld [vmem:[#allocation7 + $0x4] sm:$0xf]
    %v1787 = vld [vmem:[#allocation7 + $0x8] sm:$0xf]
    %v1788 = vld [vmem:[#allocation7 + $0xc] sm:$0xf]
    %v1789 = vld [vmem:[#allocation7 + $0x10] sm:$0xf]
    %v1790 = vld [vmem:[#allocation7 + $0x14] sm:$0xf]
    %v1791 = vld [vmem:[#allocation7 + $0x18] sm:$0xf]
    %v1792 = vld [vmem:[#allocation7 + $0x1c] sm:$0xf]
    %v1793 = vld [vmem:[#allocation7 + $0x20] sm:$0xf]
    %v1794 = vld [vmem:[#allocation7 + $0x24] sm:$0xf]
    %v1795 = vld [vmem:[#allocation7 + $0x28] sm:$0xf]
    %v1796 = vld [vmem:[#allocation7 + $0x2c] sm:$0xf]
    %v1797 = vld [vmem:[#allocation7 + $0x30] sm:$0xf]
    %v1798 = vld [vmem:[#allocation7 + $0x34] sm:$0xf]
    %v1799 = vld [vmem:[#allocation7 + $0x38] sm:$0xf]
    %v1800 = vld [vmem:[#allocation7 + $0x3c] sm:$0xf]
    %v1801 = vld [vmem:[#allocation7 + $0x40] sm:$0xf]
    %v1802 = vld [vmem:[#allocation7 + $0x44] sm:$0xf]
    %v1803 = vld [vmem:[#allocation7 + $0x48] sm:$0xf]
    %v1804 = vld [vmem:[#allocation7 + $0x4c] sm:$0xf]
    %v1805 = vld [vmem:[#allocation7 + $0x50] sm:$0xf]
    %v1806 = vld [vmem:[#allocation7 + $0x54] sm:$0xf]
    %v1807 = vld [vmem:[#allocation7 + $0x58] sm:$0xf]
    %v1808 = vld [vmem:[#allocation7 + $0x5c] sm:$0xf]
    %v1809 = vld [vmem:[#allocation7 + $0x60] sm:$0xf]
    %v1810 = vld [vmem:[#allocation7 + $0x64] sm:$0xf]
    %v1811 = vld [vmem:[#allocation7 + $0x68] sm:$0xf]
    %v1812 = vld [vmem:[#allocation7 + $0x6c] sm:$0xf]
    %v1813 = vld [vmem:[#allocation7 + $0x70] sm:$0xf]
    %v1814 = vld [vmem:[#allocation7 + $0x74] sm:$0xf]
    %v1815 = vld [vmem:[#allocation7 + $0x78] sm:$0xf]
    %v1816 = vld [vmem:[#allocation7 + $0x7c] sm:$0xf]
    %v1817 = vld [vmem:[#allocation7 + $0x80] sm:$0xf]
    %v1818 = vld [vmem:[#allocation7 + $0x84] sm:$0xf]
    %v1819 = vld [vmem:[#allocation7 + $0x88] sm:$0xf]
    %v1820 = vld [vmem:[#allocation7 + $0x8c] sm:$0xf]
    %v1821 = vld [vmem:[#allocation7 + $0x90] sm:$0xf]
    %v1822 = vld [vmem:[#allocation7 + $0x94] sm:$0xf]
    %v1823 = vld [vmem:[#allocation7 + $0x98] sm:$0xf]
    %v1824 = vld [vmem:[#allocation7 + $0x9c] sm:$0xf]
    %v1825 = vld [vmem:[#allocation7 + $0xa0] sm:$0xf]
    %v1826 = vld [vmem:[#allocation7 + $0xa4] sm:$0xf]
    %v1827 = vld [vmem:[#allocation7 + $0xa8] sm:$0xf]
    %v1828 = vld [vmem:[#allocation7 + $0xac] sm:$0xf]
    %v1829 = vld [vmem:[#allocation7 + $0xb0] sm:$0xf]
    %v1830 = vld [vmem:[#allocation7 + $0xb4] sm:$0xf]
    %v1831 = vld [vmem:[#allocation7 + $0xb8] sm:$0xf]
    %v1832 = vld [vmem:[#allocation7 + $0xbc] sm:$0xf]
    %v1833 = vld [vmem:[#allocation7 + $0xc0] sm:$0xf]
    %v1834 = vld [vmem:[#allocation7 + $0xc4] sm:$0xf]
    %v1835 = vld [vmem:[#allocation7 + $0xc8] sm:$0xf]
    %v1836 = vld [vmem:[#allocation7 + $0xcc] sm:$0xf]
    %v1837 = vld [vmem:[#allocation7 + $0xd0] sm:$0xf]
    %v1838 = vld [vmem:[#allocation7 + $0xd4] sm:$0xf]
    %v1839 = vld [vmem:[#allocation7 + $0xd8] sm:$0xf]
    %v1840 = vld [vmem:[#allocation7 + $0xdc] sm:$0xf]
    %v1841 = vld [vmem:[#allocation7 + $0xe0] sm:$0xf]
    %v1842 = vld [vmem:[#allocation7 + $0xe4] sm:$0xf]
    %v1843 = vld [vmem:[#allocation7 + $0xe8] sm:$0xf]
    %v1844 = vld [vmem:[#allocation7 + $0xec] sm:$0xf]
    %v1845 = vld [vmem:[#allocation7 + $0xf0] sm:$0xf]
    %v1846 = vld [vmem:[#allocation7 + $0xf4] sm:$0xf]
    %v1847 = vld [vmem:[#allocation7 + $0xf8] sm:$0xf]
    %v1848 = vld [vmem:[#allocation7 + $0xfc] sm:$0xf]
    %v1849 = vld [vmem:[%s12] sm:$0x1]
    %v1851 = vlaneseq
    %v1852 = vshrl.u32 %v1851, 7
    %v1853 = vsub.s32 0, %v1852
    %v1854 = vrot.slane %v1849, %v1853
    %v1920 = vunpack.c.l.b16 %v1785
    %v1921 = vunpack.c.l.b16 %v1786
    %v1922 = vunpack.c.l.b16 %v1787
    %v1923 = vunpack.c.l.b16 %v1788
    %v1924 = vunpack.c.l.b16 %v1789
    %v1925 = vunpack.c.l.b16 %v1790
    %v1926 = vunpack.c.l.b16 %v1791
    %v1927 = vunpack.c.l.b16 %v1792
    %v1928 = vunpack.c.l.b16 %v1793
    %v1929 = vunpack.c.l.b16 %v1794
    %v1930 = vunpack.c.l.b16 %v1795
    %v1931 = vunpack.c.l.b16 %v1796
    %v1932 = vunpack.c.l.b16 %v1797
    %v1933 = vunpack.c.l.b16 %v1798
    %v1934 = vunpack.c.l.b16 %v1799
    %v1935 = vunpack.c.l.b16 %v1800
    %v1936 = vunpack.c.l.b16 %v1801
    %v1937 = vunpack.c.l.b16 %v1802
    %v1938 = vunpack.c.l.b16 %v1803
    %v1939 = vunpack.c.l.b16 %v1804
    %v1940 = vunpack.c.l.b16 %v1805
    %v1941 = vunpack.c.l.b16 %v1806
    %v1942 = vunpack.c.l.b16 %v1807
    %v1943 = vunpack.c.l.b16 %v1808
    %v1944 = vunpack.c.l.b16 %v1809
    %v1945 = vunpack.c.l.b16 %v1810
    %v1946 = vunpack.c.l.b16 %v1811
    %v1947 = vunpack.c.l.b16 %v1812
    %v1948 = vunpack.c.l.b16 %v1813
    %v1949 = vunpack.c.l.b16 %v1814
    %v1950 = vunpack.c.l.b16 %v1815
    %v1951 = vunpack.c.l.b16 %v1816
    %v1952 = vunpack.c.l.b16 %v1817
    %v1953 = vunpack.c.l.b16 %v1818
    %v1954 = vunpack.c.l.b16 %v1819
    %v1955 = vunpack.c.l.b16 %v1820
    %v1956 = vunpack.c.l.b16 %v1821
    %v1957 = vunpack.c.l.b16 %v1822
    %v1958 = vunpack.c.l.b16 %v1823
    %v1959 = vunpack.c.l.b16 %v1824
    %v1960 = vunpack.c.l.b16 %v1825
    %v1961 = vunpack.c.l.b16 %v1826
    %v1962 = vunpack.c.l.b16 %v1827
    %v1963 = vunpack.c.l.b16 %v1828
    %v1964 = vunpack.c.l.b16 %v1829
    %v1965 = vunpack.c.l.b16 %v1830
    %v1966 = vunpack.c.l.b16 %v1831
    %v1967 = vunpack.c.l.b16 %v1832
    %v1968 = vunpack.c.l.b16 %v1833
    %v1969 = vunpack.c.l.b16 %v1834
    %v1970 = vunpack.c.l.b16 %v1835
    %v1971 = vunpack.c.l.b16 %v1836
    %v1972 = vunpack.c.l.b16 %v1837
    %v1973 = vunpack.c.l.b16 %v1838
    %v1974 = vunpack.c.l.b16 %v1839
    %v1975 = vunpack.c.l.b16 %v1840
    %v1976 = vunpack.c.l.b16 %v1841
    %v1977 = vunpack.c.l.b16 %v1842
    %v1978 = vunpack.c.l.b16 %v1843
    %v1979 = vunpack.c.l.b16 %v1844
    %v1980 = vunpack.c.l.b16 %v1845
    %v1981 = vunpack.c.l.b16 %v1846
    %v1982 = vunpack.c.l.b16 %v1847
    %v1983 = vunpack.c.l.b16 %v1848
    %v1984 = vpack.c.b16 %v1921, %v1920
    %v1985 = vpack.c.b16 %v1923, %v1922
    %v1986 = vpack.c.b16 %v1925, %v1924
    %v1987 = vpack.c.b16 %v1927, %v1926
    %v1988 = vpack.c.b16 %v1929, %v1928
    %v1989 = vpack.c.b16 %v1931, %v1930
    %v1990 = vpack.c.b16 %v1933, %v1932
    %v1991 = vpack.c.b16 %v1935, %v1934
    %v1992 = vpack.c.b16 %v1937, %v1936
    %v1993 = vpack.c.b16 %v1939, %v1938
    %v1994 = vpack.c.b16 %v1941, %v1940
    %v1995 = vpack.c.b16 %v1943, %v1942
    %v1996 = vpack.c.b16 %v1945, %v1944
    %v1997 = vpack.c.b16 %v1947, %v1946
    %v1998 = vpack.c.b16 %v1949, %v1948
    %v1999 = vpack.c.b16 %v1951, %v1950
    %v2000 = vpack.c.b16 %v1953, %v1952
    %v2001 = vpack.c.b16 %v1955, %v1954
    %v2002 = vpack.c.b16 %v1957, %v1956
    %v2003 = vpack.c.b16 %v1959, %v1958
    %v2004 = vpack.c.b16 %v1961, %v1960
    %v2005 = vpack.c.b16 %v1963, %v1962
    %v2006 = vpack.c.b16 %v1965, %v1964
    %v2007 = vpack.c.b16 %v1967, %v1966
    %v2008 = vpack.c.b16 %v1969, %v1968
    %v2009 = vpack.c.b16 %v1971, %v1970
    %v2010 = vpack.c.b16 %v1973, %v1972
    %v2011 = vpack.c.b16 %v1975, %v1974
    %v2012 = vpack.c.b16 %v1977, %v1976
    %v2013 = vpack.c.b16 %v1979, %v1978
    %v2014 = vpack.c.b16 %v1981, %v1980
    %v2015 = vpack.c.b16 %v1983, %v1982
    %2048 = vmatprep.subr.bf16.mxu0 0
    %2049 = vmatpush1.bf16.msra.mxu0 %v1991
    %2050 = vmatprep.subr.bf16.mxu0 0
    %2051 = vmatpush1.bf16.msra.mxu0 %v1990
    %2052 = vmatprep.subr.bf16.mxu0 0
    %2053 = vmatpush1.bf16.msra.mxu0 %v1989
    %2054 = vmatprep.subr.bf16.mxu0 0
    %2055 = vmatpush1.bf16.msra.mxu0 %v1988
    %2056 = vmatprep.subr.bf16.mxu0 0
    %2057 = vmatpush1.bf16.msra.mxu0 %v1987
    %2058 = vmatprep.subr.bf16.mxu0 0
    %2059 = vmatpush1.bf16.msra.mxu0 %v1986
    %2060 = vmatprep.subr.bf16.mxu0 0
    %2061 = vmatpush1.bf16.msra.mxu0 %v1985
    %2062 = vmatprep.subr.bf16.mxu0 0
    %2063 = vmatpush1.bf16.msra.mxu0 %v1984
    %2064 = vmatprep.subr.bf16.mxu0 0
    %2065 = vmatpush2.bf16.msra.mxu0 %v1999
    %2066 = vmatprep.subr.bf16.mxu0 0
    %2067 = vmatpush2.bf16.msra.mxu0 %v1998
    %2068 = vmatprep.subr.bf16.mxu0 0
    %2069 = vmatpush2.bf16.msra.mxu0 %v1997
    %2070 = vmatprep.subr.bf16.mxu0 0
    %2071 = vmatpush2.bf16.msra.mxu0 %v1996
    %2072 = vmatprep.subr.bf16.mxu0 0
    %2073 = vmatpush2.bf16.msra.mxu0 %v1995
    %2074 = vmatprep.subr.bf16.mxu0 0
    %2075 = vmatpush2.bf16.msra.mxu0 %v1994
    %2076 = vmatprep.subr.bf16.mxu0 0
    %2077 = vmatpush2.bf16.msra.mxu0 %v1993
    %2078 = vmatprep.subr.bf16.mxu0 0
    %2079 = vmatpush2.bf16.msra.mxu0 %v1992
    %2080 = vmatprep.mubr.bf16.mxu0 %v1782
    %2081 = vmatmul.mubr.bf16.gmra.mxu0 %v1781
    %v2082 = vpop.f32.mrf.mxu0
    %v2083 = vadd.f32 %v1854, %v2082
    %v2084 = vpop.f32.mrf.mxu0
    %v2085 = vpop.f32.mrf.mxu0
    %v2086 = vadd.f32 %v1854, %v2085
    %v2087 = vpop.f32.mrf.mxu0
    %2088 = vdwg.mxu0
    %2089 = vmatprep.subr.bf16.mxu0 0
    %2090 = vmatpush1.bf16.msra.mxu0 %v2007
    %2091 = vmatprep.subr.bf16.mxu0 0
    %2092 = vmatpush1.bf16.msra.mxu0 %v2006
    %2093 = vmatprep.subr.bf16.mxu0 0
    %2094 = vmatpush1.bf16.msra.mxu0 %v2005
    %2095 = vmatprep.subr.bf16.mxu0 0
    %2096 = vmatpush1.bf16.msra.mxu0 %v2004
    %2097 = vmatprep.subr.bf16.mxu0 0
    %2098 = vmatpush1.bf16.msra.mxu0 %v2003
    %2099 = vmatprep.subr.bf16.mxu0 0
    %2100 = vmatpush1.bf16.msra.mxu0 %v2002
    %2101 = vmatprep.subr.bf16.mxu0 0
    %2102 = vmatpush1.bf16.msra.mxu0 %v2001
    %2103 = vmatprep.subr.bf16.mxu0 0
    %2104 = vmatpush1.bf16.msra.mxu0 %v2000
    %2105 = vmatprep.subr.bf16.mxu0 0
    %2106 = vmatpush2.bf16.msra.mxu0 %v2015
    %2107 = vmatprep.subr.bf16.mxu0 0
    %2108 = vmatpush2.bf16.msra.mxu0 %v2014
    %2109 = vmatprep.subr.bf16.mxu0 0
    %2110 = vmatpush2.bf16.msra.mxu0 %v2013
    %2111 = vmatprep.subr.bf16.mxu0 0
    %2112 = vmatpush2.bf16.msra.mxu0 %v2012
    %2113 = vmatprep.subr.bf16.mxu0 0
    %2114 = vmatpush2.bf16.msra.mxu0 %v2011
    %2115 = vmatprep.subr.bf16.mxu0 0
    %2116 = vmatpush2.bf16.msra.mxu0 %v2010
    %2117 = vmatprep.subr.bf16.mxu0 0
    %2118 = vmatpush2.bf16.msra.mxu0 %v2009
    %2119 = vmatprep.subr.bf16.mxu0 0
    %2120 = vmatpush2.bf16.msra.mxu0 %v2008
    %2121 = vmatprep.mubr.bf16.mxu0 %v1784
    %2122 = vmatmul.mubr.bf16.gmra.mxu0 %v1783
    %v2123 = vpop.f32.mrf.mxu0
    %v2124 = vadd.f32 %v2083, %v2123
    %v2125 = vpop.f32.mrf.mxu0
    %v2126 = vpop.f32.mrf.mxu0
    %v2127 = vadd.f32 %v2086, %v2126
    %v2128 = vpop.f32.mrf.mxu0
    %2129 = vdwg.mxu0
    %v2130 = vadd.f32 %v1430, %v2124
    %v2131 = vadd.f32 %v1431, %v2127
    %v2132 = vld [vmem:[%s13] sm:$0x1]
    %v2133 = vld [vmem:[%s14] sm:$0x1]
    %2134 = vadd.xlane.f32.xlu0 %v2130
    %v2135 = vpop.xlane.xlu0 %2134
    %2136 = vadd.xlane.f32.xlu0 %v2131
    %v2137 = vpop.xlane.xlu0 %2136
    %v2138 = vmul.f32 %v2135, %v239
    %v2139 = vmul.f32 %v2137, %v239
    %v2140 = vsub.f32 %v2130, %v2138
    %v2141 = vsub.f32 %v2131, %v2139
    %v2142 = vmul.f32 %v2140, %v2140
    %v2143 = vmul.f32 %v2141, %v2141
    %2144 = vadd.xlane.f32.xlu0 %v2142
    %v2145 = vpop.xlane.xlu0 %2144
    %2146 = vadd.xlane.f32.xlu0 %v2143
    %v2147 = vpop.xlane.xlu0 %2146
    %v2148 = vmul.f32 %v2145, %v239
    %v2149 = vmul.f32 %v2147, %v239
    %v2150 = vadd.f32 %v2148, 1e-05
    %v2151 = vadd.f32 %v2149, 1e-05
    %v2152 = vrsqrt.pop %v2150
    %v2153 = vrsqrt.pop %v2151
    %v2154 = vmul.f32 %v2140, %v2152
    %v2155 = vmul.f32 %v2141, %v2153
    %v2157 = vlaneseq
    %v2158 = vshrl.u32 %v2157, 7
    %v2159 = vsub.s32 0, %v2158
    %v2160 = vrot.slane %v2132, %v2159
    %v2162 = vmul.f32 %v2154, %v2160
    %v2163 = vmul.f32 %v2155, %v2160
    %v2165 = vlaneseq
    %v2166 = vshrl.u32 %v2165, 7
    %v2167 = vsub.s32 0, %v2166
    %v2168 = vrot.slane %v2133, %v2167
    %v2170 = vadd.f32 %v2162, %v2168
    %v2171 = vadd.f32 %v2163, %v2168
    %v2172 = vpack.c.bf16 %v2171, %v2170
    %v2173 = vld [vmem:[#allocation8] sm:$0xff]
    %v2174 = vld [vmem:[#allocation8 + $0x8] sm:$0xf]
    %v2175 = vld [vmem:[#allocation8 + $0xc] sm:$0xff]
    %v2176 = vld [vmem:[#allocation8 + $0x14] sm:$0xf]
    %v2177 = vld [vmem:[#allocation8 + $0x18] sm:$0xff]
    %v2178 = vld [vmem:[#allocation8 + $0x20] sm:$0xf]
    %v2179 = vld [vmem:[#allocation8 + $0x24] sm:$0xff]
    %v2180 = vld [vmem:[#allocation8 + $0x2c] sm:$0xf]
    %v2181 = vld [vmem:[#allocation8 + $0x30] sm:$0xff]
    %v2182 = vld [vmem:[#allocation8 + $0x38] sm:$0xf]
    %v2183 = vld [vmem:[#allocation8 + $0x3c] sm:$0xff]
    %v2184 = vld [vmem:[#allocation8 + $0x44] sm:$0xf]
    %v2185 = vld [vmem:[#allocation8 + $0x48] sm:$0xff]
    %v2186 = vld [vmem:[#allocation8 + $0x50] sm:$0xf]
    %v2187 = vld [vmem:[#allocation8 + $0x54] sm:$0xff]
    %v2188 = vld [vmem:[#allocation8 + $0x5c] sm:$0xf]
    %v2189 = vld [vmem:[#allocation8 + $0x60] sm:$0xff]
    %v2190 = vld [vmem:[#allocation8 + $0x68] sm:$0xf]
    %v2191 = vld [vmem:[#allocation8 + $0x6c] sm:$0xff]
    %v2192 = vld [vmem:[#allocation8 + $0x74] sm:$0xf]
    %v2193 = vld [vmem:[#allocation8 + $0x78] sm:$0xff]
    %v2194 = vld [vmem:[#allocation8 + $0x80] sm:$0xf]
    %v2195 = vld [vmem:[#allocation8 + $0x84] sm:$0xff]
    %v2196 = vld [vmem:[#allocation8 + $0x8c] sm:$0xf]
    %v2197 = vld [vmem:[#allocation8 + $0x90] sm:$0xff]
    %v2198 = vld [vmem:[#allocation8 + $0x98] sm:$0xf]
    %v2199 = vld [vmem:[#allocation8 + $0x9c] sm:$0xff]
    %v2200 = vld [vmem:[#allocation8 + $0xa4] sm:$0xf]
    %v2201 = vld [vmem:[#allocation8 + $0xa8] sm:$0xff]
    %v2202 = vld [vmem:[#allocation8 + $0xb0] sm:$0xf]
    %v2203 = vld [vmem:[#allocation8 + $0xb4] sm:$0xff]
    %v2204 = vld [vmem:[#allocation8 + $0xbc] sm:$0xf]
    %v2237 = vunpack.c.l.b16 %v2173
    %v2238 = vunpack.c.h.b16 %v2173
    %v2239 = vunpack.c.l.b16 %v2174
    %v2240 = vunpack.c.l.b16 %v2175
    %v2241 = vunpack.c.h.b16 %v2175
    %v2242 = vunpack.c.l.b16 %v2176
    %v2243 = vunpack.c.l.b16 %v2177
    %v2244 = vunpack.c.h.b16 %v2177
    %v2245 = vunpack.c.l.b16 %v2178
    %v2246 = vunpack.c.l.b16 %v2179
    %v2247 = vunpack.c.h.b16 %v2179
    %v2248 = vunpack.c.l.b16 %v2180
    %v2249 = vunpack.c.l.b16 %v2181
    %v2250 = vunpack.c.h.b16 %v2181
    %v2251 = vunpack.c.l.b16 %v2182
    %v2252 = vunpack.c.l.b16 %v2183
    %v2253 = vunpack.c.h.b16 %v2183
    %v2254 = vunpack.c.l.b16 %v2184
    %v2255 = vunpack.c.l.b16 %v2185
    %v2256 = vunpack.c.h.b16 %v2185
    %v2257 = vunpack.c.l.b16 %v2186
    %v2258 = vunpack.c.l.b16 %v2187
    %v2259 = vunpack.c.h.b16 %v2187
    %v2260 = vunpack.c.l.b16 %v2188
    %v2261 = vunpack.c.l.b16 %v2189
    %v2262 = vunpack.c.h.b16 %v2189
    %v2263 = vunpack.c.l.b16 %v2190
    %v2264 = vunpack.c.l.b16 %v2191
    %v2265 = vunpack.c.h.b16 %v2191
    %v2266 = vunpack.c.l.b16 %v2192
    %v2267 = vunpack.c.l.b16 %v2193
    %v2268 = vunpack.c.h.b16 %v2193
    %v2269 = vunpack.c.l.b16 %v2194
    %v2270 = vunpack.c.l.b16 %v2195
    %v2271 = vunpack.c.h.b16 %v2195
    %v2272 = vunpack.c.l.b16 %v2196
    %v2273 = vunpack.c.l.b16 %v2197
    %v2274 = vunpack.c.h.b16 %v2197
    %v2275 = vunpack.c.l.b16 %v2198
    %v2276 = vunpack.c.l.b16 %v2199
    %v2277 = vunpack.c.h.b16 %v2199
    %v2278 = vunpack.c.l.b16 %v2200
    %v2279 = vunpack.c.l.b16 %v2201
    %v2280 = vunpack.c.h.b16 %v2201
    %v2281 = vunpack.c.l.b16 %v2202
    %v2282 = vunpack.c.l.b16 %v2203
    %v2283 = vunpack.c.h.b16 %v2203
    %v2284 = vunpack.c.l.b16 %v2204
    %v2285 = vpack.c.b16 %v2240, %v2237
    %v2286 = vpack.c.b16 %v2241, %v2238
    %v2287 = vpack.c.b16 %v2242, %v2239
    %v2288 = vpack.c.b16 %v2246, %v2243
    %v2289 = vpack.c.b16 %v2247, %v2244
    %v2290 = vpack.c.b16 %v2248, %v2245
    %v2291 = vpack.c.b16 %v2252, %v2249
    %v2292 = vpack.c.b16 %v2253, %v2250
    %v2293 = vpack.c.b16 %v2254, %v2251
    %v2294 = vpack.c.b16 %v2258, %v2255
    %v2295 = vpack.c.b16 %v2259, %v2256
    %v2296 = vpack.c.b16 %v2260, %v2257
    %v2297 = vpack.c.b16 %v2264, %v2261
    %v2298 = vpack.c.b16 %v2265, %v2262
    %v2299 = vpack.c.b16 %v2266, %v2263
    %v2300 = vpack.c.b16 %v2270, %v2267
    %v2301 = vpack.c.b16 %v2271, %v2268
    %v2302 = vpack.c.b16 %v2272, %v2269
    %v2303 = vpack.c.b16 %v2276, %v2273
    %v2304 = vpack.c.b16 %v2277, %v2274
    %v2305 = vpack.c.b16 %v2278, %v2275
    %v2306 = vpack.c.b16 %v2282, %v2279
    %v2307 = vpack.c.b16 %v2283, %v2280
    %v2308 = vpack.c.b16 %v2284, %v2281
    %2333 = vmatprep.subr.bf16.mxu0 %v2307
    %2334 = vmatpush1.bf16.msra.mxu0 %v2306
    %2335 = vmatprep.subr.bf16.mxu0 %v2304
    %2336 = vmatpush1.bf16.msra.mxu0 %v2303
    %2337 = vmatprep.subr.bf16.mxu0 %v2301
    %2338 = vmatpush1.bf16.msra.mxu0 %v2300
    %2339 = vmatprep.subr.bf16.mxu0 %v2298
    %2340 = vmatpush1.bf16.msra.mxu0 %v2297
    %2341 = vmatprep.subr.bf16.mxu0 %v2295
    %2342 = vmatpush1.bf16.msra.mxu0 %v2294
    %2343 = vmatprep.subr.bf16.mxu0 %v2292
    %2344 = vmatpush1.bf16.msra.mxu0 %v2291
    %2345 = vmatprep.subr.bf16.mxu0 %v2289
    %2346 = vmatpush1.bf16.msra.mxu0 %v2288
    %2347 = vmatprep.subr.bf16.mxu0 %v2286
    %2348 = vmatpush1.bf16.msra.mxu0 %v2285
    %2349 = vmatprep.subr.bf16.mxu0 0
    %2350 = vmatpush2.bf16.msra.mxu0 0
    %2351 = vmatprep.subr.bf16.mxu0 0
    %2352 = vmatpush2.bf16.msra.mxu0 0
    %2353 = vmatprep.subr.bf16.mxu0 0
    %2354 = vmatpush2.bf16.msra.mxu0 0
    %2355 = vmatprep.subr.bf16.mxu0 0
    %2356 = vmatpush2.bf16.msra.mxu0 0
    %2357 = vmatprep.subr.bf16.mxu0 0
    %2358 = vmatpush2.bf16.msra.mxu0 0
    %2359 = vmatprep.subr.bf16.mxu0 0
    %2360 = vmatpush2.bf16.msra.mxu0 0
    %2361 = vmatprep.subr.bf16.mxu0 0
    %2362 = vmatpush2.bf16.msra.mxu0 0
    %2363 = vmatprep.subr.bf16.mxu0 0
    %2364 = vmatpush2.bf16.msra.mxu0 0
    %2365 = vmatprep.mubr.bf16.mxu0 0
    %2366 = vmatmul.mubr.bf16.gmra.mxu0 %v2172
    %v2367 = vpop.f32.mrf.mxu0
    %v2368 = vadd.f32 0.0, %v2367
    %v2369 = vpop.f32.mrf.mxu0
    %v2370 = vadd.f32 0.0, %v2369
    %v2371 = vpop.f32.mrf.mxu0
    %v2372 = vadd.f32 0.0, %v2371
    %v2373 = vpop.f32.mrf.mxu0
    %v2374 = vadd.f32 0.0, %v2373
    %2375 = vdwg.mxu0
    %2376 = vmatprep.subr.bf16.mxu0 0
    %2377 = vmatpush1.bf16.msra.mxu0 %v2308
    %2378 = vmatprep.subr.bf16.mxu0 0
    %2379 = vmatpush1.bf16.msra.mxu0 %v2305
    %2380 = vmatprep.subr.bf16.mxu0 0
    %2381 = vmatpush1.bf16.msra.mxu0 %v2302
    %2382 = vmatprep.subr.bf16.mxu0 0
    %2383 = vmatpush1.bf16.msra.mxu0 %v2299
    %2384 = vmatprep.subr.bf16.mxu0 0
    %2385 = vmatpush1.bf16.msra.mxu0 %v2296
    %2386 = vmatprep.subr.bf16.mxu0 0
    %2387 = vmatpush1.bf16.msra.mxu0 %v2293
    %2388 = vmatprep.subr.bf16.mxu0 0
    %2389 = vmatpush1.bf16.msra.mxu0 %v2290
    %2390 = vmatprep.subr.bf16.mxu0 0
    %2391 = vmatpush1.bf16.msra.mxu0 %v2287
    %2392 = vmatprep.subr.bf16.mxu0 0
    %2393 = vmatpush2.bf16.msra.mxu0 0
    %2394 = vmatprep.subr.bf16.mxu0 0
    %2395 = vmatpush2.bf16.msra.mxu0 0
    %2396 = vmatprep.subr.bf16.mxu0 0
    %2397 = vmatpush2.bf16.msra.mxu0 0
    %2398 = vmatprep.subr.bf16.mxu0 0
    %2399 = vmatpush2.bf16.msra.mxu0 0
    %2400 = vmatprep.subr.bf16.mxu0 0
    %2401 = vmatpush2.bf16.msra.mxu0 0
    %2402 = vmatprep.subr.bf16.mxu0 0
    %2403 = vmatpush2.bf16.msra.mxu0 0
    %2404 = vmatprep.subr.bf16.mxu0 0
    %2405 = vmatpush2.bf16.msra.mxu0 0
    %2406 = vmatprep.subr.bf16.mxu0 0
    %2407 = vmatpush2.bf16.msra.mxu0 0
    %2408 = vmatprep.mubr.bf16.mxu0 0
    %2409 = vmatmul.mubr.bf16.gmra.mxu0 %v2172
    %v2410 = vpop.f32.mrf.mxu0
    %v2411 = vadd.f32 0.0, %v2410
    %v2412 = vpop.f32.mrf.mxu0
    %v2413 = vpop.f32.mrf.mxu0
    %v2414 = vadd.f32 0.0, %v2413
    %v2415 = vpop.f32.mrf.mxu0
    %2416 = vdwg.mxu0
    %v2417 = vld [vmem:[#allocation10] sm:$0xf]
    %v2418 = vld [vmem:[#allocation10 + $0x4] sm:$0xf]
    %v2419 = vld [vmem:[#allocation10 + $0x8] sm:$0xf]
    %v2420 = vld [vmem:[#allocation10 + $0xc] sm:$0xf]
    %v2421 = vld [vmem:[#allocation10 + $0x10] sm:$0xf]
    %v2422 = vld [vmem:[#allocation10 + $0x14] sm:$0xf]
    %v2423 = vld [vmem:[#allocation10 + $0x18] sm:$0xf]
    %v2424 = vld [vmem:[#allocation10 + $0x1c] sm:$0xf]
    %v2425 = vld [vmem:[#allocation10 + $0x20] sm:$0xf]
    %v2426 = vld [vmem:[#allocation10 + $0x24] sm:$0xf]
    %v2427 = vld [vmem:[#allocation10 + $0x28] sm:$0xf]
    %v2428 = vld [vmem:[#allocation10 + $0x2c] sm:$0xf]
    %v2429 = vld [vmem:[#allocation10 + $0x30] sm:$0xf]
    %v2430 = vld [vmem:[#allocation10 + $0x34] sm:$0xf]
    %v2431 = vld [vmem:[#allocation10 + $0x38] sm:$0xf]
    %v2432 = vld [vmem:[#allocation10 + $0x3c] sm:$0xf]
    %v2434 = vsel %vm535, %v2368, 0
    %v2437 = vsel %vm535, %v2370, 0
    %2439 = vmatprep.subr.mxu0 0.0
    %2440 = vmatpush1.xpose.msra.mxu0 0.0
    %2441 = vmatprep.subr.mxu0 0.0
    %2442 = vmatpush1.xpose.msra.mxu0 0.0
    %2443 = vmatprep.subr.mxu0 0.0
    %2444 = vmatpush1.xpose.msra.mxu0 0.0
    %2445 = vmatprep.subr.mxu0 0.0
    %2446 = vmatpush1.xpose.msra.mxu0 0.0
    %2447 = vmatprep.subr.mxu0 0.0
    %2448 = vmatpush1.xpose.msra.mxu0 0.0
    %2449 = vmatprep.subr.mxu0 0.0
    %2450 = vmatpush1.xpose.msra.mxu0 0.0
    %2451 = vmatprep.subr.mxu0 0.0
    %2452 = vmatpush1.xpose.msra.mxu0 0.0
    %2453 = vmatprep.subr.mxu0 0.0
    %2454 = vmatpush1.xpose.msra.mxu0 0.0
    %2455 = vmatprep.subr.mxu0 0.0
    %2456 = vmatpush1.xpose.msra.mxu0 0.0
    %2457 = vmatprep.subr.mxu0 0.0
    %2458 = vmatpush1.xpose.msra.mxu0 0.0
    %2459 = vmatprep.subr.mxu0 0.0
    %2460 = vmatpush1.xpose.msra.mxu0 0.0
    %2461 = vmatprep.subr.mxu0 0.0
    %2462 = vmatpush1.xpose.msra.mxu0 0.0
    %2463 = vmatprep.subr.mxu0 0.0
    %2464 = vmatpush1.xpose.msra.mxu0 0.0
    %2465 = vmatprep.subr.mxu0 0.0
    %2466 = vmatpush1.xpose.msra.mxu0 0.0
    %2467 = vmatprep.subr.mxu0 0.0
    %2468 = vmatpush1.xpose.msra.mxu0 0.0
    %2469 = vmatprep.subr.mxu0 0.0
    %2470 = vmatpush1.xpose.msra.mxu0 %v2437
    %2471 = vmatprep.subr.mxu0 0.0
    %2472 = vmatpush2.xpose.msra.mxu0 0.0
    %2473 = vmatprep.subr.mxu0 0.0
    %2474 = vmatpush2.xpose.msra.mxu0 0.0
    %2475 = vmatprep.subr.mxu0 0.0
    %2476 = vmatpush2.xpose.msra.mxu0 0.0
    %2477 = vmatprep.subr.mxu0 0.0
    %2478 = vmatpush2.xpose.msra.mxu0 0.0
    %2479 = vmatprep.subr.mxu0 0.0
    %2480 = vmatpush2.xpose.msra.mxu0 0.0
    %2481 = vmatprep.subr.mxu0 0.0
    %2482 = vmatpush2.xpose.msra.mxu0 0.0
    %2483 = vmatprep.subr.mxu0 0.0
    %2484 = vmatpush2.xpose.msra.mxu0 0.0
    %2485 = vmatprep.subr.mxu0 0.0
    %2486 = vmatpush2.xpose.msra.mxu0 0.0
    %2487 = vmatprep.subr.mxu0 0.0
    %2488 = vmatpush2.xpose.msra.mxu0 0.0
    %2489 = vmatprep.subr.mxu0 0.0
    %2490 = vmatpush2.xpose.msra.mxu0 0.0
    %2491 = vmatprep.subr.mxu0 0.0
    %2492 = vmatpush2.xpose.msra.mxu0 0.0
    %2493 = vmatprep.subr.mxu0 0.0
    %2494 = vmatpush2.xpose.msra.mxu0 0.0
    %2495 = vmatprep.subr.mxu0 0.0
    %2496 = vmatpush2.xpose.msra.mxu0 0.0
    %2497 = vmatprep.subr.mxu0 0.0
    %2498 = vmatpush2.xpose.msra.mxu0 0.0
    %2499 = vmatprep.subr.mxu0 0.0
    %2500 = vmatpush2.xpose.msra.mxu0 0.0
    %2501 = vmatprep.subr.mxu0 0.0
    %2502 = vmatpush2.xpose.msra.mxu0 0.0
    %2503 = vmatprep.mubr.f32.mxu0 0.0
    %2504 = vmatmul.mubr.f32.gmra.mxu0 %v2434
    %v2505 = vpop.f32.mrf.mxu0
    %v2506 = vadd.f32 0.0, %v2505
    %v2507 = vpop.f32.mrf.mxu0
    %2508 = vdwg.mxu0
    %v2509 = vmul.f32 %v2506, 0.70710677
    %v2510 = vsel %vm232, %v2509, -1e+30
    %v2511 = vsel %vm614, %v2510, -inf
    %2512 = vmax.xlane.f32.xlu0 %v2511
    %v2513 = vpop.xlane.xlu0 %2512
    %v2514 = vsub.f32 %v2510, %v2513
    %v2515 = vmul.f32 %v2514, 1.442695
    %v2516 = vpow.pop %v2515
    %v2517 = vsel %vm614, %v2516, 0.0
    %2518 = vadd.xlane.f32.xlu0 %v2517
    %v2519 = vpop.xlane.xlu0 %2518
    %v2520 = vrcp.pop %v2519
    %v2521 = vmul.f32 %v2516, %v2520
    %v2523 = vsel %vm614, %v2521, 0
    %2525 = vmatprep.subr.mxu0 0.0
    %2526 = vmatpush1.msra.mxu0 0.0
    %2527 = vmatprep.subr.mxu0 0.0
    %2528 = vmatpush1.msra.mxu0 0.0
    %2529 = vmatprep.subr.mxu0 0.0
    %2530 = vmatpush1.msra.mxu0 0.0
    %2531 = vmatprep.subr.mxu0 0.0
    %2532 = vmatpush1.msra.mxu0 0.0
    %2533 = vmatprep.subr.mxu0 0.0
    %2534 = vmatpush1.msra.mxu0 0.0
    %2535 = vmatprep.subr.mxu0 0.0
    %2536 = vmatpush1.msra.mxu0 0.0
    %2537 = vmatprep.subr.mxu0 0.0
    %2538 = vmatpush1.msra.mxu0 0.0
    %2539 = vmatprep.subr.mxu0 0.0
    %2540 = vmatpush1.msra.mxu0 0.0
    %2541 = vmatprep.subr.mxu0 0.0
    %2542 = vmatpush1.msra.mxu0 0.0
    %2543 = vmatprep.subr.mxu0 0.0
    %2544 = vmatpush1.msra.mxu0 0.0
    %2545 = vmatprep.subr.mxu0 0.0
    %2546 = vmatpush1.msra.mxu0 0.0
    %2547 = vmatprep.subr.mxu0 0.0
    %2548 = vmatpush1.msra.mxu0 0.0
    %2549 = vmatprep.subr.mxu0 0.0
    %2550 = vmatpush1.msra.mxu0 0.0
    %2551 = vmatprep.subr.mxu0 0.0
    %2552 = vmatpush1.msra.mxu0 0.0
    %2553 = vmatprep.subr.mxu0 0.0
    %2554 = vmatpush1.msra.mxu0 0.0
    %2555 = vmatprep.subr.mxu0 0.0
    %2556 = vmatpush1.msra.mxu0 %v2411
    %2557 = vmatprep.subr.mxu0 0.0
    %2558 = vmatpush2.msra.mxu0 0.0
    %2559 = vmatprep.subr.mxu0 0.0
    %2560 = vmatpush2.msra.mxu0 0.0
    %2561 = vmatprep.subr.mxu0 0.0
    %2562 = vmatpush2.msra.mxu0 0.0
    %2563 = vmatprep.subr.mxu0 0.0
    %2564 = vmatpush2.msra.mxu0 0.0
    %2565 = vmatprep.subr.mxu0 0.0
    %2566 = vmatpush2.msra.mxu0 0.0
    %2567 = vmatprep.subr.mxu0 0.0
    %2568 = vmatpush2.msra.mxu0 0.0
    %2569 = vmatprep.subr.mxu0 0.0
    %2570 = vmatpush2.msra.mxu0 0.0
    %2571 = vmatprep.subr.mxu0 0.0
    %2572 = vmatpush2.msra.mxu0 0.0
    %2573 = vmatprep.subr.mxu0 0.0
    %2574 = vmatpush2.msra.mxu0 0.0
    %2575 = vmatprep.subr.mxu0 0.0
    %2576 = vmatpush2.msra.mxu0 0.0
    %2577 = vmatprep.subr.mxu0 0.0
    %2578 = vmatpush2.msra.mxu0 0.0
    %2579 = vmatprep.subr.mxu0 0.0
    %2580 = vmatpush2.msra.mxu0 0.0
    %2581 = vmatprep.subr.mxu0 0.0
    %2582 = vmatpush2.msra.mxu0 0.0
    %2583 = vmatprep.subr.mxu0 0.0
    %2584 = vmatpush2.msra.mxu0 0.0
    %2585 = vmatprep.subr.mxu0 0.0
    %2586 = vmatpush2.msra.mxu0 0.0
    %2587 = vmatprep.subr.mxu0 0.0
    %2588 = vmatpush2.msra.mxu0 0.0
    %2589 = vmatprep.mubr.f32.mxu0 0.0
    %2590 = vmatmul.mubr.f32.gmra.mxu0 %v2523
    %v2591 = vpop.f32.mrf.mxu0
    %v2592 = vadd.f32 0.0, %v2591
    %v2593 = vpop.f32.mrf.mxu0
    %2594 = vdwg.mxu0
    %v2595 = vpack.c.bf16 %v2592, %v2592
    %2596 = vrot.lane.b32.xlu0 %v2368, 64
    %v2597 = vpop.permute.xlu0 %2596
    %2598 = vrot.lane.b32.xlu0 %v2370, 64
    %v2599 = vpop.permute.xlu0 %2598
    %v2600 = vsel %vm535, %v2597, 0
    %v2602 = vsel %vm535, %v2599, 0
    %2604 = vmatprep.subr.mxu0 0.0
    %2605 = vmatpush1.xpose.msra.mxu0 0.0
    %2606 = vmatprep.subr.mxu0 0.0
    %2607 = vmatpush1.xpose.msra.mxu0 0.0
    %2608 = vmatprep.subr.mxu0 0.0
    %2609 = vmatpush1.xpose.msra.mxu0 0.0
    %2610 = vmatprep.subr.mxu0 0.0
    %2611 = vmatpush1.xpose.msra.mxu0 0.0
    %2612 = vmatprep.subr.mxu0 0.0
    %2613 = vmatpush1.xpose.msra.mxu0 0.0
    %2614 = vmatprep.subr.mxu0 0.0
    %2615 = vmatpush1.xpose.msra.mxu0 0.0
    %2616 = vmatprep.subr.mxu0 0.0
    %2617 = vmatpush1.xpose.msra.mxu0 0.0
    %2618 = vmatprep.subr.mxu0 0.0
    %2619 = vmatpush1.xpose.msra.mxu0 0.0
    %2620 = vmatprep.subr.mxu0 0.0
    %2621 = vmatpush1.xpose.msra.mxu0 0.0
    %2622 = vmatprep.subr.mxu0 0.0
    %2623 = vmatpush1.xpose.msra.mxu0 0.0
    %2624 = vmatprep.subr.mxu0 0.0
    %2625 = vmatpush1.xpose.msra.mxu0 0.0
    %2626 = vmatprep.subr.mxu0 0.0
    %2627 = vmatpush1.xpose.msra.mxu0 0.0
    %2628 = vmatprep.subr.mxu0 0.0
    %2629 = vmatpush1.xpose.msra.mxu0 0.0
    %2630 = vmatprep.subr.mxu0 0.0
    %2631 = vmatpush1.xpose.msra.mxu0 0.0
    %2632 = vmatprep.subr.mxu0 0.0
    %2633 = vmatpush1.xpose.msra.mxu0 0.0
    %2634 = vmatprep.subr.mxu0 0.0
    %2635 = vmatpush1.xpose.msra.mxu0 %v2602
    %2636 = vmatprep.subr.mxu0 0.0
    %2637 = vmatpush2.xpose.msra.mxu0 0.0
    %2638 = vmatprep.subr.mxu0 0.0
    %2639 = vmatpush2.xpose.msra.mxu0 0.0
    %2640 = vmatprep.subr.mxu0 0.0
    %2641 = vmatpush2.xpose.msra.mxu0 0.0
    %2642 = vmatprep.subr.mxu0 0.0
    %2643 = vmatpush2.xpose.msra.mxu0 0.0
    %2644 = vmatprep.subr.mxu0 0.0
    %2645 = vmatpush2.xpose.msra.mxu0 0.0
    %2646 = vmatprep.subr.mxu0 0.0
    %2647 = vmatpush2.xpose.msra.mxu0 0.0
    %2648 = vmatprep.subr.mxu0 0.0
    %2649 = vmatpush2.xpose.msra.mxu0 0.0
    %2650 = vmatprep.subr.mxu0 0.0
    %2651 = vmatpush2.xpose.msra.mxu0 0.0
    %2652 = vmatprep.subr.mxu0 0.0
    %2653 = vmatpush2.xpose.msra.mxu0 0.0
    %2654 = vmatprep.subr.mxu0 0.0
    %2655 = vmatpush2.xpose.msra.mxu0 0.0
    %2656 = vmatprep.subr.mxu0 0.0
    %2657 = vmatpush2.xpose.msra.mxu0 0.0
    %2658 = vmatprep.subr.mxu0 0.0
    %2659 = vmatpush2.xpose.msra.mxu0 0.0
    %2660 = vmatprep.subr.mxu0 0.0
    %2661 = vmatpush2.xpose.msra.mxu0 0.0
    %2662 = vmatprep.subr.mxu0 0.0
    %2663 = vmatpush2.xpose.msra.mxu0 0.0
    %2664 = vmatprep.subr.mxu0 0.0
    %2665 = vmatpush2.xpose.msra.mxu0 0.0
    %2666 = vmatprep.subr.mxu0 0.0
    %2667 = vmatpush2.xpose.msra.mxu0 0.0
    %2668 = vmatprep.mubr.f32.mxu0 0.0
    %2669 = vmatmul.mubr.f32.gmra.mxu0 %v2600
    %v2670 = vpop.f32.mrf.mxu0
    %v2671 = vadd.f32 0.0, %v2670
    %v2672 = vpop.f32.mrf.mxu0
    %2673 = vdwg.mxu0
    %v2674 = vmul.f32 %v2671, 0.70710677
    %v2675 = vsel %vm232, %v2674, -1e+30
    %v2676 = vsel %vm614, %v2675, -inf
    %2677 = vmax.xlane.f32.xlu0 %v2676
    %v2678 = vpop.xlane.xlu0 %2677
    %v2679 = vsub.f32 %v2675, %v2678
    %v2680 = vmul.f32 %v2679, 1.442695
    %v2681 = vpow.pop %v2680
    %v2682 = vsel %vm614, %v2681, 0.0
    %2683 = vadd.xlane.f32.xlu0 %v2682
    %v2684 = vpop.xlane.xlu0 %2683
    %v2685 = vrcp.pop %v2684
    %v2686 = vmul.f32 %v2681, %v2685
    %2688 = vrot.lane.b32.xlu0 %v2411, 64
    %v2689 = vpop.permute.xlu0 %2688
    %v2692 = vsel %vm614, %v2686, 0
    %2694 = vmatprep.subr.mxu0 0.0
    %2695 = vmatpush1.msra.mxu0 0.0
    %2696 = vmatprep.subr.mxu0 0.0
    %2697 = vmatpush1.msra.mxu0 0.0
    %2698 = vmatprep.subr.mxu0 0.0
    %2699 = vmatpush1.msra.mxu0 0.0
    %2700 = vmatprep.subr.mxu0 0.0
    %2701 = vmatpush1.msra.mxu0 0.0
    %2702 = vmatprep.subr.mxu0 0.0
    %2703 = vmatpush1.msra.mxu0 0.0
    %2704 = vmatprep.subr.mxu0 0.0
    %2705 = vmatpush1.msra.mxu0 0.0
    %2706 = vmatprep.subr.mxu0 0.0
    %2707 = vmatpush1.msra.mxu0 0.0
    %2708 = vmatprep.subr.mxu0 0.0
    %2709 = vmatpush1.msra.mxu0 0.0
    %2710 = vmatprep.subr.mxu0 0.0
    %2711 = vmatpush1.msra.mxu0 0.0
    %2712 = vmatprep.subr.mxu0 0.0
    %2713 = vmatpush1.msra.mxu0 0.0
    %2714 = vmatprep.subr.mxu0 0.0
    %2715 = vmatpush1.msra.mxu0 0.0
    %2716 = vmatprep.subr.mxu0 0.0
    %2717 = vmatpush1.msra.mxu0 0.0
    %2718 = vmatprep.subr.mxu0 0.0
    %2719 = vmatpush1.msra.mxu0 0.0
    %2720 = vmatprep.subr.mxu0 0.0
    %2721 = vmatpush1.msra.mxu0 0.0
    %2722 = vmatprep.subr.mxu0 0.0
    %2723 = vmatpush1.msra.mxu0 0.0
    %2724 = vmatprep.subr.mxu0 0.0
    %2725 = vmatpush1.msra.mxu0 %v2689
    %2726 = vmatprep.subr.mxu0 0.0
    %2727 = vmatpush2.msra.mxu0 0.0
    %2728 = vmatprep.subr.mxu0 0.0
    %2729 = vmatpush2.msra.mxu0 0.0
    %2730 = vmatprep.subr.mxu0 0.0
    %2731 = vmatpush2.msra.mxu0 0.0
    %2732 = vmatprep.subr.mxu0 0.0
    %2733 = vmatpush2.msra.mxu0 0.0
    %2734 = vmatprep.subr.mxu0 0.0
    %2735 = vmatpush2.msra.mxu0 0.0
    %2736 = vmatprep.subr.mxu0 0.0
    %2737 = vmatpush2.msra.mxu0 0.0
    %2738 = vmatprep.subr.mxu0 0.0
    %2739 = vmatpush2.msra.mxu0 0.0
    %2740 = vmatprep.subr.mxu0 0.0
    %2741 = vmatpush2.msra.mxu0 0.0
    %2742 = vmatprep.subr.mxu0 0.0
    %2743 = vmatpush2.msra.mxu0 0.0
    %2744 = vmatprep.subr.mxu0 0.0
    %2745 = vmatpush2.msra.mxu0 0.0
    %2746 = vmatprep.subr.mxu0 0.0
    %2747 = vmatpush2.msra.mxu0 0.0
    %2748 = vmatprep.subr.mxu0 0.0
    %2749 = vmatpush2.msra.mxu0 0.0
    %2750 = vmatprep.subr.mxu0 0.0
    %2751 = vmatpush2.msra.mxu0 0.0
    %2752 = vmatprep.subr.mxu0 0.0
    %2753 = vmatpush2.msra.mxu0 0.0
    %2754 = vmatprep.subr.mxu0 0.0
    %2755 = vmatpush2.msra.mxu0 0.0
    %2756 = vmatprep.subr.mxu0 0.0
    %2757 = vmatpush2.msra.mxu0 0.0
    %2758 = vmatprep.mubr.f32.mxu0 0.0
    %2759 = vmatmul.mubr.f32.gmra.mxu0 %v2692
    %v2760 = vpop.f32.mrf.mxu0
    %v2761 = vadd.f32 0.0, %v2760
    %v2762 = vpop.f32.mrf.mxu0
    %2763 = vdwg.mxu0
    %v2764 = vpack.c.bf16 %v2761, %v2761
    %v2773 = vunpack.c.l.b16 %v2425
    %v2774 = vunpack.c.l.b16 %v2426
    %v2775 = vunpack.c.l.b16 %v2427
    %v2776 = vunpack.c.l.b16 %v2428
    %v2777 = vunpack.c.l.b16 %v2429
    %v2778 = vunpack.c.l.b16 %v2430
    %v2779 = vunpack.c.l.b16 %v2431
    %v2780 = vunpack.c.l.b16 %v2432
    %v2781 = vpack.c.b16 %v2774, %v2773
    %v2782 = vpack.c.b16 %v2776, %v2775
    %v2783 = vpack.c.b16 %v2778, %v2777
    %v2784 = vpack.c.b16 %v2780, %v2779
    %v2790 = vsel %vm535, %v2764, 0
    %2792 = vmatprep.subr.bf16.mxu0 0
    %2793 = vmatpush1.bf16.msra.mxu0 0
    %2794 = vmatprep.subr.bf16.mxu0 0
    %2795 = vmatpush1.bf16.msra.mxu0 0
    %2796 = vmatprep.subr.bf16.mxu0 0
    %2797 = vmatpush1.bf16.msra.mxu0 0
    %2798 = vmatprep.subr.bf16.mxu0 0
    %2799 = vmatpush1.bf16.msra.mxu0 0
    %2800 = vmatprep.subr.bf16.mxu0 0
    %2801 = vmatpush1.bf16.msra.mxu0 %v2784
    %2802 = vmatprep.subr.bf16.mxu0 0
    %2803 = vmatpush1.bf16.msra.mxu0 %v2783
    %2804 = vmatprep.subr.bf16.mxu0 0
    %2805 = vmatpush1.bf16.msra.mxu0 %v2782
    %2806 = vmatprep.subr.bf16.mxu0 0
    %2807 = vmatpush1.bf16.msra.mxu0 %v2781
    %2808 = vmatprep.subr.bf16.mxu0 0
    %2809 = vmatpush2.bf16.msra.mxu0 0
    %2810 = vmatprep.subr.bf16.mxu0 0
    %2811 = vmatpush2.bf16.msra.mxu0 0
    %2812 = vmatprep.subr.bf16.mxu0 0
    %2813 = vmatpush2.bf16.msra.mxu0 0
    %2814 = vmatprep.subr.bf16.mxu0 0
    %2815 = vmatpush2.bf16.msra.mxu0 0
    %2816 = vmatprep.subr.bf16.mxu0 0
    %2817 = vmatpush2.bf16.msra.mxu0 0
    %2818 = vmatprep.subr.bf16.mxu0 0
    %2819 = vmatpush2.bf16.msra.mxu0 0
    %2820 = vmatprep.subr.bf16.mxu0 0
    %2821 = vmatpush2.bf16.msra.mxu0 0
    %2822 = vmatprep.subr.bf16.mxu0 0
    %2823 = vmatpush2.bf16.msra.mxu0 0
    %2824 = vmatprep.mubr.bf16.mxu0 0
    %2825 = vmatmul.mubr.bf16.gmra.mxu0 %v2790
    %v2826 = vpop.f32.mrf.mxu0
    %v2827 = vadd.f32 0.0, %v2826
    %v2828 = vpop.f32.mrf.mxu0
    %v2829 = vpop.f32.mrf.mxu0
    %v2830 = vpop.f32.mrf.mxu0
    %2831 = vdwg.mxu0
    %v2840 = vunpack.c.l.b16 %v2417
    %v2841 = vunpack.c.l.b16 %v2418
    %v2842 = vunpack.c.l.b16 %v2419
    %v2843 = vunpack.c.l.b16 %v2420
    %v2844 = vunpack.c.l.b16 %v2421
    %v2845 = vunpack.c.l.b16 %v2422
    %v2846 = vunpack.c.l.b16 %v2423
    %v2847 = vunpack.c.l.b16 %v2424
    %v2848 = vpack.c.b16 %v2841, %v2840
    %v2849 = vpack.c.b16 %v2843, %v2842
    %v2850 = vpack.c.b16 %v2845, %v2844
    %v2851 = vpack.c.b16 %v2847, %v2846
    %v2857 = vsel %vm535, %v2595, 0
    %2859 = vmatprep.subr.bf16.mxu0 0
    %2860 = vmatpush1.bf16.msra.mxu0 0
    %2861 = vmatprep.subr.bf16.mxu0 0
    %2862 = vmatpush1.bf16.msra.mxu0 0
    %2863 = vmatprep.subr.bf16.mxu0 0
    %2864 = vmatpush1.bf16.msra.mxu0 0
    %2865 = vmatprep.subr.bf16.mxu0 0
    %2866 = vmatpush1.bf16.msra.mxu0 0
    %2867 = vmatprep.subr.bf16.mxu0 0
    %2868 = vmatpush1.bf16.msra.mxu0 %v2851
    %2869 = vmatprep.subr.bf16.mxu0 0
    %2870 = vmatpush1.bf16.msra.mxu0 %v2850
    %2871 = vmatprep.subr.bf16.mxu0 0
    %2872 = vmatpush1.bf16.msra.mxu0 %v2849
    %2873 = vmatprep.subr.bf16.mxu0 0
    %2874 = vmatpush1.bf16.msra.mxu0 %v2848
    %2875 = vmatprep.subr.bf16.mxu0 0
    %2876 = vmatpush2.bf16.msra.mxu0 0
    %2877 = vmatprep.subr.bf16.mxu0 0
    %2878 = vmatpush2.bf16.msra.mxu0 0
    %2879 = vmatprep.subr.bf16.mxu0 0
    %2880 = vmatpush2.bf16.msra.mxu0 0
    %2881 = vmatprep.subr.bf16.mxu0 0
    %2882 = vmatpush2.bf16.msra.mxu0 0
    %2883 = vmatprep.subr.bf16.mxu0 0
    %2884 = vmatpush2.bf16.msra.mxu0 0
    %2885 = vmatprep.subr.bf16.mxu0 0
    %2886 = vmatpush2.bf16.msra.mxu0 0
    %2887 = vmatprep.subr.bf16.mxu0 0
    %2888 = vmatpush2.bf16.msra.mxu0 0
    %2889 = vmatprep.subr.bf16.mxu0 0
    %2890 = vmatpush2.bf16.msra.mxu0 0
    %2891 = vmatprep.mubr.bf16.mxu0 0
    %2892 = vmatmul.mubr.bf16.gmra.mxu0 %v2857
    %v2893 = vpop.f32.mrf.mxu0
    %v2894 = vadd.f32 %v2827, %v2893
    %v2895 = vpop.f32.mrf.mxu0
    %v2896 = vpop.f32.mrf.mxu0
    %v2897 = vpop.f32.mrf.mxu0
    %2898 = vdwg.mxu0
    %v2900 = vsel %vm535, %v2372, 0
    %v2903 = vsel %vm535, %v2374, 0
    %2905 = vmatprep.subr.mxu0 0.0
    %2906 = vmatpush1.xpose.msra.mxu0 0.0
    %2907 = vmatprep.subr.mxu0 0.0
    %2908 = vmatpush1.xpose.msra.mxu0 0.0
    %2909 = vmatprep.subr.mxu0 0.0
    %2910 = vmatpush1.xpose.msra.mxu0 0.0
    %2911 = vmatprep.subr.mxu0 0.0
    %2912 = vmatpush1.xpose.msra.mxu0 0.0
    %2913 = vmatprep.subr.mxu0 0.0
    %2914 = vmatpush1.xpose.msra.mxu0 0.0
    %2915 = vmatprep.subr.mxu0 0.0
    %2916 = vmatpush1.xpose.msra.mxu0 0.0
    %2917 = vmatprep.subr.mxu0 0.0
    %2918 = vmatpush1.xpose.msra.mxu0 0.0
    %2919 = vmatprep.subr.mxu0 0.0
    %2920 = vmatpush1.xpose.msra.mxu0 0.0
    %2921 = vmatprep.subr.mxu0 0.0
    %2922 = vmatpush1.xpose.msra.mxu0 0.0
    %2923 = vmatprep.subr.mxu0 0.0
    %2924 = vmatpush1.xpose.msra.mxu0 0.0
    %2925 = vmatprep.subr.mxu0 0.0
    %2926 = vmatpush1.xpose.msra.mxu0 0.0
    %2927 = vmatprep.subr.mxu0 0.0
    %2928 = vmatpush1.xpose.msra.mxu0 0.0
    %2929 = vmatprep.subr.mxu0 0.0
    %2930 = vmatpush1.xpose.msra.mxu0 0.0
    %2931 = vmatprep.subr.mxu0 0.0
    %2932 = vmatpush1.xpose.msra.mxu0 0.0
    %2933 = vmatprep.subr.mxu0 0.0
    %2934 = vmatpush1.xpose.msra.mxu0 0.0
    %2935 = vmatprep.subr.mxu0 0.0
    %2936 = vmatpush1.xpose.msra.mxu0 %v2903
    %2937 = vmatprep.subr.mxu0 0.0
    %2938 = vmatpush2.xpose.msra.mxu0 0.0
    %2939 = vmatprep.subr.mxu0 0.0
    %2940 = vmatpush2.xpose.msra.mxu0 0.0
    %2941 = vmatprep.subr.mxu0 0.0
    %2942 = vmatpush2.xpose.msra.mxu0 0.0
    %2943 = vmatprep.subr.mxu0 0.0
    %2944 = vmatpush2.xpose.msra.mxu0 0.0
    %2945 = vmatprep.subr.mxu0 0.0
    %2946 = vmatpush2.xpose.msra.mxu0 0.0
    %2947 = vmatprep.subr.mxu0 0.0
    %2948 = vmatpush2.xpose.msra.mxu0 0.0
    %2949 = vmatprep.subr.mxu0 0.0
    %2950 = vmatpush2.xpose.msra.mxu0 0.0
    %2951 = vmatprep.subr.mxu0 0.0
    %2952 = vmatpush2.xpose.msra.mxu0 0.0
    %2953 = vmatprep.subr.mxu0 0.0
    %2954 = vmatpush2.xpose.msra.mxu0 0.0
    %2955 = vmatprep.subr.mxu0 0.0
    %2956 = vmatpush2.xpose.msra.mxu0 0.0
    %2957 = vmatprep.subr.mxu0 0.0
    %2958 = vmatpush2.xpose.msra.mxu0 0.0
    %2959 = vmatprep.subr.mxu0 0.0
    %2960 = vmatpush2.xpose.msra.mxu0 0.0
    %2961 = vmatprep.subr.mxu0 0.0
    %2962 = vmatpush2.xpose.msra.mxu0 0.0
    %2963 = vmatprep.subr.mxu0 0.0
    %2964 = vmatpush2.xpose.msra.mxu0 0.0
    %2965 = vmatprep.subr.mxu0 0.0
    %2966 = vmatpush2.xpose.msra.mxu0 0.0
    %2967 = vmatprep.subr.mxu0 0.0
    %2968 = vmatpush2.xpose.msra.mxu0 0.0
    %2969 = vmatprep.mubr.f32.mxu0 0.0
    %2970 = vmatmul.mubr.f32.gmra.mxu0 %v2900
    %v2971 = vpop.f32.mrf.mxu0
    %v2972 = vadd.f32 0.0, %v2971
    %v2973 = vpop.f32.mrf.mxu0
    %2974 = vdwg.mxu0
    %v2975 = vmul.f32 %v2972, 0.70710677
    %v2976 = vsel %vm232, %v2975, -1e+30
    %v2977 = vsel %vm614, %v2976, -inf
    %2978 = vmax.xlane.f32.xlu0 %v2977
    %v2979 = vpop.xlane.xlu0 %2978
    %v2980 = vsub.f32 %v2976, %v2979
    %v2981 = vmul.f32 %v2980, 1.442695
    %v2982 = vpow.pop %v2981
    %v2983 = vsel %vm614, %v2982, 0.0
    %2984 = vadd.xlane.f32.xlu0 %v2983
    %v2985 = vpop.xlane.xlu0 %2984
    %v2986 = vrcp.pop %v2985
    %v2987 = vmul.f32 %v2982, %v2986
    %v2989 = vsel %vm614, %v2987, 0
    %2991 = vmatprep.subr.mxu0 0.0
    %2992 = vmatpush1.msra.mxu0 0.0
    %2993 = vmatprep.subr.mxu0 0.0
    %2994 = vmatpush1.msra.mxu0 0.0
    %2995 = vmatprep.subr.mxu0 0.0
    %2996 = vmatpush1.msra.mxu0 0.0
    %2997 = vmatprep.subr.mxu0 0.0
    %2998 = vmatpush1.msra.mxu0 0.0
    %2999 = vmatprep.subr.mxu0 0.0
    %3000 = vmatpush1.msra.mxu0 0.0
    %3001 = vmatprep.subr.mxu0 0.0
    %3002 = vmatpush1.msra.mxu0 0.0
    %3003 = vmatprep.subr.mxu0 0.0
    %3004 = vmatpush1.msra.mxu0 0.0
    %3005 = vmatprep.subr.mxu0 0.0
    %3006 = vmatpush1.msra.mxu0 0.0
    %3007 = vmatprep.subr.mxu0 0.0
    %3008 = vmatpush1.msra.mxu0 0.0
    %3009 = vmatprep.subr.mxu0 0.0
    %3010 = vmatpush1.msra.mxu0 0.0
    %3011 = vmatprep.subr.mxu0 0.0
    %3012 = vmatpush1.msra.mxu0 0.0
    %3013 = vmatprep.subr.mxu0 0.0
    %3014 = vmatpush1.msra.mxu0 0.0
    %3015 = vmatprep.subr.mxu0 0.0
    %3016 = vmatpush1.msra.mxu0 0.0
    %3017 = vmatprep.subr.mxu0 0.0
    %3018 = vmatpush1.msra.mxu0 0.0
    %3019 = vmatprep.subr.mxu0 0.0
    %3020 = vmatpush1.msra.mxu0 0.0
    %3021 = vmatprep.subr.mxu0 0.0
    %3022 = vmatpush1.msra.mxu0 %v2414
    %3023 = vmatprep.subr.mxu0 0.0
    %3024 = vmatpush2.msra.mxu0 0.0
    %3025 = vmatprep.subr.mxu0 0.0
    %3026 = vmatpush2.msra.mxu0 0.0
    %3027 = vmatprep.subr.mxu0 0.0
    %3028 = vmatpush2.msra.mxu0 0.0
    %3029 = vmatprep.subr.mxu0 0.0
    %3030 = vmatpush2.msra.mxu0 0.0
    %3031 = vmatprep.subr.mxu0 0.0
    %3032 = vmatpush2.msra.mxu0 0.0
    %3033 = vmatprep.subr.mxu0 0.0
    %3034 = vmatpush2.msra.mxu0 0.0
    %3035 = vmatprep.subr.mxu0 0.0
    %3036 = vmatpush2.msra.mxu0 0.0
    %3037 = vmatprep.subr.mxu0 0.0
    %3038 = vmatpush2.msra.mxu0 0.0
    %3039 = vmatprep.subr.mxu0 0.0
    %3040 = vmatpush2.msra.mxu0 0.0
    %3041 = vmatprep.subr.mxu0 0.0
    %3042 = vmatpush2.msra.mxu0 0.0
    %3043 = vmatprep.subr.mxu0 0.0
    %3044 = vmatpush2.msra.mxu0 0.0
    %3045 = vmatprep.subr.mxu0 0.0
    %3046 = vmatpush2.msra.mxu0 0.0
    %3047 = vmatprep.subr.mxu0 0.0
    %3048 = vmatpush2.msra.mxu0 0.0
    %3049 = vmatprep.subr.mxu0 0.0
    %3050 = vmatpush2.msra.mxu0 0.0
    %3051 = vmatprep.subr.mxu0 0.0
    %3052 = vmatpush2.msra.mxu0 0.0
    %3053 = vmatprep.subr.mxu0 0.0
    %3054 = vmatpush2.msra.mxu0 0.0
    %3055 = vmatprep.mubr.f32.mxu0 0.0
    %3056 = vmatmul.mubr.f32.gmra.mxu0 %v2989
    %v3057 = vpop.f32.mrf.mxu0
    %v3058 = vadd.f32 0.0, %v3057
    %v3059 = vpop.f32.mrf.mxu0
    %3060 = vdwg.mxu0
    %v3061 = vpack.c.bf16 %v3058, %v3058
    %3062 = vrot.lane.b32.xlu0 %v2372, 64
    %v3063 = vpop.permute.xlu0 %3062
    %3064 = vrot.lane.b32.xlu0 %v2374, 64
    %v3065 = vpop.permute.xlu0 %3064
    %v3066 = vsel %vm535, %v3063, 0
    %v3068 = vsel %vm535, %v3065, 0
    %3070 = vmatprep.subr.mxu0 0.0
    %3071 = vmatpush1.xpose.msra.mxu0 0.0
    %3072 = vmatprep.subr.mxu0 0.0
    %3073 = vmatpush1.xpose.msra.mxu0 0.0
    %3074 = vmatprep.subr.mxu0 0.0
    %3075 = vmatpush1.xpose.msra.mxu0 0.0
    %3076 = vmatprep.subr.mxu0 0.0
    %3077 = vmatpush1.xpose.msra.mxu0 0.0
    %3078 = vmatprep.subr.mxu0 0.0
    %3079 = vmatpush1.xpose.msra.mxu0 0.0
    %3080 = vmatprep.subr.mxu0 0.0
    %3081 = vmatpush1.xpose.msra.mxu0 0.0
    %3082 = vmatprep.subr.mxu0 0.0
    %3083 = vmatpush1.xpose.msra.mxu0 0.0
    %3084 = vmatprep.subr.mxu0 0.0
    %3085 = vmatpush1.xpose.msra.mxu0 0.0
    %3086 = vmatprep.subr.mxu0 0.0
    %3087 = vmatpush1.xpose.msra.mxu0 0.0
    %3088 = vmatprep.subr.mxu0 0.0
    %3089 = vmatpush1.xpose.msra.mxu0 0.0
    %3090 = vmatprep.subr.mxu0 0.0
    %3091 = vmatpush1.xpose.msra.mxu0 0.0
    %3092 = vmatprep.subr.mxu0 0.0
    %3093 = vmatpush1.xpose.msra.mxu0 0.0
    %3094 = vmatprep.subr.mxu0 0.0
    %3095 = vmatpush1.xpose.msra.mxu0 0.0
    %3096 = vmatprep.subr.mxu0 0.0
    %3097 = vmatpush1.xpose.msra.mxu0 0.0
    %3098 = vmatprep.subr.mxu0 0.0
    %3099 = vmatpush1.xpose.msra.mxu0 0.0
    %3100 = vmatprep.subr.mxu0 0.0
    %3101 = vmatpush1.xpose.msra.mxu0 %v3068
    %3102 = vmatprep.subr.mxu0 0.0
    %3103 = vmatpush2.xpose.msra.mxu0 0.0
    %3104 = vmatprep.subr.mxu0 0.0
    %3105 = vmatpush2.xpose.msra.mxu0 0.0
    %3106 = vmatprep.subr.mxu0 0.0
    %3107 = vmatpush2.xpose.msra.mxu0 0.0
    %3108 = vmatprep.subr.mxu0 0.0
    %3109 = vmatpush2.xpose.msra.mxu0 0.0
    %3110 = vmatprep.subr.mxu0 0.0
    %3111 = vmatpush2.xpose.msra.mxu0 0.0
    %3112 = vmatprep.subr.mxu0 0.0
    %3113 = vmatpush2.xpose.msra.mxu0 0.0
    %3114 = vmatprep.subr.mxu0 0.0
    %3115 = vmatpush2.xpose.msra.mxu0 0.0
    %3116 = vmatprep.subr.mxu0 0.0
    %3117 = vmatpush2.xpose.msra.mxu0 0.0
    %3118 = vmatprep.subr.mxu0 0.0
    %3119 = vmatpush2.xpose.msra.mxu0 0.0
    %3120 = vmatprep.subr.mxu0 0.0
    %3121 = vmatpush2.xpose.msra.mxu0 0.0
    %3122 = vmatprep.subr.mxu0 0.0
    %3123 = vmatpush2.xpose.msra.mxu0 0.0
    %3124 = vmatprep.subr.mxu0 0.0
    %3125 = vmatpush2.xpose.msra.mxu0 0.0
    %3126 = vmatprep.subr.mxu0 0.0
    %3127 = vmatpush2.xpose.msra.mxu0 0.0
    %3128 = vmatprep.subr.mxu0 0.0
    %3129 = vmatpush2.xpose.msra.mxu0 0.0
    %3130 = vmatprep.subr.mxu0 0.0
    %3131 = vmatpush2.xpose.msra.mxu0 0.0
    %3132 = vmatprep.subr.mxu0 0.0
    %3133 = vmatpush2.xpose.msra.mxu0 0.0
    %3134 = vmatprep.mubr.f32.mxu0 0.0
    %3135 = vmatmul.mubr.f32.gmra.mxu0 %v3066
    %v3136 = vpop.f32.mrf.mxu0
    %v3137 = vadd.f32 0.0, %v3136
    %v3138 = vpop.f32.mrf.mxu0
    %3139 = vdwg.mxu0
    %v3140 = vmul.f32 %v3137, 0.70710677
    %v3141 = vsel %vm232, %v3140, -1e+30
    %v3142 = vsel %vm614, %v3141, -inf
    %3143 = vmax.xlane.f32.xlu0 %v3142
    %v3144 = vpop.xlane.xlu0 %3143
    %v3145 = vsub.f32 %v3141, %v3144
    %v3146 = vmul.f32 %v3145, 1.442695
    %v3147 = vpow.pop %v3146
    %v3148 = vsel %vm614, %v3147, 0.0
    %3149 = vadd.xlane.f32.xlu0 %v3148
    %v3150 = vpop.xlane.xlu0 %3149
    %v3151 = vrcp.pop %v3150
    %v3152 = vmul.f32 %v3147, %v3151
    %3154 = vrot.lane.b32.xlu0 %v2414, 64
    %v3155 = vpop.permute.xlu0 %3154
    %v3158 = vsel %vm614, %v3152, 0
    %3160 = vmatprep.subr.mxu0 0.0
    %3161 = vmatpush1.msra.mxu0 0.0
    %3162 = vmatprep.subr.mxu0 0.0
    %3163 = vmatpush1.msra.mxu0 0.0
    %3164 = vmatprep.subr.mxu0 0.0
    %3165 = vmatpush1.msra.mxu0 0.0
    %3166 = vmatprep.subr.mxu0 0.0
    %3167 = vmatpush1.msra.mxu0 0.0
    %3168 = vmatprep.subr.mxu0 0.0
    %3169 = vmatpush1.msra.mxu0 0.0
    %3170 = vmatprep.subr.mxu0 0.0
    %3171 = vmatpush1.msra.mxu0 0.0
    %3172 = vmatprep.subr.mxu0 0.0
    %3173 = vmatpush1.msra.mxu0 0.0
    %3174 = vmatprep.subr.mxu0 0.0
    %3175 = vmatpush1.msra.mxu0 0.0
    %3176 = vmatprep.subr.mxu0 0.0
    %3177 = vmatpush1.msra.mxu0 0.0
    %3178 = vmatprep.subr.mxu0 0.0
    %3179 = vmatpush1.msra.mxu0 0.0
    %3180 = vmatprep.subr.mxu0 0.0
    %3181 = vmatpush1.msra.mxu0 0.0
    %3182 = vmatprep.subr.mxu0 0.0
    %3183 = vmatpush1.msra.mxu0 0.0
    %3184 = vmatprep.subr.mxu0 0.0
    %3185 = vmatpush1.msra.mxu0 0.0
    %3186 = vmatprep.subr.mxu0 0.0
    %3187 = vmatpush1.msra.mxu0 0.0
    %3188 = vmatprep.subr.mxu0 0.0
    %3189 = vmatpush1.msra.mxu0 0.0
    %3190 = vmatprep.subr.mxu0 0.0
    %3191 = vmatpush1.msra.mxu0 %v3155
    %3192 = vmatprep.subr.mxu0 0.0
    %3193 = vmatpush2.msra.mxu0 0.0
    %3194 = vmatprep.subr.mxu0 0.0
    %3195 = vmatpush2.msra.mxu0 0.0
    %3196 = vmatprep.subr.mxu0 0.0
    %3197 = vmatpush2.msra.mxu0 0.0
    %3198 = vmatprep.subr.mxu0 0.0
    %3199 = vmatpush2.msra.mxu0 0.0
    %3200 = vmatprep.subr.mxu0 0.0
    %3201 = vmatpush2.msra.mxu0 0.0
    %3202 = vmatprep.subr.mxu0 0.0
    %3203 = vmatpush2.msra.mxu0 0.0
    %3204 = vmatprep.subr.mxu0 0.0
    %3205 = vmatpush2.msra.mxu0 0.0
    %3206 = vmatprep.subr.mxu0 0.0
    %3207 = vmatpush2.msra.mxu0 0.0
    %3208 = vmatprep.subr.mxu0 0.0
    %3209 = vmatpush2.msra.mxu0 0.0
    %3210 = vmatprep.subr.mxu0 0.0
    %3211 = vmatpush2.msra.mxu0 0.0
    %3212 = vmatprep.subr.mxu0 0.0
    %3213 = vmatpush2.msra.mxu0 0.0
    %3214 = vmatprep.subr.mxu0 0.0
    %3215 = vmatpush2.msra.mxu0 0.0
    %3216 = vmatprep.subr.mxu0 0.0
    %3217 = vmatpush2.msra.mxu0 0.0
    %3218 = vmatprep.subr.mxu0 0.0
    %3219 = vmatpush2.msra.mxu0 0.0
    %3220 = vmatprep.subr.mxu0 0.0
    %3221 = vmatpush2.msra.mxu0 0.0
    %3222 = vmatprep.subr.mxu0 0.0
    %3223 = vmatpush2.msra.mxu0 0.0
    %3224 = vmatprep.mubr.f32.mxu0 0.0
    %3225 = vmatmul.mubr.f32.gmra.mxu0 %v3158
    %v3226 = vpop.f32.mrf.mxu0
    %v3227 = vadd.f32 0.0, %v3226
    %v3228 = vpop.f32.mrf.mxu0
    %3229 = vdwg.mxu0
    %v3230 = vpack.c.bf16 %v3227, %v3227
    %v3232 = vsel %vm535, %v3230, 0
    %3234 = vmatprep.subr.bf16.mxu0 0
    %3235 = vmatpush1.bf16.msra.mxu0 0
    %3236 = vmatprep.subr.bf16.mxu0 0
    %3237 = vmatpush1.bf16.msra.mxu0 0
    %3238 = vmatprep.subr.bf16.mxu0 0
    %3239 = vmatpush1.bf16.msra.mxu0 0
    %3240 = vmatprep.subr.bf16.mxu0 0
    %3241 = vmatpush1.bf16.msra.mxu0 0
    %3242 = vmatprep.subr.bf16.mxu0 0
    %3243 = vmatpush1.bf16.msra.mxu0 %v2784
    %3244 = vmatprep.subr.bf16.mxu0 0
    %3245 = vmatpush1.bf16.msra.mxu0 %v2783
    %3246 = vmatprep.subr.bf16.mxu0 0
    %3247 = vmatpush1.bf16.msra.mxu0 %v2782
    %3248 = vmatprep.subr.bf16.mxu0 0
    %3249 = vmatpush1.bf16.msra.mxu0 %v2781
    %3250 = vmatprep.subr.bf16.mxu0 0
    %3251 = vmatpush2.bf16.msra.mxu0 0
    %3252 = vmatprep.subr.bf16.mxu0 0
    %3253 = vmatpush2.bf16.msra.mxu0 0
    %3254 = vmatprep.subr.bf16.mxu0 0
    %3255 = vmatpush2.bf16.msra.mxu0 0
    %3256 = vmatprep.subr.bf16.mxu0 0
    %3257 = vmatpush2.bf16.msra.mxu0 0
    %3258 = vmatprep.subr.bf16.mxu0 0
    %3259 = vmatpush2.bf16.msra.mxu0 0
    %3260 = vmatprep.subr.bf16.mxu0 0
    %3261 = vmatpush2.bf16.msra.mxu0 0
    %3262 = vmatprep.subr.bf16.mxu0 0
    %3263 = vmatpush2.bf16.msra.mxu0 0
    %3264 = vmatprep.subr.bf16.mxu0 0
    %3265 = vmatpush2.bf16.msra.mxu0 0
    %3266 = vmatprep.mubr.bf16.mxu0 0
    %3267 = vmatmul.mubr.bf16.gmra.mxu0 %v3232
    %v3268 = vpop.f32.mrf.mxu0
    %v3269 = vadd.f32 0.0, %v3268
    %v3270 = vpop.f32.mrf.mxu0
    %v3271 = vpop.f32.mrf.mxu0
    %v3272 = vpop.f32.mrf.mxu0
    %3273 = vdwg.mxu0
    %v3275 = vsel %vm535, %v3061, 0
    %3277 = vmatprep.subr.bf16.mxu0 0
    %3278 = vmatpush1.bf16.msra.mxu0 0
    %3279 = vmatprep.subr.bf16.mxu0 0
    %3280 = vmatpush1.bf16.msra.mxu0 0
    %3281 = vmatprep.subr.bf16.mxu0 0
    %3282 = vmatpush1.bf16.msra.mxu0 0
    %3283 = vmatprep.subr.bf16.mxu0 0
    %3284 = vmatpush1.bf16.msra.mxu0 0
    %3285 = vmatprep.subr.bf16.mxu0 0
    %3286 = vmatpush1.bf16.msra.mxu0 %v2851
    %3287 = vmatprep.subr.bf16.mxu0 0
    %3288 = vmatpush1.bf16.msra.mxu0 %v2850
    %3289 = vmatprep.subr.bf16.mxu0 0
    %3290 = vmatpush1.bf16.msra.mxu0 %v2849
    %3291 = vmatprep.subr.bf16.mxu0 0
    %3292 = vmatpush1.bf16.msra.mxu0 %v2848
    %3293 = vmatprep.subr.bf16.mxu0 0
    %3294 = vmatpush2.bf16.msra.mxu0 0
    %3295 = vmatprep.subr.bf16.mxu0 0
    %3296 = vmatpush2.bf16.msra.mxu0 0
    %3297 = vmatprep.subr.bf16.mxu0 0
    %3298 = vmatpush2.bf16.msra.mxu0 0
    %3299 = vmatprep.subr.bf16.mxu0 0
    %3300 = vmatpush2.bf16.msra.mxu0 0
    %3301 = vmatprep.subr.bf16.mxu0 0
    %3302 = vmatpush2.bf16.msra.mxu0 0
    %3303 = vmatprep.subr.bf16.mxu0 0
    %3304 = vmatpush2.bf16.msra.mxu0 0
    %3305 = vmatprep.subr.bf16.mxu0 0
    %3306 = vmatpush2.bf16.msra.mxu0 0
    %3307 = vmatprep.subr.bf16.mxu0 0
    %3308 = vmatpush2.bf16.msra.mxu0 0
    %3309 = vmatprep.mubr.bf16.mxu0 0
    %3310 = vmatmul.mubr.bf16.gmra.mxu0 %v3275
    %v3311 = vpop.f32.mrf.mxu0
    %v3312 = vadd.f32 %v3269, %v3311
    %v3313 = vpop.f32.mrf.mxu0
    %v3314 = vpop.f32.mrf.mxu0
    %v3315 = vpop.f32.mrf.mxu0
    %3316 = vdwg.mxu0
    %v3317 = vld [vmem:[%s17] sm:$0x1]
    %v3319 = vlaneseq
    %v3320 = vshrl.u32 %v3319, 7
    %v3321 = vsub.s32 0, %v3320
    %v3322 = vrot.slane %v3317, %v3321
    %v3324 = vadd.f32 %v2894, %v3322
    %v3325 = vadd.f32 %v3312, %v3322
    %v3326 = vadd.f32 %v2130, %v3324
    %v3327 = vadd.f32 %v2131, %v3325
    %v3328 = vld [vmem:[%s18] sm:$0x1]
    %v3329 = vld [vmem:[%s19] sm:$0x1]
    %3330 = vadd.xlane.f32.xlu0 %v3326
    %v3331 = vpop.xlane.xlu0 %3330
    %3332 = vadd.xlane.f32.xlu0 %v3327
    %v3333 = vpop.xlane.xlu0 %3332
    %v3334 = vmul.f32 %v3331, %v239
    %v3335 = vmul.f32 %v3333, %v239
    %v3336 = vsub.f32 %v3326, %v3334
    %v3337 = vsub.f32 %v3327, %v3335
    %v3338 = vmul.f32 %v3336, %v3336
    %v3339 = vmul.f32 %v3337, %v3337
    %3340 = vadd.xlane.f32.xlu0 %v3338
    %v3341 = vpop.xlane.xlu0 %3340
    %3342 = vadd.xlane.f32.xlu0 %v3339
    %v3343 = vpop.xlane.xlu0 %3342
    %v3344 = vmul.f32 %v3341, %v239
    %v3345 = vmul.f32 %v3343, %v239
    %v3346 = vadd.f32 %v3344, 1e-05
    %v3347 = vadd.f32 %v3345, 1e-05
    %v3348 = vrsqrt.pop %v3346
    %v3349 = vrsqrt.pop %v3347
    %v3350 = vmul.f32 %v3336, %v3348
    %v3351 = vmul.f32 %v3337, %v3349
    %v3353 = vlaneseq
    %v3354 = vshrl.u32 %v3353, 7
    %v3355 = vsub.s32 0, %v3354
    %v3356 = vrot.slane %v3328, %v3355
    %v3358 = vmul.f32 %v3350, %v3356
    %v3359 = vmul.f32 %v3351, %v3356
    %v3361 = vlaneseq
    %v3362 = vshrl.u32 %v3361, 7
    %v3363 = vsub.s32 0, %v3362
    %v3364 = vrot.slane %v3329, %v3363
    %v3366 = vadd.f32 %v3358, %v3364
    %v3367 = vadd.f32 %v3359, %v3364
    %v3368 = vpack.c.bf16 %v3367, %v3366
    %v3369 = vld [vmem:[#allocation11] sm:$0xff]
    %v3370 = vld [vmem:[#allocation11 + $0x8] sm:$0xff]
    %v3371 = vld [vmem:[#allocation11 + $0x10] sm:$0xff]
    %v3372 = vld [vmem:[#allocation11 + $0x18] sm:$0xff]
    %v3373 = vld [vmem:[#allocation11 + $0x20] sm:$0xff]
    %v3374 = vld [vmem:[#allocation11 + $0x28] sm:$0xff]
    %v3375 = vld [vmem:[#allocation11 + $0x30] sm:$0xff]
    %v3376 = vld [vmem:[#allocation11 + $0x38] sm:$0xff]
    %v3377 = vld [vmem:[#allocation11 + $0x40] sm:$0xff]
    %v3378 = vld [vmem:[#allocation11 + $0x48] sm:$0xff]
    %v3379 = vld [vmem:[#allocation11 + $0x50] sm:$0xff]
    %v3380 = vld [vmem:[#allocation11 + $0x58] sm:$0xff]
    %v3381 = vld [vmem:[#allocation11 + $0x60] sm:$0xff]
    %v3382 = vld [vmem:[#allocation11 + $0x68] sm:$0xff]
    %v3383 = vld [vmem:[#allocation11 + $0x70] sm:$0xff]
    %v3384 = vld [vmem:[#allocation11 + $0x78] sm:$0xff]
    %v3385 = vld [vmem:[#allocation11 + $0x80] sm:$0xff]
    %v3386 = vld [vmem:[#allocation11 + $0x88] sm:$0xff]
    %v3387 = vld [vmem:[#allocation11 + $0x90] sm:$0xff]
    %v3388 = vld [vmem:[#allocation11 + $0x98] sm:$0xff]
    %v3389 = vld [vmem:[#allocation11 + $0xa0] sm:$0xff]
    %v3390 = vld [vmem:[#allocation11 + $0xa8] sm:$0xff]
    %v3391 = vld [vmem:[#allocation11 + $0xb0] sm:$0xff]
    %v3392 = vld [vmem:[#allocation11 + $0xb8] sm:$0xff]
    %v3393 = vld [vmem:[#allocation11 + $0xc0] sm:$0xff]
    %v3394 = vld [vmem:[#allocation11 + $0xc8] sm:$0xff]
    %v3395 = vld [vmem:[#allocation11 + $0xd0] sm:$0xff]
    %v3396 = vld [vmem:[#allocation11 + $0xd8] sm:$0xff]
    %v3397 = vld [vmem:[#allocation11 + $0xe0] sm:$0xff]
    %v3398 = vld [vmem:[#allocation11 + $0xe8] sm:$0xff]
    %v3399 = vld [vmem:[#allocation11 + $0xf0] sm:$0xff]
    %v3400 = vld [vmem:[#allocation11 + $0xf8] sm:$0xff]
    %v3401 = vld [vmem:[%s21] sm:$0xf]
    %v3403 = vlaneseq
    %v3404 = vshrl.u32 %v3403, 7
    %v3405 = vsub.s32 0, %v3404
    %v3406 = vrot.slane %v3401, %v3405
    %v3407 = vlaneseq
    %v3408 = vshrl.u32 %v3407, 7
    %v3409 = vsub.s32 1, %v3408
    %v3410 = vrot.slane %v3401, %v3409
    %v3411 = vlaneseq
    %v3412 = vshrl.u32 %v3411, 7
    %v3413 = vsub.s32 2, %v3412
    %v3414 = vrot.slane %v3401, %v3413
    %v3415 = vlaneseq
    %v3416 = vshrl.u32 %v3415, 7
    %v3417 = vsub.s32 3, %v3416
    %v3418 = vrot.slane %v3401, %v3417
    %v3455 = vunpack.c.l.b16 %v3369
    %v3456 = vunpack.c.h.b16 %v3369
    %v3457 = vunpack.c.l.b16 %v3370
    %v3458 = vunpack.c.h.b16 %v3370
    %v3459 = vunpack.c.l.b16 %v3371
    %v3460 = vunpack.c.h.b16 %v3371
    %v3461 = vunpack.c.l.b16 %v3372
    %v3462 = vunpack.c.h.b16 %v3372
    %v3463 = vunpack.c.l.b16 %v3373
    %v3464 = vunpack.c.h.b16 %v3373
    %v3465 = vunpack.c.l.b16 %v3374
    %v3466 = vunpack.c.h.b16 %v3374
    %v3467 = vunpack.c.l.b16 %v3375
    %v3468 = vunpack.c.h.b16 %v3375
    %v3469 = vunpack.c.l.b16 %v3376
    %v3470 = vunpack.c.h.b16 %v3376
    %v3471 = vunpack.c.l.b16 %v3377
    %v3472 = vunpack.c.h.b16 %v3377
    %v3473 = vunpack.c.l.b16 %v3378
    %v3474 = vunpack.c.h.b16 %v3378
    %v3475 = vunpack.c.l.b16 %v3379
    %v3476 = vunpack.c.h.b16 %v3379
    %v3477 = vunpack.c.l.b16 %v3380
    %v3478 = vunpack.c.h.b16 %v3380
    %v3479 = vunpack.c.l.b16 %v3381
    %v3480 = vunpack.c.h.b16 %v3381
    %v3481 = vunpack.c.l.b16 %v3382
    %v3482 = vunpack.c.h.b16 %v3382
    %v3483 = vunpack.c.l.b16 %v3383
    %v3484 = vunpack.c.h.b16 %v3383
    %v3485 = vunpack.c.l.b16 %v3384
    %v3486 = vunpack.c.h.b16 %v3384
    %v3487 = vunpack.c.l.b16 %v3385
    %v3488 = vunpack.c.h.b16 %v3385
    %v3489 = vunpack.c.l.b16 %v3386
    %v3490 = vunpack.c.h.b16 %v3386
    %v3491 = vunpack.c.l.b16 %v3387
    %v3492 = vunpack.c.h.b16 %v3387
    %v3493 = vunpack.c.l.b16 %v3388
    %v3494 = vunpack.c.h.b16 %v3388
    %v3495 = vunpack.c.l.b16 %v3389
    %v3496 = vunpack.c.h.b16 %v3389
    %v3497 = vunpack.c.l.b16 %v3390
    %v3498 = vunpack.c.h.b16 %v3390
    %v3499 = vunpack.c.l.b16 %v3391
    %v3500 = vunpack.c.h.b16 %v3391
    %v3501 = vunpack.c.l.b16 %v3392
    %v3502 = vunpack.c.h.b16 %v3392
    %v3503 = vunpack.c.l.b16 %v3393
    %v3504 = vunpack.c.h.b16 %v3393
    %v3505 = vunpack.c.l.b16 %v3394
    %v3506 = vunpack.c.h.b16 %v3394
    %v3507 = vunpack.c.l.b16 %v3395
    %v3508 = vunpack.c.h.b16 %v3395
    %v3509 = vunpack.c.l.b16 %v3396
    %v3510 = vunpack.c.h.b16 %v3396
    %v3511 = vunpack.c.l.b16 %v3397
    %v3512 = vunpack.c.h.b16 %v3397
    %v3513 = vunpack.c.l.b16 %v3398
    %v3514 = vunpack.c.h.b16 %v3398
    %v3515 = vunpack.c.l.b16 %v3399
    %v3516 = vunpack.c.h.b16 %v3399
    %v3517 = vunpack.c.l.b16 %v3400
    %v3518 = vunpack.c.h.b16 %v3400
    %v3519 = vpack.c.b16 %v3459, %v3455
    %v3520 = vpack.c.b16 %v3460, %v3456
    %v3521 = vpack.c.b16 %v3461, %v3457
    %v3522 = vpack.c.b16 %v3462, %v3458
    %v3523 = vpack.c.b16 %v3467, %v3463
    %v3524 = vpack.c.b16 %v3468, %v3464
    %v3525 = vpack.c.b16 %v3469, %v3465
    %v3526 = vpack.c.b16 %v3470, %v3466
    %v3527 = vpack.c.b16 %v3475, %v3471
    %v3528 = vpack.c.b16 %v3476, %v3472
    %v3529 = vpack.c.b16 %v3477, %v3473
    %v3530 = vpack.c.b16 %v3478, %v3474
    %v3531 = vpack.c.b16 %v3483, %v3479
    %v3532 = vpack.c.b16 %v3484, %v3480
    %v3533 = vpack.c.b16 %v3485, %v3481
    %v3534 = vpack.c.b16 %v3486, %v3482
    %v3535 = vpack.c.b16 %v3491, %v3487
    %v3536 = vpack.c.b16 %v3492, %v3488
    %v3537 = vpack.c.b16 %v3493, %v3489
    %v3538 = vpack.c.b16 %v3494, %v3490
    %v3539 = vpack.c.b16 %v3499, %v3495
    %v3540 = vpack.c.b16 %v3500, %v3496
    %v3541 = vpack.c.b16 %v3501, %v3497
    %v3542 = vpack.c.b16 %v3502, %v3498
    %v3543 = vpack.c.b16 %v3507, %v3503
    %v3544 = vpack.c.b16 %v3508, %v3504
    %v3545 = vpack.c.b16 %v3509, %v3505
    %v3546 = vpack.c.b16 %v3510, %v3506
    %v3547 = vpack.c.b16 %v3515, %v3511
    %v3548 = vpack.c.b16 %v3516, %v3512
    %v3549 = vpack.c.b16 %v3517, %v3513
    %v3550 = vpack.c.b16 %v3518, %v3514
    %3583 = vmatprep.subr.bf16.mxu0 %v3548
    %3584 = vmatpush1.bf16.msra.mxu0 %v3547
    %3585 = vmatprep.subr.bf16.mxu0 %v3544
    %3586 = vmatpush1.bf16.msra.mxu0 %v3543
    %3587 = vmatprep.subr.bf16.mxu0 %v3540
    %3588 = vmatpush1.bf16.msra.mxu0 %v3539
    %3589 = vmatprep.subr.bf16.mxu0 %v3536
    %3590 = vmatpush1.bf16.msra.mxu0 %v3535
    %3591 = vmatprep.subr.bf16.mxu0 %v3532
    %3592 = vmatpush1.bf16.msra.mxu0 %v3531
    %3593 = vmatprep.subr.bf16.mxu0 %v3528
    %3594 = vmatpush1.bf16.msra.mxu0 %v3527
    %3595 = vmatprep.subr.bf16.mxu0 %v3524
    %3596 = vmatpush1.bf16.msra.mxu0 %v3523
    %3597 = vmatprep.subr.bf16.mxu0 %v3520
    %3598 = vmatpush1.bf16.msra.mxu0 %v3519
    %3599 = vmatprep.subr.bf16.mxu0 0
    %3600 = vmatpush2.bf16.msra.mxu0 0
    %3601 = vmatprep.subr.bf16.mxu0 0
    %3602 = vmatpush2.bf16.msra.mxu0 0
    %3603 = vmatprep.subr.bf16.mxu0 0
    %3604 = vmatpush2.bf16.msra.mxu0 0
    %3605 = vmatprep.subr.bf16.mxu0 0
    %3606 = vmatpush2.bf16.msra.mxu0 0
    %3607 = vmatprep.subr.bf16.mxu0 0
    %3608 = vmatpush2.bf16.msra.mxu0 0
    %3609 = vmatprep.subr.bf16.mxu0 0
    %3610 = vmatpush2.bf16.msra.mxu0 0
    %3611 = vmatprep.subr.bf16.mxu0 0
    %3612 = vmatpush2.bf16.msra.mxu0 0
    %3613 = vmatprep.subr.bf16.mxu0 0
    %3614 = vmatpush2.bf16.msra.mxu0 0
    %3615 = vmatprep.mubr.bf16.mxu0 0
    %3616 = vmatmul.mubr.bf16.gmra.mxu0 %v3368
    %v3617 = vpop.f32.mrf.mxu0
    %v3618 = vadd.f32 %v3406, %v3617
    %v3619 = vpop.f32.mrf.mxu0
    %v3620 = vadd.f32 %v3410, %v3619
    %v3621 = vpop.f32.mrf.mxu0
    %v3622 = vadd.f32 %v3406, %v3621
    %v3623 = vpop.f32.mrf.mxu0
    %v3624 = vadd.f32 %v3410, %v3623
    %3625 = vdwg.mxu0
    %3626 = vmatprep.subr.bf16.mxu0 %v3550
    %3627 = vmatpush1.bf16.msra.mxu0 %v3549
    %3628 = vmatprep.subr.bf16.mxu0 %v3546
    %3629 = vmatpush1.bf16.msra.mxu0 %v3545
    %3630 = vmatprep.subr.bf16.mxu0 %v3542
    %3631 = vmatpush1.bf16.msra.mxu0 %v3541
    %3632 = vmatprep.subr.bf16.mxu0 %v3538
    %3633 = vmatpush1.bf16.msra.mxu0 %v3537
    %3634 = vmatprep.subr.bf16.mxu0 %v3534
    %3635 = vmatpush1.bf16.msra.mxu0 %v3533
    %3636 = vmatprep.subr.bf16.mxu0 %v3530
    %3637 = vmatpush1.bf16.msra.mxu0 %v3529
    %3638 = vmatprep.subr.bf16.mxu0 %v3526
    %3639 = vmatpush1.bf16.msra.mxu0 %v3525
    %3640 = vmatprep.subr.bf16.mxu0 %v3522
    %3641 = vmatpush1.bf16.msra.mxu0 %v3521
    %3642 = vmatprep.subr.bf16.mxu0 0
    %3643 = vmatpush2.bf16.msra.mxu0 0
    %3644 = vmatprep.subr.bf16.mxu0 0
    %3645 = vmatpush2.bf16.msra.mxu0 0
    %3646 = vmatprep.subr.bf16.mxu0 0
    %3647 = vmatpush2.bf16.msra.mxu0 0
    %3648 = vmatprep.subr.bf16.mxu0 0
    %3649 = vmatpush2.bf16.msra.mxu0 0
    %3650 = vmatprep.subr.bf16.mxu0 0
    %3651 = vmatpush2.bf16.msra.mxu0 0
    %3652 = vmatprep.subr.bf16.mxu0 0
    %3653 = vmatpush2.bf16.msra.mxu0 0
    %3654 = vmatprep.subr.bf16.mxu0 0
    %3655 = vmatpush2.bf16.msra.mxu0 0
    %3656 = vmatprep.subr.bf16.mxu0 0
    %3657 = vmatpush2.bf16.msra.mxu0 0
    %3658 = vmatprep.mubr.bf16.mxu0 0
    %3659 = vmatmul.mubr.bf16.gmra.mxu0 %v3368
    %v3660 = vpop.f32.mrf.mxu0
    %v3661 = vadd.f32 %v3414, %v3660
    %v3662 = vpop.f32.mrf.mxu0
    %v3663 = vadd.f32 %v3418, %v3662
    %v3664 = vpop.f32.mrf.mxu0
    %v3665 = vadd.f32 %v3414, %v3664
    %v3666 = vpop.f32.mrf.mxu0
    %v3667 = vadd.f32 %v3418, %v3666
    %3668 = vdwg.mxu0
    %v3669 = vmax.f32 %v3618, 0.0
    %v3670 = vmax.f32 %v3620, 0.0
    %v3671 = vmax.f32 %v3661, 0.0
    %v3672 = vmax.f32 %v3663, 0.0
    %v3673 = vmax.f32 %v3622, 0.0
    %v3674 = vmax.f32 %v3624, 0.0
    %v3675 = vmax.f32 %v3665, 0.0
    %v3676 = vmax.f32 %v3667, 0.0
    %v3677 = vpack.c.bf16 %v3673, %v3669
    %v3678 = vpack.c.bf16 %v3674, %v3670
    %v3679 = vpack.c.bf16 %v3675, %v3671
    %v3680 = vpack.c.bf16 %v3676, %v3672
    %v3681 = vld [vmem:[#allocation13] sm:$0xf]
    %v3682 = vld [vmem:[#allocation13 + $0x4] sm:$0xf]
    %v3683 = vld [vmem:[#allocation13 + $0x8] sm:$0xf]
    %v3684 = vld [vmem:[#allocation13 + $0xc] sm:$0xf]
    %v3685 = vld [vmem:[#allocation13 + $0x10] sm:$0xf]
    %v3686 = vld [vmem:[#allocation13 + $0x14] sm:$0xf]
    %v3687 = vld [vmem:[#allocation13 + $0x18] sm:$0xf]
    %v3688 = vld [vmem:[#allocation13 + $0x1c] sm:$0xf]
    %v3689 = vld [vmem:[#allocation13 + $0x20] sm:$0xf]
    %v3690 = vld [vmem:[#allocation13 + $0x24] sm:$0xf]
    %v3691 = vld [vmem:[#allocation13 + $0x28] sm:$0xf]
    %v3692 = vld [vmem:[#allocation13 + $0x2c] sm:$0xf]
    %v3693 = vld [vmem:[#allocation13 + $0x30] sm:$0xf]
    %v3694 = vld [vmem:[#allocation13 + $0x34] sm:$0xf]
    %v3695 = vld [vmem:[#allocation13 + $0x38] sm:$0xf]
    %v3696 = vld [vmem:[#allocation13 + $0x3c] sm:$0xf]
    %v3697 = vld [vmem:[#allocation13 + $0x40] sm:$0xf]
    %v3698 = vld [vmem:[#allocation13 + $0x44] sm:$0xf]
    %v3699 = vld [vmem:[#allocation13 + $0x48] sm:$0xf]
    %v3700 = vld [vmem:[#allocation13 + $0x4c] sm:$0xf]
    %v3701 = vld [vmem:[#allocation13 + $0x50] sm:$0xf]
    %v3702 = vld [vmem:[#allocation13 + $0x54] sm:$0xf]
    %v3703 = vld [vmem:[#allocation13 + $0x58] sm:$0xf]
    %v3704 = vld [vmem:[#allocation13 + $0x5c] sm:$0xf]
    %v3705 = vld [vmem:[#allocation13 + $0x60] sm:$0xf]
    %v3706 = vld [vmem:[#allocation13 + $0x64] sm:$0xf]
    %v3707 = vld [vmem:[#allocation13 + $0x68] sm:$0xf]
    %v3708 = vld [vmem:[#allocation13 + $0x6c] sm:$0xf]
    %v3709 = vld [vmem:[#allocation13 + $0x70] sm:$0xf]
    %v3710 = vld [vmem:[#allocation13 + $0x74] sm:$0xf]
    %v3711 = vld [vmem:[#allocation13 + $0x78] sm:$0xf]
    %v3712 = vld [vmem:[#allocation13 + $0x7c] sm:$0xf]
    %v3713 = vld [vmem:[#allocation13 + $0x80] sm:$0xf]
    %v3714 = vld [vmem:[#allocation13 + $0x84] sm:$0xf]
    %v3715 = vld [vmem:[#allocation13 + $0x88] sm:$0xf]
    %v3716 = vld [vmem:[#allocation13 + $0x8c] sm:$0xf]
    %v3717 = vld [vmem:[#allocation13 + $0x90] sm:$0xf]
    %v3718 = vld [vmem:[#allocation13 + $0x94] sm:$0xf]
    %v3719 = vld [vmem:[#allocation13 + $0x98] sm:$0xf]
    %v3720 = vld [vmem:[#allocation13 + $0x9c] sm:$0xf]
    %v3721 = vld [vmem:[#allocation13 + $0xa0] sm:$0xf]
    %v3722 = vld [vmem:[#allocation13 + $0xa4] sm:$0xf]
    %v3723 = vld [vmem:[#allocation13 + $0xa8] sm:$0xf]
    %v3724 = vld [vmem:[#allocation13 + $0xac] sm:$0xf]
    %v3725 = vld [vmem:[#allocation13 + $0xb0] sm:$0xf]
    %v3726 = vld [vmem:[#allocation13 + $0xb4] sm:$0xf]
    %v3727 = vld [vmem:[#allocation13 + $0xb8] sm:$0xf]
    %v3728 = vld [vmem:[#allocation13 + $0xbc] sm:$0xf]
    %v3729 = vld [vmem:[#allocation13 + $0xc0] sm:$0xf]
    %v3730 = vld [vmem:[#allocation13 + $0xc4] sm:$0xf]
    %v3731 = vld [vmem:[#allocation13 + $0xc8] sm:$0xf]
    %v3732 = vld [vmem:[#allocation13 + $0xcc] sm:$0xf]
    %v3733 = vld [vmem:[#allocation13 + $0xd0] sm:$0xf]
    %v3734 = vld [vmem:[#allocation13 + $0xd4] sm:$0xf]
    %v3735 = vld [vmem:[#allocation13 + $0xd8] sm:$0xf]
    %v3736 = vld [vmem:[#allocation13 + $0xdc] sm:$0xf]
    %v3737 = vld [vmem:[#allocation13 + $0xe0] sm:$0xf]
    %v3738 = vld [vmem:[#allocation13 + $0xe4] sm:$0xf]
    %v3739 = vld [vmem:[#allocation13 + $0xe8] sm:$0xf]
    %v3740 = vld [vmem:[#allocation13 + $0xec] sm:$0xf]
    %v3741 = vld [vmem:[#allocation13 + $0xf0] sm:$0xf]
    %v3742 = vld [vmem:[#allocation13 + $0xf4] sm:$0xf]
    %v3743 = vld [vmem:[#allocation13 + $0xf8] sm:$0xf]
    %v3744 = vld [vmem:[#allocation13 + $0xfc] sm:$0xf]
    %v3745 = vld [vmem:[#allocation14] sm:$0x1]
    %v3747 = vlaneseq
    %v3748 = vshrl.u32 %v3747, 7
    %v3749 = vsub.s32 0, %v3748
    %v3750 = vrot.slane %v3745, %v3749
    %v3816 = vunpack.c.l.b16 %v3681
    %v3817 = vunpack.c.l.b16 %v3682
    %v3818 = vunpack.c.l.b16 %v3683
    %v3819 = vunpack.c.l.b16 %v3684
    %v3820 = vunpack.c.l.b16 %v3685
    %v3821 = vunpack.c.l.b16 %v3686
    %v3822 = vunpack.c.l.b16 %v3687
    %v3823 = vunpack.c.l.b16 %v3688
    %v3824 = vunpack.c.l.b16 %v3689
    %v3825 = vunpack.c.l.b16 %v3690
    %v3826 = vunpack.c.l.b16 %v3691
    %v3827 = vunpack.c.l.b16 %v3692
    %v3828 = vunpack.c.l.b16 %v3693
    %v3829 = vunpack.c.l.b16 %v3694
    %v3830 = vunpack.c.l.b16 %v3695
    %v3831 = vunpack.c.l.b16 %v3696
    %v3832 = vunpack.c.l.b16 %v3697
    %v3833 = vunpack.c.l.b16 %v3698
    %v3834 = vunpack.c.l.b16 %v3699
    %v3835 = vunpack.c.l.b16 %v3700
    %v3836 = vunpack.c.l.b16 %v3701
    %v3837 = vunpack.c.l.b16 %v3702
    %v3838 = vunpack.c.l.b16 %v3703
    %v3839 = vunpack.c.l.b16 %v3704
    %v3840 = vunpack.c.l.b16 %v3705
    %v3841 = vunpack.c.l.b16 %v3706
    %v3842 = vunpack.c.l.b16 %v3707
    %v3843 = vunpack.c.l.b16 %v3708
    %v3844 = vunpack.c.l.b16 %v3709
    %v3845 = vunpack.c.l.b16 %v3710
    %v3846 = vunpack.c.l.b16 %v3711
    %v3847 = vunpack.c.l.b16 %v3712
    %v3848 = vunpack.c.l.b16 %v3713
    %v3849 = vunpack.c.l.b16 %v3714
    %v3850 = vunpack.c.l.b16 %v3715
    %v3851 = vunpack.c.l.b16 %v3716
    %v3852 = vunpack.c.l.b16 %v3717
    %v3853 = vunpack.c.l.b16 %v3718
    %v3854 = vunpack.c.l.b16 %v3719
    %v3855 = vunpack.c.l.b16 %v3720
    %v3856 = vunpack.c.l.b16 %v3721
    %v3857 = vunpack.c.l.b16 %v3722
    %v3858 = vunpack.c.l.b16 %v3723
    %v3859 = vunpack.c.l.b16 %v3724
    %v3860 = vunpack.c.l.b16 %v3725
    %v3861 = vunpack.c.l.b16 %v3726
    %v3862 = vunpack.c.l.b16 %v3727
    %v3863 = vunpack.c.l.b16 %v3728
    %v3864 = vunpack.c.l.b16 %v3729
    %v3865 = vunpack.c.l.b16 %v3730
    %v3866 = vunpack.c.l.b16 %v3731
    %v3867 = vunpack.c.l.b16 %v3732
    %v3868 = vunpack.c.l.b16 %v3733
    %v3869 = vunpack.c.l.b16 %v3734
    %v3870 = vunpack.c.l.b16 %v3735
    %v3871 = vunpack.c.l.b16 %v3736
    %v3872 = vunpack.c.l.b16 %v3737
    %v3873 = vunpack.c.l.b16 %v3738
    %v3874 = vunpack.c.l.b16 %v3739
    %v3875 = vunpack.c.l.b16 %v3740
    %v3876 = vunpack.c.l.b16 %v3741
    %v3877 = vunpack.c.l.b16 %v3742
    %v3878 = vunpack.c.l.b16 %v3743
    %v3879 = vunpack.c.l.b16 %v3744
    %v3880 = vpack.c.b16 %v3817, %v3816
    %v3881 = vpack.c.b16 %v3819, %v3818
    %v3882 = vpack.c.b16 %v3821, %v3820
    %v3883 = vpack.c.b16 %v3823, %v3822
    %v3884 = vpack.c.b16 %v3825, %v3824
    %v3885 = vpack.c.b16 %v3827, %v3826
    %v3886 = vpack.c.b16 %v3829, %v3828
    %v3887 = vpack.c.b16 %v3831, %v3830
    %v3888 = vpack.c.b16 %v3833, %v3832
    %v3889 = vpack.c.b16 %v3835, %v3834
    %v3890 = vpack.c.b16 %v3837, %v3836
    %v3891 = vpack.c.b16 %v3839, %v3838
    %v3892 = vpack.c.b16 %v3841, %v3840
    %v3893 = vpack.c.b16 %v3843, %v3842
    %v3894 = vpack.c.b16 %v3845, %v3844
    %v3895 = vpack.c.b16 %v3847, %v3846
    %v3896 = vpack.c.b16 %v3849, %v3848
    %v3897 = vpack.c.b16 %v3851, %v3850
    %v3898 = vpack.c.b16 %v3853, %v3852
    %v3899 = vpack.c.b16 %v3855, %v3854
    %v3900 = vpack.c.b16 %v3857, %v3856
    %v3901 = vpack.c.b16 %v3859, %v3858
    %v3902 = vpack.c.b16 %v3861, %v3860
    %v3903 = vpack.c.b16 %v3863, %v3862
    %v3904 = vpack.c.b16 %v3865, %v3864
    %v3905 = vpack.c.b16 %v3867, %v3866
    %v3906 = vpack.c.b16 %v3869, %v3868
    %v3907 = vpack.c.b16 %v3871, %v3870
    %v3908 = vpack.c.b16 %v3873, %v3872
    %v3909 = vpack.c.b16 %v3875, %v3874
    %v3910 = vpack.c.b16 %v3877, %v3876
    %v3911 = vpack.c.b16 %v3879, %v3878
    %3944 = vmatprep.subr.bf16.mxu0 0
    %3945 = vmatpush1.bf16.msra.mxu0 %v3887
    %3946 = vmatprep.subr.bf16.mxu0 0
    %3947 = vmatpush1.bf16.msra.mxu0 %v3886
    %3948 = vmatprep.subr.bf16.mxu0 0
    %3949 = vmatpush1.bf16.msra.mxu0 %v3885
    %3950 = vmatprep.subr.bf16.mxu0 0
    %3951 = vmatpush1.bf16.msra.mxu0 %v3884
    %3952 = vmatprep.subr.bf16.mxu0 0
    %3953 = vmatpush1.bf16.msra.mxu0 %v3883
    %3954 = vmatprep.subr.bf16.mxu0 0
    %3955 = vmatpush1.bf16.msra.mxu0 %v3882
    %3956 = vmatprep.subr.bf16.mxu0 0
    %3957 = vmatpush1.bf16.msra.mxu0 %v3881
    %3958 = vmatprep.subr.bf16.mxu0 0
    %3959 = vmatpush1.bf16.msra.mxu0 %v3880
    %3960 = vmatprep.subr.bf16.mxu0 0
    %3961 = vmatpush2.bf16.msra.mxu0 %v3895
    %3962 = vmatprep.subr.bf16.mxu0 0
    %3963 = vmatpush2.bf16.msra.mxu0 %v3894
    %3964 = vmatprep.subr.bf16.mxu0 0
    %3965 = vmatpush2.bf16.msra.mxu0 %v3893
    %3966 = vmatprep.subr.bf16.mxu0 0
    %3967 = vmatpush2.bf16.msra.mxu0 %v3892
    %3968 = vmatprep.subr.bf16.mxu0 0
    %3969 = vmatpush2.bf16.msra.mxu0 %v3891
    %3970 = vmatprep.subr.bf16.mxu0 0
    %3971 = vmatpush2.bf16.msra.mxu0 %v3890
    %3972 = vmatprep.subr.bf16.mxu0 0
    %3973 = vmatpush2.bf16.msra.mxu0 %v3889
    %3974 = vmatprep.subr.bf16.mxu0 0
    %3975 = vmatpush2.bf16.msra.mxu0 %v3888
    %3976 = vmatprep.mubr.bf16.mxu0 %v3678
    %3977 = vmatmul.mubr.bf16.gmra.mxu0 %v3677
    %v3978 = vpop.f32.mrf.mxu0
    %v3979 = vadd.f32 %v3750, %v3978
    %v3980 = vpop.f32.mrf.mxu0
    %v3981 = vpop.f32.mrf.mxu0
    %v3982 = vadd.f32 %v3750, %v3981
    %v3983 = vpop.f32.mrf.mxu0
    %3984 = vdwg.mxu0
    %3985 = vmatprep.subr.bf16.mxu0 0
    %3986 = vmatpush1.bf16.msra.mxu0 %v3903
    %3987 = vmatprep.subr.bf16.mxu0 0
    %3988 = vmatpush1.bf16.msra.mxu0 %v3902
    %3989 = vmatprep.subr.bf16.mxu0 0
    %3990 = vmatpush1.bf16.msra.mxu0 %v3901
    %3991 = vmatprep.subr.bf16.mxu0 0
    %3992 = vmatpush1.bf16.msra.mxu0 %v3900
    %3993 = vmatprep.subr.bf16.mxu0 0
    %3994 = vmatpush1.bf16.msra.mxu0 %v3899
    %3995 = vmatprep.subr.bf16.mxu0 0
    %3996 = vmatpush1.bf16.msra.mxu0 %v3898
    %3997 = vmatprep.subr.bf16.mxu0 0
    %3998 = vmatpush1.bf16.msra.mxu0 %v3897
    %3999 = vmatprep.subr.bf16.mxu0 0
    %4000 = vmatpush1.bf16.msra.mxu0 %v3896
    %4001 = vmatprep.subr.bf16.mxu0 0
    %4002 = vmatpush2.bf16.msra.mxu0 %v3911
    %4003 = vmatprep.subr.bf16.mxu0 0
    %4004 = vmatpush2.bf16.msra.mxu0 %v3910
    %4005 = vmatprep.subr.bf16.mxu0 0
    %4006 = vmatpush2.bf16.msra.mxu0 %v3909
    %4007 = vmatprep.subr.bf16.mxu0 0
    %4008 = vmatpush2.bf16.msra.mxu0 %v3908
    %4009 = vmatprep.subr.bf16.mxu0 0
    %4010 = vmatpush2.bf16.msra.mxu0 %v3907
    %4011 = vmatprep.subr.bf16.mxu0 0
    %4012 = vmatpush2.bf16.msra.mxu0 %v3906
    %4013 = vmatprep.subr.bf16.mxu0 0
    %4014 = vmatpush2.bf16.msra.mxu0 %v3905
    %4015 = vmatprep.subr.bf16.mxu0 0
    %4016 = vmatpush2.bf16.msra.mxu0 %v3904
    %4017 = vmatprep.mubr.bf16.mxu0 %v3680
    %4018 = vmatmul.mubr.bf16.gmra.mxu0 %v3679
    %v4019 = vpop.f32.mrf.mxu0
    %v4020 = vadd.f32 %v3979, %v4019
    %v4021 = vpop.f32.mrf.mxu0
    %v4022 = vpop.f32.mrf.mxu0
    %v4023 = vadd.f32 %v3982, %v4022
    %v4024 = vpop.f32.mrf.mxu0
    %4025 = vdwg.mxu0
    %v4026 = vadd.f32 %v3326, %v4020
    %v4027 = vadd.f32 %v3327, %v4023
    %v4028 = vld [vmem:[%s24] sm:$0x1]
    %v4029 = vld [vmem:[%s25] sm:$0x1]
    %4030 = vadd.xlane.f32.xlu0 %v4026
    %v4031 = vpop.xlane.xlu0 %4030
    %4032 = vadd.xlane.f32.xlu0 %v4027
    %v4033 = vpop.xlane.xlu0 %4032
    %v4034 = vmul.f32 %v4031, %v239
    %v4035 = vmul.f32 %v4033, %v239
    %v4036 = vsub.f32 %v4026, %v4034
    %v4037 = vsub.f32 %v4027, %v4035
    %v4038 = vmul.f32 %v4036, %v4036
    %v4039 = vmul.f32 %v4037, %v4037
    %4040 = vadd.xlane.f32.xlu0 %v4038
    %v4041 = vpop.xlane.xlu0 %4040
    %4042 = vadd.xlane.f32.xlu0 %v4039
    %v4043 = vpop.xlane.xlu0 %4042
    %v4044 = vmul.f32 %v4041, %v239
    %v4045 = vmul.f32 %v4043, %v239
    %v4046 = vadd.f32 %v4044, 1e-05
    %v4047 = vadd.f32 %v4045, 1e-05
    %v4048 = vrsqrt.pop %v4046
    %v4049 = vrsqrt.pop %v4047
    %v4050 = vmul.f32 %v4036, %v4048
    %v4051 = vmul.f32 %v4037, %v4049
    %v4053 = vlaneseq
    %v4054 = vshrl.u32 %v4053, 7
    %v4055 = vsub.s32 0, %v4054
    %v4056 = vrot.slane %v4028, %v4055
    %v4058 = vmul.f32 %v4050, %v4056
    %v4059 = vmul.f32 %v4051, %v4056
    %v4061 = vlaneseq
    %v4062 = vshrl.u32 %v4061, 7
    %v4063 = vsub.s32 0, %v4062
    %v4064 = vrot.slane %v4029, %v4063
    %v4066 = vadd.f32 %v4058, %v4064
    %v4067 = vadd.f32 %v4059, %v4064
    %v4068 = vpack.c.bf16 %v4067, %v4066
    %v4069 = vld [vmem:[#allocation16] sm:$0xf]
    %v4070 = vld [vmem:[#allocation16 + $0x4] sm:$0xf]
    %v4071 = vld [vmem:[#allocation16 + $0x8] sm:$0xf]
    %v4072 = vld [vmem:[#allocation16 + $0xc] sm:$0xf]
    %v4073 = vld [vmem:[#allocation16 + $0x10] sm:$0xf]
    %v4074 = vld [vmem:[#allocation16 + $0x14] sm:$0xf]
    %v4075 = vld [vmem:[#allocation16 + $0x18] sm:$0xf]
    %v4076 = vld [vmem:[#allocation16 + $0x1c] sm:$0xf]
    %v4077 = vld [vmem:[#allocation16 + $0x20] sm:$0xf]
    %v4078 = vld [vmem:[#allocation16 + $0x24] sm:$0xf]
    %v4079 = vld [vmem:[#allocation16 + $0x28] sm:$0xf]
    %v4080 = vld [vmem:[#allocation16 + $0x2c] sm:$0xf]
    %v4081 = vld [vmem:[#allocation16 + $0x30] sm:$0xf]
    %v4082 = vld [vmem:[#allocation16 + $0x34] sm:$0xf]
    %v4083 = vld [vmem:[#allocation16 + $0x38] sm:$0xf]
    %v4084 = vld [vmem:[#allocation16 + $0x3c] sm:$0xf]
    %v4085 = vld [vmem:[#allocation17] sm:$0x1]
    %v4087 = vlaneseq
    %v4088 = vshrl.u32 %v4087, 7
    %v4089 = vsub.s32 0, %v4088
    %v4090 = vrot.slane %v4085, %v4089
    %v4108 = vunpack.c.l.b16 %v4069
    %v4109 = vunpack.c.l.b16 %v4070
    %v4110 = vunpack.c.l.b16 %v4071
    %v4111 = vunpack.c.l.b16 %v4072
    %v4112 = vunpack.c.l.b16 %v4073
    %v4113 = vunpack.c.l.b16 %v4074
    %v4114 = vunpack.c.l.b16 %v4075
    %v4115 = vunpack.c.l.b16 %v4076
    %v4116 = vunpack.c.l.b16 %v4077
    %v4117 = vunpack.c.l.b16 %v4078
    %v4118 = vunpack.c.l.b16 %v4079
    %v4119 = vunpack.c.l.b16 %v4080
    %v4120 = vunpack.c.l.b16 %v4081
    %v4121 = vunpack.c.l.b16 %v4082
    %v4122 = vunpack.c.l.b16 %v4083
    %v4123 = vunpack.c.l.b16 %v4084
    %v4124 = vpack.c.b16 %v4109, %v4108
    %v4125 = vpack.c.b16 %v4111, %v4110
    %v4126 = vpack.c.b16 %v4113, %v4112
    %v4127 = vpack.c.b16 %v4115, %v4114
    %v4128 = vpack.c.b16 %v4117, %v4116
    %v4129 = vpack.c.b16 %v4119, %v4118
    %v4130 = vpack.c.b16 %v4121, %v4120
    %v4131 = vpack.c.b16 %v4123, %v4122
    %4140 = vmatprep.subr.bf16.mxu0 0
    %4141 = vmatpush1.bf16.msra.mxu0 %v4131
    %4142 = vmatprep.subr.bf16.mxu0 0
    %4143 = vmatpush1.bf16.msra.mxu0 %v4130
    %4144 = vmatprep.subr.bf16.mxu0 0
    %4145 = vmatpush1.bf16.msra.mxu0 %v4129
    %4146 = vmatprep.subr.bf16.mxu0 0
    %4147 = vmatpush1.bf16.msra.mxu0 %v4128
    %4148 = vmatprep.subr.bf16.mxu0 0
    %4149 = vmatpush1.bf16.msra.mxu0 %v4127
    %4150 = vmatprep.subr.bf16.mxu0 0
    %4151 = vmatpush1.bf16.msra.mxu0 %v4126
    %4152 = vmatprep.subr.bf16.mxu0 0
    %4153 = vmatpush1.bf16.msra.mxu0 %v4125
    %4154 = vmatprep.subr.bf16.mxu0 0
    %4155 = vmatpush1.bf16.msra.mxu0 %v4124
    %4156 = vmatprep.subr.bf16.mxu0 0
    %4157 = vmatpush2.bf16.msra.mxu0 0
    %4158 = vmatprep.subr.bf16.mxu0 0
    %4159 = vmatpush2.bf16.msra.mxu0 0
    %4160 = vmatprep.subr.bf16.mxu0 0
    %4161 = vmatpush2.bf16.msra.mxu0 0
    %4162 = vmatprep.subr.bf16.mxu0 0
    %4163 = vmatpush2.bf16.msra.mxu0 0
    %4164 = vmatprep.subr.bf16.mxu0 0
    %4165 = vmatpush2.bf16.msra.mxu0 0
    %4166 = vmatprep.subr.bf16.mxu0 0
    %4167 = vmatpush2.bf16.msra.mxu0 0
    %4168 = vmatprep.subr.bf16.mxu0 0
    %4169 = vmatpush2.bf16.msra.mxu0 0
    %4170 = vmatprep.subr.bf16.mxu0 0
    %4171 = vmatpush2.bf16.msra.mxu0 0
    %4172 = vmatprep.mubr.bf16.mxu0 0
    %4173 = vmatmul.mubr.bf16.gmra.mxu0 %v4068
    %v4174 = vpop.f32.mrf.mxu0
    %v4175 = vadd.f32 %v4090, %v4174
    %v4176 = vpop.f32.mrf.mxu0
    %v4177 = vpop.f32.mrf.mxu0
    %v4178 = vadd.f32 %v4090, %v4177
    %v4179 = vpop.f32.mrf.mxu0
    %4180 = vdwg.mxu0
    %4181 = vst [vmem:[#allocation19] sm:$0xff] %v4175
    %4182 = vst [vmem:[#allocation19 + $0x8] sm:$0xff] %v4178
    // Predicated region
    $region154: #{transformer_language_model.1} parent=1 // pred_check
      _
    $region155: #{transformer_language_model.1} parent=1 // pred_check_branch
      %4184 = sbr.rel (0) target = $region157
    $region156: #{transformer_language_model.1} parent=1 // pred_region
      %s4186 = ssub.s32 256, 256
      %4187 = vsyncadd [#allocation4], %s4186
      %s4188 = sshll.u32 [#allocation19], 4
      %s4189 = int_to_ptr.vmem [resolvable:$true] %s4188
      %4194 = dma.vmem_to_hbm [thread:$0]  %s4189, 256, %s28, [#allocation4], 128, 128, 8
    $region157: #{transformer_language_model.1} parent=1 // pred_fallthru
      _
    // Predicated region
    $region158: #{transformer_language_model.1} parent=1 // pred_check
      _
    $region159: #{transformer_language_model.1} parent=1 // pred_check_branch
      %4196 = sbr.rel (0) target = $region161
    $region160: #{transformer_language_model.1} parent=1 // pred_region
      %4197 = dma.done [#allocation4], 256
    $region161: #{transformer_language_model.1} parent=1 // pred_fallthru
      _
    %4198 = vsyncpa [#allocation3], 1
    %4199 = vsyncpa [#allocation6], 1
    %4200 = vsyncpa [#allocation9], 1
    %4201 = vsyncpa [#allocation12], 1
    %4202 = vsyncpa [#allocation15], 1
    %4203 = vsyncpa [#allocation18], 1
    %4204 = vsyncpa [#allocation4], 1

</llo_original>
